<compile_context>
chip_gen: v7x
topology: tpu7x:2x2x1
jax: 0.10.0
libtpu: 0.0.40
codegen_flags: <defaults>
</compile_context>

<pallas_src>
import functools
import math

import jax
import jax.numpy as jnp
from jax import lax
from jax.experimental import pallas as pl
from jax.experimental.pallas import tpu as pltpu

MXU_DTYPE = jnp.bfloat16   # operand dtype fed to the MXU (accumulation stays f32)


def mha_kernel(x_ref, wqkv_ref, bqkv_ref, wp_ref, bp_ref, o_ref,
               qkv_ref, heads_ref, *, n_heads):
    """One batch element per grid step; all heads fused into wide MXU dots.

    Expects the 1/sqrt(d_head) attention scale already folded into the Q
    columns of wqkv / bqkv (see fold_q_scale).
    """
    x = x_ref[0]                                       # (T, D), native dtype
    D = x.shape[-1]
    HD = n_heads * D

    # Fused Q/K/V projection: one (T, D) @ (D, 3*H*D) dot, bf16 operands,
    # f32 accumulate. Staged into VMEM scratch so the unrolled head loop only
    # keeps one head's slices live at a time.
    qkv = jnp.dot(x.astype(MXU_DTYPE), wqkv_ref[...].astype(MXU_DTYPE),
                  preferred_element_type=jnp.float32)
    qkv_ref[...] = (qkv + bqkv_ref[...]).astype(qkv_ref.dtype)

    for h in range(n_heads):                           # static, lane-aligned ref slices
        q = qkv_ref[:, h * D:(h + 1) * D]                          # (T, D) bf16, pre-scaled
        k = qkv_ref[:, HD + h * D: HD + (h + 1) * D]               # (T, D) bf16
        v = qkv_ref[:, 2 * HD + h * D: 2 * HD + (h + 1) * D]       # (T, D) bf16

        # q @ k^T without materializing a transposed k (contract last dims).
        s = lax.dot_general(q, k, (((1,), (1,)), ((), ())),
                            preferred_element_type=jnp.float32)    # (T, T) f32
        # Softmax: keep elementwise math f32 (v5e-friendly); apply the 1/l
        # normalization to the (T, D) head output instead of the (T, T) probs.
        s = s - jnp.max(s, axis=-1, keepdims=True)
        p = jnp.exp(s)
        inv_l = pl.reciprocal(jnp.sum(p, axis=-1, keepdims=True), approx=True)
        o_h = jnp.dot(p.astype(MXU_DTYPE), v, preferred_element_type=jnp.float32)
        heads_ref[:, h * D:(h + 1) * D] = (o_h * inv_l).astype(heads_ref.dtype)

    # Output projection: single (T, H*D) @ (H*D, D) dot (512-deep contraction).
    out = jnp.dot(heads_ref[...], wp_ref[...].astype(MXU_DTYPE),
                  preferred_element_type=jnp.float32)
    o_ref[0] = (out + bp_ref[...]).astype(o_ref.dtype)


def multi_head_attention(x, wqkv, bqkv, wp, bp, *, n_heads):
    """x: (B,T,D); wqkv: (D, 3*H*D); bqkv: (1, 3*H*D); wp: (H*D, D); bp: (1, D).

    wqkv / bqkv must have the attention scale pre-folded into their Q columns
    (fold_q_scale).
    """
    B, T, D = x.shape
    HD = n_heads * D
    kernel = functools.partial(mha_kernel, n_heads=n_heads)
    resident = pl.Buffered(1)   # constant-index weights: fetch once, single buffer
    return pl.pallas_call(
        kernel,
        out_shape=jax.ShapeDtypeStruct((B, T, D), x.dtype),
        grid_spec=pltpu.PrefetchScalarGridSpec(
            num_scalar_prefetch=0,
            grid=(B,),
            in_specs=[
                pl.BlockSpec((1, T, D), lambda b: (b, 0, 0)),                 # x (per batch)
                pl.BlockSpec((D, 3 * HD), lambda b: (0, 0), pipeline_mode=resident),
                pl.BlockSpec((1, 3 * HD), lambda b: (0, 0), pipeline_mode=resident),
                pl.BlockSpec((HD, D), lambda b: (0, 0), pipeline_mode=resident),
                pl.BlockSpec((1, D), lambda b: (0, 0), pipeline_mode=resident),
            ],
            out_specs=pl.BlockSpec((1, T, D), lambda b: (b, 0, 0)),
            scratch_shapes=[
                pltpu.VMEM((T, 3 * HD), MXU_DTYPE),   # staged qkv activations
                pltpu.VMEM((T, HD), MXU_DTYPE),       # per-head outputs (concat slab)
            ],
        ),
        compiler_params=pltpu.CompilerParams(
            dimension_semantics=("parallel",),
            vmem_limit_bytes=32 * 1024 * 1024,
        ),
    )(x, wqkv, bqkv, wp, bp)


def fold_q_scale(wqkv, bqkv, d_head):
    """One-time parameter transform: fold 1/sqrt(d_head) into the Q columns."""
    HD = wqkv.shape[-1] // 3
    scale = 1.0 / math.sqrt(d_head)
    col = jnp.concatenate([jnp.full((HD,), scale, wqkv.dtype),
                           jnp.ones((2 * HD,), wqkv.dtype)])
    return wqkv * col, bqkv * col


def make_params(key, d_model, n_heads, dtype=jnp.float32):
    """Deterministic synthetic parameters (same math as the nn.Module).

    Per-head Linear(d_model, d_model) weights for q/k/v are stored
    pre-transposed (in, out) and concatenated along lanes as
    [Q_h0..Q_hH-1 | K_h0..K_hH-1 | V_h0..V_hH-1]; the projection
    Linear(d_model*n_heads, d_model) weight is stored transposed (H*D, D).
    """
    keys = jax.random.split(key, 4)
    scale = 1.0 / math.sqrt(d_model)
    HD = n_heads * d_model
    wqkv = jax.random.normal(keys[0], (d_model, 3 * HD), dtype) * scale
    bqkv = jax.random.normal(keys[1], (1, 3 * HD), dtype) * scale
    wp = jax.random.normal(keys[2], (HD, d_model), dtype) * scale
    bp = jax.random.normal(keys[3], (1, d_model), dtype) * scale
    return wqkv, bqkv, wp, bp


def reference(x, wqkv, bqkv, wp, bp, n_heads):
    """Pure-JAX f32 reference mirroring the PyTorch forward (unfolded scale)."""
    D = x.shape[-1]
    HD = n_heads * D
    qkv = x @ wqkv + bqkv
    heads = []
    for h in range(n_heads):
        q = qkv[..., h * D:(h + 1) * D]
        k = qkv[..., HD + h * D: HD + (h + 1) * D]
        v = qkv[..., 2 * HD + h * D: 2 * HD + (h + 1) * D]
        score = q @ jnp.swapaxes(k, 1, 2) / math.sqrt(D)
        heads.append(jax.nn.softmax(score, axis=-1) @ v)
    cat = jnp.concatenate(heads, axis=-1)
    return cat @ wp + bp


if __name__ == "__main__":
    B, T, D, H = 2, 128, 128, 4          # lane-dense: D = 128, H*D = 512
    key = jax.random.PRNGKey(0)
    kx, kp = jax.random.split(key)
    x = jax.random.normal(kx, (B, T, D), jnp.float32)
    wqkv, bqkv, wp, bp = make_params(kp, D, H)
    wqkv_f, bqkv_f = fold_q_scale(wqkv, bqkv, D)     # one-time prep, not per-call

    out = jax.block_until_ready(
        multi_head_attention(x, wqkv_f, bqkv_f, wp, bp, n_heads=H))
    ref = reference(x, wqkv, bqkv, wp, bp, n_heads=H)

    assert out.shape == (B, T, D)
    err = float(jnp.max(jnp.abs(out - ref)))
    # Tolerance reflects bf16 MXU operands (f32 accumulation) + the EUP approx
    # reciprocal vs an all-f32 reference: measured max-abs error is ~4e-3 at
    # these shapes; 3e-2 is a comfortable, documented bound.
    assert jnp.allclose(out, ref, atol=3e-2, rtol=3e-2), err
    print("KERNEL_OK")
</pallas_src>

<mosaic_0001>
module attributes {stable_mosaic.version = 11 : i64} {
  func.func @mha_kernel(%arg0: i32, %arg1: memref<1x128x128xf32, #tpu.memory_space<vmem>>, %arg2: memref<128x1536xf32, #tpu.memory_space<vmem>>, %arg3: memref<1x1536xf32, #tpu.memory_space<vmem>>, %arg4: memref<512x128xf32, #tpu.memory_space<vmem>>, %arg5: memref<1x128xf32, #tpu.memory_space<vmem>>, %arg6: memref<1x128x128xf32, #tpu.memory_space<vmem>>, %arg7: memref<128x1536xbf16, #tpu.memory_space<vmem>>, %arg8: memref<128x512xbf16, #tpu.memory_space<vmem>>) attributes {dimension_semantics = [#tpu.dimension_semantics<parallel>], iteration_bounds = array<i64: 2>, scalar_prefetch = 0 : i64, scratch_operands = 2 : i64, tpu.core_type = #tpu.core_type<tc>, window_params = [{transform_indices = @transform_0, window_bounds = array<i64: 1, 128, 128>}, {pipeline_mode = #tpu.pipeline_mode<synchronous>, transform_indices = @transform_1, window_bounds = array<i64: 128, 1536>}, {pipeline_mode = #tpu.pipeline_mode<synchronous>, transform_indices = @transform_2, window_bounds = array<i64: 1, 1536>}, {pipeline_mode = #tpu.pipeline_mode<synchronous>, transform_indices = @transform_3, window_bounds = array<i64: 512, 128>}, {pipeline_mode = #tpu.pipeline_mode<synchronous>, transform_indices = @transform_4, window_bounds = array<i64: 1, 128>}, {transform_indices = @transform_5, window_bounds = array<i64: 1, 128, 128>}]} {
    %c0 = arith.constant 0 : index
    %c0_0 = arith.constant 0 : index
    %c0_1 = arith.constant 0 : index
    %0 = vector.load %arg1[%c0, %c0_0, %c0_1] : memref<1x128x128xf32, #tpu.memory_space<vmem>>, vector<1x128x128xf32>
    %1 = vector.shape_cast %0 : vector<1x128x128xf32> to vector<128x128xf32>
    %2 = arith.truncf %1 : vector<128x128xf32> to vector<128x128xbf16>
    %c0_2 = arith.constant 0 : index
    %c0_3 = arith.constant 0 : index
    %3 = vector.load %arg2[%c0_2, %c0_3] : memref<128x1536xf32, #tpu.memory_space<vmem>>, vector<128x1536xf32>
    %4 = arith.truncf %3 : vector<128x1536xf32> to vector<128x1536xbf16>
    %cst = arith.constant dense<0.000000e+00> : vector<128x1536xf32>
    %5 = tpu.matmul %2, %4, %cst {dimension_numbers = #tpu.dot_dimension_numbers<[1], [0], [0], [1], [0, 0, 1, 1], [], []>} : vector<128x128xbf16>, vector<128x1536xbf16>, vector<128x1536xf32> -> vector<128x1536xf32>
    %c0_4 = arith.constant 0 : index
    %c0_5 = arith.constant 0 : index
    %6 = vector.load %arg3[%c0_4, %c0_5] : memref<1x1536xf32, #tpu.memory_space<vmem>>, vector<1x1536xf32>
    %7 = vector.broadcast %6 : vector<1x1536xf32> to vector<128x1536xf32>
    %8 = arith.addf %5, %7 : vector<128x1536xf32>
    %9 = arith.truncf %8 : vector<128x1536xf32> to vector<128x1536xbf16>
    %c0_6 = arith.constant 0 : index
    %c0_7 = arith.constant 0 : index
    %10 = vector.load %arg7[%c0_6, %c0_7] : memref<128x1536xbf16, #tpu.memory_space<vmem>>, vector<128x1536xbf16>
    tpu.vector_store %arg7[%c0_6, %c0_7], %9 {strides = array<i32>} : memref<128x1536xbf16, #tpu.memory_space<vmem>>, vector<128x1536xbf16>,
    %c0_8 = arith.constant 0 : index
    %c0_9 = arith.constant 0 : index
    %11 = vector.load %arg7[%c0_8, %c0_9] : memref<128x1536xbf16, #tpu.memory_space<vmem>>, vector<128x128xbf16>
    %c0_10 = arith.constant 0 : index
    %c512 = arith.constant 512 : index
    %12 = vector.load %arg7[%c0_10, %c512] : memref<128x1536xbf16, #tpu.memory_space<vmem>>, vector<128x128xbf16>
    %c0_11 = arith.constant 0 : index
    %c1024 = arith.constant 1024 : index
    %13 = vector.load %arg7[%c0_11, %c1024] : memref<128x1536xbf16, #tpu.memory_space<vmem>>, vector<128x128xbf16>
    %cst_12 = arith.constant dense<0.000000e+00> : vector<128x128xf32>
    %14 = tpu.matmul %11, %12, %cst_12 {dimension_numbers = #tpu.dot_dimension_numbers<[1], [1], [0], [0], [0, 0, 1, 0], [], []>} : vector<128x128xbf16>, vector<128x128xbf16>, vector<128x128xf32> -> vector<128x128xf32>
    %cst_13 = arith.constant dense<0xFF800000> : vector<128xf32>
    %15 = vector.multi_reduction <maximumf>, %14, %cst_13 [1] : vector<128x128xf32> to vector<128xf32>
    %16 = vector.shape_cast %15 : vector<128xf32> to vector<128x1xf32>
    %17 = vector.broadcast %16 : vector<128x1xf32> to vector<128x128xf32>
    %18 = arith.subf %14, %17 : vector<128x128xf32>
    %19 = math.exp %18 : vector<128x128xf32>
    %cst_14 = arith.constant dense<0.000000e+00> : vector<128xf32>
    %20 = vector.multi_reduction <add>, %19, %cst_14 [1] : vector<128x128xf32> to vector<128xf32>
    %21 = vector.shape_cast %20 : vector<128xf32> to vector<128x1xf32>
    %22 = tpu.reciprocal %21 {approx = true} : vector<128x1xf32> -> vector<128x1xf32>
    %23 = arith.truncf %19 : vector<128x128xf32> to vector<128x128xbf16>
    %cst_15 = arith.constant dense<0.000000e+00> : vector<128x128xf32>
    %24 = tpu.matmul %23, %13, %cst_15 {dimension_numbers = #tpu.dot_dimension_numbers<[1], [0], [0], [1], [0, 0, 1, 1], [], []>} : vector<128x128xbf16>, vector<128x128xbf16>, vector<128x128xf32> -> vector<128x128xf32>
    %25 = vector.broadcast %22 : vector<128x1xf32> to vector<128x128xf32>
    %26 = arith.mulf %24, %25 : vector<128x128xf32>
    %27 = arith.truncf %26 : vector<128x128xf32> to vector<128x128xbf16>
    %c0_16 = arith.constant 0 : index
    %c0_17 = arith.constant 0 : index
    %28 = vector.load %arg8[%c0_16, %c0_17] : memref<128x512xbf16, #tpu.memory_space<vmem>>, vector<128x128xbf16>
    tpu.vector_store %arg8[%c0_16, %c0_17], %27 {strides = array<i32>} : memref<128x512xbf16, #tpu.memory_space<vmem>>, vector<128x128xbf16>,
    %c0_18 = arith.constant 0 : index
    %c128 = arith.constant 128 : index
    %29 = vector.load %arg7[%c0_18, %c128] : memref<128x1536xbf16, #tpu.memory_space<vmem>>, vector<128x128xbf16>
    %c0_19 = arith.constant 0 : index
    %c640 = arith.constant 640 : index
    %30 = vector.load %arg7[%c0_19, %c640] : memref<128x1536xbf16, #tpu.memory_space<vmem>>, vector<128x128xbf16>
    %c0_20 = arith.constant 0 : index
    %c1152 = arith.constant 1152 : index
    %31 = vector.load %arg7[%c0_20, %c1152] : memref<128x1536xbf16, #tpu.memory_space<vmem>>, vector<128x128xbf16>
    %cst_21 = arith.constant dense<0.000000e+00> : vector<128x128xf32>
    %32 = tpu.matmul %29, %30, %cst_21 {dimension_numbers = #tpu.dot_dimension_numbers<[1], [1], [0], [0], [0, 0, 1, 0], [], []>} : vector<128x128xbf16>, vector<128x128xbf16>, vector<128x128xf32> -> vector<128x128xf32>
    %cst_22 = arith.constant dense<0xFF800000> : vector<128xf32>
    %33 = vector.multi_reduction <maximumf>, %32, %cst_22 [1] : vector<128x128xf32> to vector<128xf32>
    %34 = vector.shape_cast %33 : vector<128xf32> to vector<128x1xf32>
    %35 = vector.broadcast %34 : vector<128x1xf32> to vector<128x128xf32>
    %36 = arith.subf %32, %35 : vector<128x128xf32>
    %37 = math.exp %36 : vector<128x128xf32>
    %cst_23 = arith.constant dense<0.000000e+00> : vector<128xf32>
    %38 = vector.multi_reduction <add>, %37, %cst_23 [1] : vector<128x128xf32> to vector<128xf32>
    %39 = vector.shape_cast %38 : vector<128xf32> to vector<128x1xf32>
    %40 = tpu.reciprocal %39 {approx = true} : vector<128x1xf32> -> vector<128x1xf32>
    %41 = arith.truncf %37 : vector<128x128xf32> to vector<128x128xbf16>
    %cst_24 = arith.constant dense<0.000000e+00> : vector<128x128xf32>
    %42 = tpu.matmul %41, %31, %cst_24 {dimension_numbers = #tpu.dot_dimension_numbers<[1], [0], [0], [1], [0, 0, 1, 1], [], []>} : vector<128x128xbf16>, vector<128x128xbf16>, vector<128x128xf32> -> vector<128x128xf32>
    %43 = vector.broadcast %40 : vector<128x1xf32> to vector<128x128xf32>
    %44 = arith.mulf %42, %43 : vector<128x128xf32>
    %45 = arith.truncf %44 : vector<128x128xf32> to vector<128x128xbf16>
    %c0_25 = arith.constant 0 : index
    %c128_26 = arith.constant 128 : index
    %46 = vector.load %arg8[%c0_25, %c128_26] : memref<128x512xbf16, #tpu.memory_space<vmem>>, vector<128x128xbf16>
    tpu.vector_store %arg8[%c0_25, %c128_26], %45 {strides = array<i32>} : memref<128x512xbf16, #tpu.memory_space<vmem>>, vector<128x128xbf16>,
    %c0_27 = arith.constant 0 : index
    %c256 = arith.constant 256 : index
    %47 = vector.load %arg7[%c0_27, %c256] : memref<128x1536xbf16, #tpu.memory_space<vmem>>, vector<128x128xbf16>
    %c0_28 = arith.constant 0 : index
    %c768 = arith.constant 768 : index
    %48 = vector.load %arg7[%c0_28, %c768] : memref<128x1536xbf16, #tpu.memory_space<vmem>>, vector<128x128xbf16>
    %c0_29 = arith.constant 0 : index
    %c1280 = arith.constant 1280 : index
    %49 = vector.load %arg7[%c0_29, %c1280] : memref<128x1536xbf16, #tpu.memory_space<vmem>>, vector<128x128xbf16>
    %cst_30 = arith.constant dense<0.000000e+00> : vector<128x128xf32>
    %50 = tpu.matmul %47, %48, %cst_30 {dimension_numbers = #tpu.dot_dimension_numbers<[1], [1], [0], [0], [0, 0, 1, 0], [], []>} : vector<128x128xbf16>, vector<128x128xbf16>, vector<128x128xf32> -> vector<128x128xf32>
    %cst_31 = arith.constant dense<0xFF800000> : vector<128xf32>
    %51 = vector.multi_reduction <maximumf>, %50, %cst_31 [1] : vector<128x128xf32> to vector<128xf32>
    %52 = vector.shape_cast %51 : vector<128xf32> to vector<128x1xf32>
    %53 = vector.broadcast %52 : vector<128x1xf32> to vector<128x128xf32>
    %54 = arith.subf %50, %53 : vector<128x128xf32>
    %55 = math.exp %54 : vector<128x128xf32>
    %cst_32 = arith.constant dense<0.000000e+00> : vector<128xf32>
    %56 = vector.multi_reduction <add>, %55, %cst_32 [1] : vector<128x128xf32> to vector<128xf32>
    %57 = vector.shape_cast %56 : vector<128xf32> to vector<128x1xf32>
    %58 = tpu.reciprocal %57 {approx = true} : vector<128x1xf32> -> vector<128x1xf32>
    %59 = arith.truncf %55 : vector<128x128xf32> to vector<128x128xbf16>
    %cst_33 = arith.constant dense<0.000000e+00> : vector<128x128xf32>
    %60 = tpu.matmul %59, %49, %cst_33 {dimension_numbers = #tpu.dot_dimension_numbers<[1], [0], [0], [1], [0, 0, 1, 1], [], []>} : vector<128x128xbf16>, vector<128x128xbf16>, vector<128x128xf32> -> vector<128x128xf32>
    %61 = vector.broadcast %58 : vector<128x1xf32> to vector<128x128xf32>
    %62 = arith.mulf %60, %61 : vector<128x128xf32>
    %63 = arith.truncf %62 : vector<128x128xf32> to vector<128x128xbf16>
    %c0_34 = arith.constant 0 : index
    %c256_35 = arith.constant 256 : index
    %64 = vector.load %arg8[%c0_34, %c256_35] : memref<128x512xbf16, #tpu.memory_space<vmem>>, vector<128x128xbf16>
    tpu.vector_store %arg8[%c0_34, %c256_35], %63 {strides = array<i32>} : memref<128x512xbf16, #tpu.memory_space<vmem>>, vector<128x128xbf16>,
    %c0_36 = arith.constant 0 : index
    %c384 = arith.constant 384 : index
    %65 = vector.load %arg7[%c0_36, %c384] : memref<128x1536xbf16, #tpu.memory_space<vmem>>, vector<128x128xbf16>
    %c0_37 = arith.constant 0 : index
    %c896 = arith.constant 896 : index
    %66 = vector.load %arg7[%c0_37, %c896] : memref<128x1536xbf16, #tpu.memory_space<vmem>>, vector<128x128xbf16>
    %c0_38 = arith.constant 0 : index
    %c1408 = arith.constant 1408 : index
    %67 = vector.load %arg7[%c0_38, %c1408] : memref<128x1536xbf16, #tpu.memory_space<vmem>>, vector<128x128xbf16>
    %cst_39 = arith.constant dense<0.000000e+00> : vector<128x128xf32>
    %68 = tpu.matmul %65, %66, %cst_39 {dimension_numbers = #tpu.dot_dimension_numbers<[1], [1], [0], [0], [0, 0, 1, 0], [], []>} : vector<128x128xbf16>, vector<128x128xbf16>, vector<128x128xf32> -> vector<128x128xf32>
    %cst_40 = arith.constant dense<0xFF800000> : vector<128xf32>
    %69 = vector.multi_reduction <maximumf>, %68, %cst_40 [1] : vector<128x128xf32> to vector<128xf32>
    %70 = vector.shape_cast %69 : vector<128xf32> to vector<128x1xf32>
    %71 = vector.broadcast %70 : vector<128x1xf32> to vector<128x128xf32>
    %72 = arith.subf %68, %71 : vector<128x128xf32>
    %73 = math.exp %72 : vector<128x128xf32>
    %cst_41 = arith.constant dense<0.000000e+00> : vector<128xf32>
    %74 = vector.multi_reduction <add>, %73, %cst_41 [1] : vector<128x128xf32> to vector<128xf32>
    %75 = vector.shape_cast %74 : vector<128xf32> to vector<128x1xf32>
    %76 = tpu.reciprocal %75 {approx = true} : vector<128x1xf32> -> vector<128x1xf32>
    %77 = arith.truncf %73 : vector<128x128xf32> to vector<128x128xbf16>
    %cst_42 = arith.constant dense<0.000000e+00> : vector<128x128xf32>
    %78 = tpu.matmul %77, %67, %cst_42 {dimension_numbers = #tpu.dot_dimension_numbers<[1], [0], [0], [1], [0, 0, 1, 1], [], []>} : vector<128x128xbf16>, vector<128x128xbf16>, vector<128x128xf32> -> vector<128x128xf32>
    %79 = vector.broadcast %76 : vector<128x1xf32> to vector<128x128xf32>
    %80 = arith.mulf %78, %79 : vector<128x128xf32>
    %81 = arith.truncf %80 : vector<128x128xf32> to vector<128x128xbf16>
    %c0_43 = arith.constant 0 : index
    %c384_44 = arith.constant 384 : index
    %82 = vector.load %arg8[%c0_43, %c384_44] : memref<128x512xbf16, #tpu.memory_space<vmem>>, vector<128x128xbf16>
    tpu.vector_store %arg8[%c0_43, %c384_44], %81 {strides = array<i32>} : memref<128x512xbf16, #tpu.memory_space<vmem>>, vector<128x128xbf16>,
    %c0_45 = arith.constant 0 : index
    %c0_46 = arith.constant 0 : index
    %83 = vector.load %arg8[%c0_45, %c0_46] : memref<128x512xbf16, #tpu.memory_space<vmem>>, vector<128x512xbf16>
    %c0_47 = arith.constant 0 : index
    %c0_48 = arith.constant 0 : index
    %84 = vector.load %arg4[%c0_47, %c0_48] : memref<512x128xf32, #tpu.memory_space<vmem>>, vector<512x128xf32>
    %85 = arith.truncf %84 : vector<512x128xf32> to vector<512x128xbf16>
    %cst_49 = arith.constant dense<0.000000e+00> : vector<128x128xf32>
    %86 = tpu.matmul %83, %85, %cst_49 {dimension_numbers = #tpu.dot_dimension_numbers<[1], [0], [0], [1], [0, 0, 1, 1], [], []>} : vector<128x512xbf16>, vector<512x128xbf16>, vector<128x128xf32> -> vector<128x128xf32>
    %c0_50 = arith.constant 0 : index
    %c0_51 = arith.constant 0 : index
    %87 = vector.load %arg5[%c0_50, %c0_51] : memref<1x128xf32, #tpu.memory_space<vmem>>, vector<1x128xf32>
    %88 = vector.broadcast %87 : vector<1x128xf32> to vector<128x128xf32>
    %89 = arith.addf %86, %88 : vector<128x128xf32>
    %c0_52 = arith.constant 0 : index
    %c0_53 = arith.constant 0 : index
    %c0_54 = arith.constant 0 : index
    %90 = vector.load %arg6[%c0_52, %c0_53, %c0_54] : memref<1x128x128xf32, #tpu.memory_space<vmem>>, vector<1x128x128xf32>
    %91 = vector.shape_cast %90 : vector<1x128x128xf32> to vector<128x128xf32>
    %92 = vector.shape_cast %89 : vector<128x128xf32> to vector<1x128x128xf32>
    tpu.vector_store %arg6[%c0_52, %c0_53, %c0_54], %92 {strides = array<i32>} : memref<1x128x128xf32, #tpu.memory_space<vmem>>, vector<1x128x128xf32>,
    return
  }
  func.func @transform_0(%arg0: i32) -> (i32, i32, i32) {
    %c0_i32 = arith.constant 0 : i32
    %c0_i32_0 = arith.constant 0 : i32
    %c0_i32_1 = arith.constant 0 : i32
    return %arg0, %c0_i32, %c0_i32_0 : i32, i32, i32
  }
  func.func @transform_1(%arg0: i32) -> (i32, i32) {
    %c0_i32 = arith.constant 0 : i32
    %c0_i32_0 = arith.constant 0 : i32
    %c0_i32_1 = arith.constant 0 : i32
    return %c0_i32, %c0_i32_0 : i32, i32
  }
  func.func @transform_2(%arg0: i32) -> (i32, i32) {
    %c0_i32 = arith.constant 0 : i32
    %c0_i32_0 = arith.constant 0 : i32
    %c0_i32_1 = arith.constant 0 : i32
    return %c0_i32, %c0_i32_0 : i32, i32
  }
  func.func @transform_3(%arg0: i32) -> (i32, i32) {
    %c0_i32 = arith.constant 0 : i32
    %c0_i32_0 = arith.constant 0 : i32
    %c0_i32_1 = arith.constant 0 : i32
    return %c0_i32, %c0_i32_0 : i32, i32
  }
  func.func @transform_4(%arg0: i32) -> (i32, i32) {
    %c0_i32 = arith.constant 0 : i32
    %c0_i32_0 = arith.constant 0 : i32
    %c0_i32_1 = arith.constant 0 : i32
    return %c0_i32, %c0_i32_0 : i32, i32
  }
  func.func @transform_5(%arg0: i32) -> (i32, i32, i32) {
    %c0_i32 = arith.constant 0 : i32
    %c0_i32_0 = arith.constant 0 : i32
    %c0_i32_1 = arith.constant 0 : i32
    return %arg0, %c0_i32, %c0_i32_0 : i32, i32, i32
  }
}

</mosaic_0001>

<llo_original>
// kernel: tpu_custom_call.1
$region0: #{tpu_custom_call.1}
  #allocation0 [shape = 'u32[]', space=smem, size = 0x4, offset = 0x4, fixed_abs, tag = 'smem constant byte address 0x4 - core index']
  #allocation1 [shape = 'u32[144,128]{1,0:T(1,128)}', space=vmem, size = 0x12000, scoped, tag = 'internal scratch']
  #allocation2 [shape = 'bf16[128,1536]{1,0:T(16,128)(2,1)}', space=vmem, size = 0x60000, scoped, tag = 'scratch operand']
  #allocation3 [shape = 'bf16[128,512]{1,0:T(16,128)(2,1)}', space=vmem, size = 0x20000, scoped, tag = 'scratch operand']
  %s0 = inlined_call_operand.hbm [shape: f32[2,128,128], index: 0, kind: input, shape index: {}]
  %s1 = inlined_call_operand.hbm [shape: f32[128,1536], index: 1, kind: input, shape index: {}]
  %s2 = inlined_call_operand.hbm [shape: f32[1,1536], index: 2, kind: input, shape index: {}]
  %s3 = inlined_call_operand.hbm [shape: f32[512,128], index: 3, kind: input, shape index: {}]
  %s4 = inlined_call_operand.vmem [shape: f32[1,128], index: 4, kind: input, shape index: {}]
  %s5 = inlined_call_operand.hbm [shape: f32[2,128,128], index: 5, kind: output, shape index: {}]
  %s6 = sld [smem:[#allocation0]]
  $region69: #{tpu_custom_call.1} parent=0
    _
  %s8 = ssub.s32 1, %s6
  %s9 = scalar_select 0, %s8, %s6
  $region1: #{tpu_custom_call.1} parent=0
    #allocation4 [shape = 'u8[131072]{0}', space=vmem, size = 0x20000, scoped, tag = 'input window, operand 0']
    #allocation5 [shape = 's32[2]{0}', space=sflag, size = 0x8, scoped, tag = 'scoped memory for tpu_custom_call.1']
    #allocation6 [shape = 's32[2]{0}', space=sflag, size = 0x8, scoped, tag = 'scoped memory for tpu_custom_call.1']
    #allocation7 [shape = 'u8[786432]{0}', space=vmem, size = 0xc0000, scoped, tag = 'input window, operand 1, single buffered']
    #allocation8 [shape = 's32[1]{0}', space=sflag, size = 0x4, scoped, tag = 'scoped memory for tpu_custom_call.1']
    #allocation9 [shape = 'u8[6144]{0}', space=vmem, size = 0x1800, scoped, tag = 'input window, operand 2, single buffered']
    #allocation10 [shape = 'u8[262144]{0}', space=vmem, size = 0x40000, scoped, tag = 'input window, operand 3, single buffered']
    #allocation11 [shape = 's32[1]{0}', space=sflag, size = 0x4, scoped, tag = 'scoped memory for tpu_custom_call.1']
    #allocation12 [shape = 'u8[131072]{0}', space=vmem, size = 0x20000, scoped, tag = 'output window, operand 0']
    %10 = vsyncpa [#allocation5], 0
    %s11 = scalar_lea.sflag [#allocation5], 1
    %12 = vsyncpa %s11, 0
    %13 = vsyncpa [#allocation8], 0
    %14 = vsyncpa [#allocation11], 0
    %15 = vsyncpa [#allocation6], 0
    %s16 = scalar_lea.sflag [#allocation6], 1
    %17 = vsyncpa %s16, 0
    loop: start=0, step=1, limit=4
    $region2: #{tpu_custom_call.1} parent=1 // loop_pre_header
      _
    $region3: #{tpu_custom_call.1} parent=1 // loop_header
      %s19 = sphi 0, %s23
      %p20 = scmp.ge.s32.totalorder %s19, 4
      %s29 = sphi 0, %s31
      %s32 = sphi 0, %s29
      %s33 = sphi 0, %s32
      %s49 = sphi 0, %s33
      %s53 = sphi 0, %s53
      %s55 = sphi 0, %s53
      %s56 = sphi 0, %s55
      %s70 = sphi 0, %s56
      %s74 = sphi 0, %s74
      %s76 = sphi 0, %s74
      %s77 = sphi 0, %s76
      %s91 = sphi 0, %s77
      %s95 = sphi 0, %s95
      %s97 = sphi 0, %s95
      %s98 = sphi 0, %s97
      %s112 = sphi 0, %s98
      %s116 = sphi 0, %s116
      %s118 = sphi 0, %s116
      %s119 = sphi 0, %s118
      %s133 = sphi 0, %s119
      %s139 = sphi 0, %s141
      %s142 = sphi 0, %s139
      %s143 = sphi 0, %s142
      %s159 = sphi 0, %s143
    $region4: #{tpu_custom_call.1} parent=1 // loop_header_branch
      %22 = sbr.rel (%p20) target = $region8
    $region5: #{tpu_custom_call.1} parent=1 // loop_body
      %s24 = ssub.s32 %s19, 1
      %s25 = ssub.s32 %s19, 2
      %s26 = sadd.s32 %s19, 1
      %s27 = ssub.s32 %s19, %s26
      %p28 = scmp.eq.s32.totalorder %s27, 0
      %s30 = sadd.s32 %s29, 1
      %s31 = scalar_select %p28, %s29, %s30
      %p34 = pneg %p28
      %p35 = scmp.eq.s32.totalorder %s19, 1
      %p36 = por %p34, %p35
      %p37 = scmp.ne.s32.totalorder %s29, %s32
      %p38 = scmp.eq.s32.totalorder %s19, 0
      %p39 = por %p37, %p38
      %p40 = scmp.ne.s32.totalorder %s29, %s32
      %p41 = scmp.eq.s32.totalorder %s24, 1
      %p42 = por %p40, %p41
      %p43 = scmp.ne.s32.totalorder %s32, %s33
      %p44 = scmp.eq.s32.totalorder %s24, 0
      %p45 = por %p43, %p44
      %p46 = scmp.ne.s32.totalorder %s32, %s33
      %p47 = scmp.eq.s32.totalorder %s25, 1
      %p48 = por %p46, %p47
      %p50 = scmp.ne.s32.totalorder %s33, %s49
      %p51 = scmp.eq.s32.totalorder %s25, 0
      %p52 = por %p50, %p51
      %s54 = sadd.s32 %s53, 1
      %p57 = scmp.eq.s32.totalorder %s19, 1
      %p58 = scmp.ne.s32.totalorder %s53, %s55
      %p59 = scmp.eq.s32.totalorder %s19, 0
      %p60 = por %p58, %p59
      %p61 = scmp.ne.s32.totalorder %s53, %s55
      %p62 = scmp.eq.s32.totalorder %s24, 1
      %p63 = por %p61, %p62
      %p64 = scmp.ne.s32.totalorder %s55, %s56
      %p65 = scmp.eq.s32.totalorder %s24, 0
      %p66 = por %p64, %p65
      %p67 = scmp.ne.s32.totalorder %s55, %s56
      %p68 = scmp.eq.s32.totalorder %s25, 1
      %p69 = por %p67, %p68
      %p71 = scmp.ne.s32.totalorder %s56, %s70
      %p72 = scmp.eq.s32.totalorder %s25, 0
      %p73 = por %p71, %p72
      %s75 = sadd.s32 %s74, 1
      %p78 = scmp.eq.s32.totalorder %s19, 1
      %p79 = scmp.ne.s32.totalorder %s74, %s76
      %p80 = scmp.eq.s32.totalorder %s19, 0
      %p81 = por %p79, %p80
      %p82 = scmp.ne.s32.totalorder %s74, %s76
      %p83 = scmp.eq.s32.totalorder %s24, 1
      %p84 = por %p82, %p83
      %p85 = scmp.ne.s32.totalorder %s76, %s77
      %p86 = scmp.eq.s32.totalorder %s24, 0
      %p87 = por %p85, %p86
      %p88 = scmp.ne.s32.totalorder %s76, %s77
      %p89 = scmp.eq.s32.totalorder %s25, 1
      %p90 = por %p88, %p89
      %p92 = scmp.ne.s32.totalorder %s77, %s91
      %p93 = scmp.eq.s32.totalorder %s25, 0
      %p94 = por %p92, %p93
      %s96 = sadd.s32 %s95, 1
      %p99 = scmp.eq.s32.totalorder %s19, 1
      %p100 = scmp.ne.s32.totalorder %s95, %s97
      %p101 = scmp.eq.s32.totalorder %s19, 0
      %p102 = por %p100, %p101
      %p103 = scmp.ne.s32.totalorder %s95, %s97
      %p104 = scmp.eq.s32.totalorder %s24, 1
      %p105 = por %p103, %p104
      %p106 = scmp.ne.s32.totalorder %s97, %s98
      %p107 = scmp.eq.s32.totalorder %s24, 0
      %p108 = por %p106, %p107
      %p109 = scmp.ne.s32.totalorder %s97, %s98
      %p110 = scmp.eq.s32.totalorder %s25, 1
      %p111 = por %p109, %p110
      %p113 = scmp.ne.s32.totalorder %s98, %s112
      %p114 = scmp.eq.s32.totalorder %s25, 0
      %p115 = por %p113, %p114
      %s117 = sadd.s32 %s116, 1
      %p120 = scmp.eq.s32.totalorder %s19, 1
      %p121 = scmp.ne.s32.totalorder %s116, %s118
      %p122 = scmp.eq.s32.totalorder %s19, 0
      %p123 = por %p121, %p122
      %p124 = scmp.ne.s32.totalorder %s116, %s118
      %p125 = scmp.eq.s32.totalorder %s24, 1
      %p126 = por %p124, %p125
      %p127 = scmp.ne.s32.totalorder %s118, %s119
      %p128 = scmp.eq.s32.totalorder %s24, 0
      %p129 = por %p127, %p128
      %p130 = scmp.ne.s32.totalorder %s118, %s119
      %p131 = scmp.eq.s32.totalorder %s25, 1
      %p132 = por %p130, %p131
      %p134 = scmp.ne.s32.totalorder %s119, %s133
      %p135 = scmp.eq.s32.totalorder %s25, 0
      %p136 = por %p134, %p135
      %s137 = ssub.s32 %s19, %s26
      %p138 = scmp.eq.s32.totalorder %s137, 0
      %s140 = sadd.s32 %s139, 1
      %s141 = scalar_select %p138, %s139, %s140
      %p144 = pneg %p138
      %p145 = scmp.eq.s32.totalorder %s19, 1
      %p146 = por %p144, %p145
      %p147 = scmp.ne.s32.totalorder %s139, %s142
      %p148 = scmp.eq.s32.totalorder %s19, 0
      %p149 = por %p147, %p148
      %p150 = scmp.ne.s32.totalorder %s139, %s142
      %p151 = scmp.eq.s32.totalorder %s24, 1
      %p152 = por %p150, %p151
      %p153 = scmp.ne.s32.totalorder %s142, %s143
      %p154 = scmp.eq.s32.totalorder %s24, 0
      %p155 = por %p153, %p154
      %p156 = scmp.ne.s32.totalorder %s142, %s143
      %p157 = scmp.eq.s32.totalorder %s25, 1
      %p158 = por %p156, %p157
      %p160 = scmp.ne.s32.totalorder %s143, %s159
      %p161 = scmp.eq.s32.totalorder %s25, 0
      %p162 = por %p160, %p161
      %p163 = scmp.le.s32.totalorder 1, %s19
      %p164 = scmp.lt.s32.totalorder %s19, 3
      %p165 = pnand %p163, %p164
      %p166 = pneg %p165
      // Predicated region
      $region9: #{tpu_custom_call.1} parent=5 // pred_check
        _
      $region10: #{tpu_custom_call.1} parent=5 // pred_check_branch
        %168 = sbr.rel (%p165) target = $region12
      $region11: #{tpu_custom_call.1} parent=5 // pred_region
        %s169 = ssub.s32 %s19, 1
        // Predicated region
        $region13: #{tpu_custom_call.1} parent=11 // pred_check
          %p170 = pneg %p66
        $region14: #{tpu_custom_call.1} parent=11 // pred_check_branch
          %172 = sbr.rel (%p170) target = $region16
        $region15: #{tpu_custom_call.1} parent=11 // pred_region
          %s174 = ssub.s32 24576, 24576
          %175 = vsyncadd [#allocation8], %s174
          %s176 = sshll.u32 [#allocation7], 4
          %s177 = int_to_ptr.vmem [resolvable:$true] %s176
          %182 = dma.hbm_to_vmem [thread:$0]  %s1, 24576, %s177, [#allocation8], 1536, 1536, 96
        $region16: #{tpu_custom_call.1} parent=11 // pred_fallthru
          _
        // Predicated region
        $region17: #{tpu_custom_call.1} parent=11 // pred_check
          %p183 = pneg %p87
        $region18: #{tpu_custom_call.1} parent=11 // pred_check_branch
          %185 = sbr.rel (%p183) target = $region20
        $region19: #{tpu_custom_call.1} parent=11 // pred_region
          %s187 = ssub.s32 192, 192
          %188 = vsyncadd [#allocation8], %s187
          %s190 = sshll.u32 [#allocation9], 4
          %s191 = int_to_ptr.vmem [resolvable:$true] %s190
          %193 = dma.hbm_to_vmem [thread:$0]  %s2, 192, %s191, [#allocation8]
        $region20: #{tpu_custom_call.1} parent=11 // pred_fallthru
          _
        // Predicated region
        $region21: #{tpu_custom_call.1} parent=11 // pred_check
          %p194 = pneg %p108
        $region22: #{tpu_custom_call.1} parent=11 // pred_check_branch
          %196 = sbr.rel (%p194) target = $region24
        $region23: #{tpu_custom_call.1} parent=11 // pred_region
          %s198 = ssub.s32 8192, 8192
          %199 = vsyncadd [#allocation11], %s198
          %s200 = sshll.u32 [#allocation10], 4
          %s201 = int_to_ptr.vmem [resolvable:$true] %s200
          %206 = dma.hbm_to_vmem [thread:$0]  %s3, 8192, %s201, [#allocation11], 128, 128, 8
        $region24: #{tpu_custom_call.1} parent=11 // pred_fallthru
          _
        // Predicated region
        $region25: #{tpu_custom_call.1} parent=11 // pred_check
          %p207 = pneg %p129
        $region26: #{tpu_custom_call.1} parent=11 // pred_check_branch
          %209 = sbr.rel (%p207) target = $region28
        $region27: #{tpu_custom_call.1} parent=11 // pred_region
          _
        $region28: #{tpu_custom_call.1} parent=11 // pred_fallthru
          _
      $region12: #{tpu_custom_call.1} parent=5 // pred_fallthru
        _
      %p210 = scmp.lt.s32.totalorder %s19, 2
      // Predicated region
      $region29: #{tpu_custom_call.1} parent=5 // pred_check
        %p211 = pneg %p210
      $region30: #{tpu_custom_call.1} parent=5 // pred_check_branch
        %213 = sbr.rel (%p211) target = $region32
      $region31: #{tpu_custom_call.1} parent=5 // pred_region
        // Predicated region
        $region33: #{tpu_custom_call.1} parent=31 // pred_check
          %p214 = pneg %p39
        $region34: #{tpu_custom_call.1} parent=31 // pred_check_branch
          %216 = sbr.rel (%p214) target = $region36
        $region35: #{tpu_custom_call.1} parent=31 // pred_region
          %s217 = sand.u32 %s29, 1
          %s218 = scalar_lea.sflag [#allocation5], %s217
          %s219 = sand.u32 %s29, 1
          %s220 = smul.addr %s219, 128
          %s221 = scalar_lea.vmem [#allocation4], %s220
          %s223 = ssub.s32 2048, 2048
          %224 = vsyncadd %s218, %s223
          %s225 = smul.addr %s19, 16
          %s226 = smul.addr %s225, 128
          %s227 = scalar_lea.hbm %s0, %s226
          %s228 = sshll.u32 %s221, 4
          %s229 = int_to_ptr.vmem [resolvable:$true] %s228
          %234 = dma.hbm_to_vmem [thread:$0]  %s227, 2048, %s229, %s218, 128, 128, 8
        $region36: #{tpu_custom_call.1} parent=31 // pred_fallthru
          _
      $region32: #{tpu_custom_call.1} parent=5 // pred_fallthru
        _
      %p235 = scmp.le.s32.totalorder 1, %s19
      %p236 = scmp.lt.s32.totalorder %s19, 3
      %p237 = pnand %p235, %p236
      %p238 = pneg %p237
      // Predicated region
      $region37: #{tpu_custom_call.1} parent=5 // pred_check
        _
      $region38: #{tpu_custom_call.1} parent=5 // pred_check_branch
        %240 = sbr.rel (%p237) target = $region40
      $region39: #{tpu_custom_call.1} parent=5 // pred_region
        %s241 = ssub.s32 %s19, 1
        %s242 = sand.u32 %s32, 1
        %s243 = scalar_lea.sflag [#allocation5], %s242
        %s244 = sand.u32 %s32, 1
        %s245 = smul.addr %s244, 128
        %s246 = scalar_lea.vmem [#allocation4], %s245
        // Predicated region
        $region41: #{tpu_custom_call.1} parent=39 // pred_check
          %p247 = pneg %p45
        $region42: #{tpu_custom_call.1} parent=39 // pred_check_branch
          %249 = sbr.rel (%p247) target = $region44
        $region43: #{tpu_custom_call.1} parent=39 // pred_region
          %250 = dma.done %s243, 2048
        $region44: #{tpu_custom_call.1} parent=39 // pred_fallthru
          _
        // Predicated region
        $region45: #{tpu_custom_call.1} parent=39 // pred_check
          %p251 = pneg %p66
        $region46: #{tpu_custom_call.1} parent=39 // pred_check_branch
          %253 = sbr.rel (%p251) target = $region48
        $region47: #{tpu_custom_call.1} parent=39 // pred_region
          %254 = dma.done [#allocation8], 24576
        $region48: #{tpu_custom_call.1} parent=39 // pred_fallthru
          _
        // Predicated region
        $region49: #{tpu_custom_call.1} parent=39 // pred_check
          %p255 = pneg %p87
        $region50: #{tpu_custom_call.1} parent=39 // pred_check_branch
          %257 = sbr.rel (%p255) target = $region52
        $region51: #{tpu_custom_call.1} parent=39 // pred_region
          %258 = dma.done [#allocation8], 192
        $region52: #{tpu_custom_call.1} parent=39 // pred_fallthru
          _
        // Predicated region
        $region53: #{tpu_custom_call.1} parent=39 // pred_check
          %p259 = pneg %p108
        $region54: #{tpu_custom_call.1} parent=39 // pred_check_branch
          %261 = sbr.rel (%p259) target = $region56
        $region55: #{tpu_custom_call.1} parent=39 // pred_region
          %262 = dma.done [#allocation11], 8192
        $region56: #{tpu_custom_call.1} parent=39 // pred_fallthru
          _
        %s263 = sand.u32 %s32, 1
        %s264 = scalar_lea.sflag [#allocation5], %s263
        %s265 = sand.u32 %s32, 1
        %s266 = smul.addr %s265, 128
        %s267 = scalar_lea.vmem [#allocation4], %s266
        %p268 = pneg %p45
        %p269 = pneg %p42
        %p270 = pneg %p66
        %p271 = pneg %p63
        %p272 = pneg %p87
        %p273 = pneg %p84
        %p274 = pneg %p108
        %p275 = pneg %p105
        %p276 = pneg %p129
        %p277 = pneg %p126
        %p278 = pneg %p155
        %p279 = pneg %p152
        %s280 = sand.u32 %s142, 1
        %s281 = scalar_lea.sflag [#allocation6], %s280
        %s282 = sand.u32 %s142, 1
        %s283 = smul.addr %s282, 128
        %s284 = scalar_lea.vmem [#allocation12], %s283
        %v286 = vld [vmem:[%s246] sm:$0xff]
        %v287 = vld [vmem:[%s246 + $0x8] sm:$0xff]
        %v288 = vld [vmem:[%s246 + $0x10] sm:$0xff]
        %v289 = vld [vmem:[%s246 + $0x18] sm:$0xff]
        %v290 = vld [vmem:[%s246 + $0x20] sm:$0xff]
        %v291 = vld [vmem:[%s246 + $0x28] sm:$0xff]
        %v292 = vld [vmem:[%s246 + $0x30] sm:$0xff]
        %v293 = vld [vmem:[%s246 + $0x38] sm:$0xff]
        %v294 = vld [vmem:[%s246 + $0x40] sm:$0xff]
        %v295 = vld [vmem:[%s246 + $0x48] sm:$0xff]
        %v296 = vld [vmem:[%s246 + $0x50] sm:$0xff]
        %v297 = vld [vmem:[%s246 + $0x58] sm:$0xff]
        %v298 = vld [vmem:[%s246 + $0x60] sm:$0xff]
        %v299 = vld [vmem:[%s246 + $0x68] sm:$0xff]
        %v300 = vld [vmem:[%s246 + $0x70] sm:$0xff]
        %v301 = vld [vmem:[%s246 + $0x78] sm:$0xff]
        %v302 = vpack.c.bf16 %v287, %v286
        %v303 = vpack.c.bf16 %v289, %v288
        %v304 = vpack.c.bf16 %v291, %v290
        %v305 = vpack.c.bf16 %v293, %v292
        %v306 = vpack.c.bf16 %v295, %v294
        %v307 = vpack.c.bf16 %v297, %v296
        %v308 = vpack.c.bf16 %v299, %v298
        %v309 = vpack.c.bf16 %v301, %v300
        %v310 = vld [vmem:[#allocation7] sm:$0xff]
        %v311 = vld [vmem:[#allocation7 + $0x8] sm:$0xff]
        %v312 = vld [vmem:[#allocation7 + $0x10] sm:$0xff]
        %v313 = vld [vmem:[#allocation7 + $0x18] sm:$0xff]
        %v314 = vld [vmem:[#allocation7 + $0x20] sm:$0xff]
        %v315 = vld [vmem:[#allocation7 + $0x28] sm:$0xff]
        %v316 = vld [vmem:[#allocation7 + $0x30] sm:$0xff]
        %v317 = vld [vmem:[#allocation7 + $0x38] sm:$0xff]
        %v318 = vld [vmem:[#allocation7 + $0x40] sm:$0xff]
        %v319 = vld [vmem:[#allocation7 + $0x48] sm:$0xff]
        %v320 = vld [vmem:[#allocation7 + $0x50] sm:$0xff]
        %v321 = vld [vmem:[#allocation7 + $0x58] sm:$0xff]
        %v322 = vld [vmem:[#allocation7 + $0x60] sm:$0xff]
        %v323 = vld [vmem:[#allocation7 + $0x68] sm:$0xff]
        %v324 = vld [vmem:[#allocation7 + $0x70] sm:$0xff]
        %v325 = vld [vmem:[#allocation7 + $0x78] sm:$0xff]
        %v326 = vld [vmem:[#allocation7 + $0x80] sm:$0xff]
        %v327 = vld [vmem:[#allocation7 + $0x88] sm:$0xff]
        %v328 = vld [vmem:[#allocation7 + $0x90] sm:$0xff]
        %v329 = vld [vmem:[#allocation7 + $0x98] sm:$0xff]
        %v330 = vld [vmem:[#allocation7 + $0xa0] sm:$0xff]
        %v331 = vld [vmem:[#allocation7 + $0xa8] sm:$0xff]
        %v332 = vld [vmem:[#allocation7 + $0xb0] sm:$0xff]
        %v333 = vld [vmem:[#allocation7 + $0xb8] sm:$0xff]
        %v334 = vld [vmem:[#allocation7 + $0xc0] sm:$0xff]
        %v335 = vld [vmem:[#allocation7 + $0xc8] sm:$0xff]
        %v336 = vld [vmem:[#allocation7 + $0xd0] sm:$0xff]
        %v337 = vld [vmem:[#allocation7 + $0xd8] sm:$0xff]
        %v338 = vld [vmem:[#allocation7 + $0xe0] sm:$0xff]
        %v339 = vld [vmem:[#allocation7 + $0xe8] sm:$0xff]
        %v340 = vld [vmem:[#allocation7 + $0xf0] sm:$0xff]
        %v341 = vld [vmem:[#allocation7 + $0xf8] sm:$0xff]
        %v342 = vld [vmem:[#allocation7 + $0x100] sm:$0xff]
        %v343 = vld [vmem:[#allocation7 + $0x108] sm:$0xff]
        %v344 = vld [vmem:[#allocation7 + $0x110] sm:$0xff]
        %v345 = vld [vmem:[#allocation7 + $0x118] sm:$0xff]
        %v346 = vld [vmem:[#allocation7 + $0x120] sm:$0xff]
        %v347 = vld [vmem:[#allocation7 + $0x128] sm:$0xff]
        %v348 = vld [vmem:[#allocation7 + $0x130] sm:$0xff]
        %v349 = vld [vmem:[#allocation7 + $0x138] sm:$0xff]
        %v350 = vld [vmem:[#allocation7 + $0x140] sm:$0xff]
        %v351 = vld [vmem:[#allocation7 + $0x148] sm:$0xff]
        %v352 = vld [vmem:[#allocation7 + $0x150] sm:$0xff]
        %v353 = vld [vmem:[#allocation7 + $0x158] sm:$0xff]
        %v354 = vld [vmem:[#allocation7 + $0x160] sm:$0xff]
        %v355 = vld [vmem:[#allocation7 + $0x168] sm:$0xff]
        %v356 = vld [vmem:[#allocation7 + $0x170] sm:$0xff]
        %v357 = vld [vmem:[#allocation7 + $0x178] sm:$0xff]
        %v358 = vld [vmem:[#allocation7 + $0x180] sm:$0xff]
        %v359 = vld [vmem:[#allocation7 + $0x188] sm:$0xff]
        %v360 = vld [vmem:[#allocation7 + $0x190] sm:$0xff]
        %v361 = vld [vmem:[#allocation7 + $0x198] sm:$0xff]
        %v362 = vld [vmem:[#allocation7 + $0x1a0] sm:$0xff]
        %v363 = vld [vmem:[#allocation7 + $0x1a8] sm:$0xff]
        %v364 = vld [vmem:[#allocation7 + $0x1b0] sm:$0xff]
        %v365 = vld [vmem:[#allocation7 + $0x1b8] sm:$0xff]
        %v366 = vld [vmem:[#allocation7 + $0x1c0] sm:$0xff]
        %v367 = vld [vmem:[#allocation7 + $0x1c8] sm:$0xff]
        %v368 = vld [vmem:[#allocation7 + $0x1d0] sm:$0xff]
        %v369 = vld [vmem:[#allocation7 + $0x1d8] sm:$0xff]
        %v370 = vld [vmem:[#allocation7 + $0x1e0] sm:$0xff]
        %v371 = vld [vmem:[#allocation7 + $0x1e8] sm:$0xff]
        %v372 = vld [vmem:[#allocation7 + $0x1f0] sm:$0xff]
        %v373 = vld [vmem:[#allocation7 + $0x1f8] sm:$0xff]
        %v374 = vld [vmem:[#allocation7 + $0x200] sm:$0xff]
        %v375 = vld [vmem:[#allocation7 + $0x208] sm:$0xff]
        %v376 = vld [vmem:[#allocation7 + $0x210] sm:$0xff]
        %v377 = vld [vmem:[#allocation7 + $0x218] sm:$0xff]
        %v378 = vld [vmem:[#allocation7 + $0x220] sm:$0xff]
        %v379 = vld [vmem:[#allocation7 + $0x228] sm:$0xff]
        %v380 = vld [vmem:[#allocation7 + $0x230] sm:$0xff]
        %v381 = vld [vmem:[#allocation7 + $0x238] sm:$0xff]
        %v382 = vld [vmem:[#allocation7 + $0x240] sm:$0xff]
        %v383 = vld [vmem:[#allocation7 + $0x248] sm:$0xff]
        %v384 = vld [vmem:[#allocation7 + $0x250] sm:$0xff]
        %v385 = vld [vmem:[#allocation7 + $0x258] sm:$0xff]
        %v386 = vld [vmem:[#allocation7 + $0x260] sm:$0xff]
        %v387 = vld [vmem:[#allocation7 + $0x268] sm:$0xff]
        %v388 = vld [vmem:[#allocation7 + $0x270] sm:$0xff]
        %v389 = vld [vmem:[#allocation7 + $0x278] sm:$0xff]
        %v390 = vld [vmem:[#allocation7 + $0x280] sm:$0xff]
        %v391 = vld [vmem:[#allocation7 + $0x288] sm:$0xff]
        %v392 = vld [vmem:[#allocation7 + $0x290] sm:$0xff]
        %v393 = vld [vmem:[#allocation7 + $0x298] sm:$0xff]
        %v394 = vld [vmem:[#allocation7 + $0x2a0] sm:$0xff]
        %v395 = vld [vmem:[#allocation7 + $0x2a8] sm:$0xff]
        %v396 = vld [vmem:[#allocation7 + $0x2b0] sm:$0xff]
        %v397 = vld [vmem:[#allocation7 + $0x2b8] sm:$0xff]
        %v398 = vld [vmem:[#allocation7 + $0x2c0] sm:$0xff]
        %v399 = vld [vmem:[#allocation7 + $0x2c8] sm:$0xff]
        %v400 = vld [vmem:[#allocation7 + $0x2d0] sm:$0xff]
        %v401 = vld [vmem:[#allocation7 + $0x2d8] sm:$0xff]
        %v402 = vld [vmem:[#allocation7 + $0x2e0] sm:$0xff]
        %v403 = vld [vmem:[#allocation7 + $0x2e8] sm:$0xff]
        %v404 = vld [vmem:[#allocation7 + $0x2f0] sm:$0xff]
        %v405 = vld [vmem:[#allocation7 + $0x2f8] sm:$0xff]
        %v406 = vld [vmem:[#allocation7 + $0x300] sm:$0xff]
        %v407 = vld [vmem:[#allocation7 + $0x308] sm:$0xff]
        %v408 = vld [vmem:[#allocation7 + $0x310] sm:$0xff]
        %v409 = vld [vmem:[#allocation7 + $0x318] sm:$0xff]
        %v410 = vld [vmem:[#allocation7 + $0x320] sm:$0xff]
        %v411 = vld [vmem:[#allocation7 + $0x328] sm:$0xff]
        %v412 = vld [vmem:[#allocation7 + $0x330] sm:$0xff]
        %v413 = vld [vmem:[#allocation7 + $0x338] sm:$0xff]
        %v414 = vld [vmem:[#allocation7 + $0x340] sm:$0xff]
        %v415 = vld [vmem:[#allocation7 + $0x348] sm:$0xff]
        %v416 = vld [vmem:[#allocation7 + $0x350] sm:$0xff]
        %v417 = vld [vmem:[#allocation7 + $0x358] sm:$0xff]
        %v418 = vld [vmem:[#allocation7 + $0x360] sm:$0xff]
        %v419 = vld [vmem:[#allocation7 + $0x368] sm:$0xff]
        %v420 = vld [vmem:[#allocation7 + $0x370] sm:$0xff]
        %v421 = vld [vmem:[#allocation7 + $0x378] sm:$0xff]
        %v422 = vld [vmem:[#allocation7 + $0x380] sm:$0xff]
        %v423 = vld [vmem:[#allocation7 + $0x388] sm:$0xff]
        %v424 = vld [vmem:[#allocation7 + $0x390] sm:$0xff]
        %v425 = vld [vmem:[#allocation7 + $0x398] sm:$0xff]
        %v426 = vld [vmem:[#allocation7 + $0x3a0] sm:$0xff]
        %v427 = vld [vmem:[#allocation7 + $0x3a8] sm:$0xff]
        %v428 = vld [vmem:[#allocation7 + $0x3b0] sm:$0xff]
        %v429 = vld [vmem:[#allocation7 + $0x3b8] sm:$0xff]
        %v430 = vld [vmem:[#allocation7 + $0x3c0] sm:$0xff]
        %v431 = vld [vmem:[#allocation7 + $0x3c8] sm:$0xff]
        %v432 = vld [vmem:[#allocation7 + $0x3d0] sm:$0xff]
        %v433 = vld [vmem:[#allocation7 + $0x3d8] sm:$0xff]
        %v434 = vld [vmem:[#allocation7 + $0x3e0] sm:$0xff]
        %v435 = vld [vmem:[#allocation7 + $0x3e8] sm:$0xff]
        %v436 = vld [vmem:[#allocation7 + $0x3f0] sm:$0xff]
        %v437 = vld [vmem:[#allocation7 + $0x3f8] sm:$0xff]
        %v438 = vld [vmem:[#allocation7 + $0x400] sm:$0xff]
        %v439 = vld [vmem:[#allocation7 + $0x408] sm:$0xff]
        %v440 = vld [vmem:[#allocation7 + $0x410] sm:$0xff]
        %v441 = vld [vmem:[#allocation7 + $0x418] sm:$0xff]
        %v442 = vld [vmem:[#allocation7 + $0x420] sm:$0xff]
        %v443 = vld [vmem:[#allocation7 + $0x428] sm:$0xff]
        %v444 = vld [vmem:[#allocation7 + $0x430] sm:$0xff]
        %v445 = vld [vmem:[#allocation7 + $0x438] sm:$0xff]
        %v446 = vld [vmem:[#allocation7 + $0x440] sm:$0xff]
        %v447 = vld [vmem:[#allocation7 + $0x448] sm:$0xff]
        %v448 = vld [vmem:[#allocation7 + $0x450] sm:$0xff]
        %v449 = vld [vmem:[#allocation7 + $0x458] sm:$0xff]
        %v450 = vld [vmem:[#allocation7 + $0x460] sm:$0xff]
        %v451 = vld [vmem:[#allocation7 + $0x468] sm:$0xff]
        %v452 = vld [vmem:[#allocation7 + $0x470] sm:$0xff]
        %v453 = vld [vmem:[#allocation7 + $0x478] sm:$0xff]
        %v454 = vld [vmem:[#allocation7 + $0x480] sm:$0xff]
        %v455 = vld [vmem:[#allocation7 + $0x488] sm:$0xff]
        %v456 = vld [vmem:[#allocation7 + $0x490] sm:$0xff]
        %v457 = vld [vmem:[#allocation7 + $0x498] sm:$0xff]
        %v458 = vld [vmem:[#allocation7 + $0x4a0] sm:$0xff]
        %v459 = vld [vmem:[#allocation7 + $0x4a8] sm:$0xff]
        %v460 = vld [vmem:[#allocation7 + $0x4b0] sm:$0xff]
        %v461 = vld [vmem:[#allocation7 + $0x4b8] sm:$0xff]
        %v462 = vld [vmem:[#allocation7 + $0x4c0] sm:$0xff]
        %v463 = vld [vmem:[#allocation7 + $0x4c8] sm:$0xff]
        %v464 = vld [vmem:[#allocation7 + $0x4d0] sm:$0xff]
        %v465 = vld [vmem:[#allocation7 + $0x4d8] sm:$0xff]
        %v466 = vld [vmem:[#allocation7 + $0x4e0] sm:$0xff]
        %v467 = vld [vmem:[#allocation7 + $0x4e8] sm:$0xff]
        %v468 = vld [vmem:[#allocation7 + $0x4f0] sm:$0xff]
        %v469 = vld [vmem:[#allocation7 + $0x4f8] sm:$0xff]
        %v470 = vld [vmem:[#allocation7 + $0x500] sm:$0xff]
        %v471 = vld [vmem:[#allocation7 + $0x508] sm:$0xff]
        %v472 = vld [vmem:[#allocation7 + $0x510] sm:$0xff]
        %v473 = vld [vmem:[#allocation7 + $0x518] sm:$0xff]
        %v474 = vld [vmem:[#allocation7 + $0x520] sm:$0xff]
        %v475 = vld [vmem:[#allocation7 + $0x528] sm:$0xff]
        %v476 = vld [vmem:[#allocation7 + $0x530] sm:$0xff]
        %v477 = vld [vmem:[#allocation7 + $0x538] sm:$0xff]
        %v478 = vld [vmem:[#allocation7 + $0x540] sm:$0xff]
        %v479 = vld [vmem:[#allocation7 + $0x548] sm:$0xff]
        %v480 = vld [vmem:[#allocation7 + $0x550] sm:$0xff]
        %v481 = vld [vmem:[#allocation7 + $0x558] sm:$0xff]
        %v482 = vld [vmem:[#allocation7 + $0x560] sm:$0xff]
        %v483 = vld [vmem:[#allocation7 + $0x568] sm:$0xff]
        %v484 = vld [vmem:[#allocation7 + $0x570] sm:$0xff]
        %v485 = vld [vmem:[#allocation7 + $0x578] sm:$0xff]
        %v486 = vld [vmem:[#allocation7 + $0x580] sm:$0xff]
        %v487 = vld [vmem:[#allocation7 + $0x588] sm:$0xff]
        %v488 = vld [vmem:[#allocation7 + $0x590] sm:$0xff]
        %v489 = vld [vmem:[#allocation7 + $0x598] sm:$0xff]
        %v490 = vld [vmem:[#allocation7 + $0x5a0] sm:$0xff]
        %v491 = vld [vmem:[#allocation7 + $0x5a8] sm:$0xff]
        %v492 = vld [vmem:[#allocation7 + $0x5b0] sm:$0xff]
        %v493 = vld [vmem:[#allocation7 + $0x5b8] sm:$0xff]
        %v494 = vld [vmem:[#allocation7 + $0x5c0] sm:$0xff]
        %v495 = vld [vmem:[#allocation7 + $0x5c8] sm:$0xff]
        %v496 = vld [vmem:[#allocation7 + $0x5d0] sm:$0xff]
        %v497 = vld [vmem:[#allocation7 + $0x5d8] sm:$0xff]
        %v498 = vld [vmem:[#allocation7 + $0x5e0] sm:$0xff]
        %v499 = vld [vmem:[#allocation7 + $0x5e8] sm:$0xff]
        %v500 = vld [vmem:[#allocation7 + $0x5f0] sm:$0xff]
        %v501 = vld [vmem:[#allocation7 + $0x5f8] sm:$0xff]
        %v502 = vpack.c.bf16 %v322, %v310
        %v503 = vpack.c.bf16 %v323, %v311
        %v504 = vpack.c.bf16 %v324, %v312
        %v505 = vpack.c.bf16 %v325, %v313
        %v506 = vpack.c.bf16 %v326, %v314
        %v507 = vpack.c.bf16 %v327, %v315
        %v508 = vpack.c.bf16 %v328, %v316
        %v509 = vpack.c.bf16 %v329, %v317
        %v510 = vpack.c.bf16 %v330, %v318
        %v511 = vpack.c.bf16 %v331, %v319
        %v512 = vpack.c.bf16 %v332, %v320
        %v513 = vpack.c.bf16 %v333, %v321
        %v514 = vpack.c.bf16 %v346, %v334
        %v515 = vpack.c.bf16 %v347, %v335
        %v516 = vpack.c.bf16 %v348, %v336
        %v517 = vpack.c.bf16 %v349, %v337
        %v518 = vpack.c.bf16 %v350, %v338
        %v519 = vpack.c.bf16 %v351, %v339
        %v520 = vpack.c.bf16 %v352, %v340
        %v521 = vpack.c.bf16 %v353, %v341
        %v522 = vpack.c.bf16 %v354, %v342
        %v523 = vpack.c.bf16 %v355, %v343
        %v524 = vpack.c.bf16 %v356, %v344
        %v525 = vpack.c.bf16 %v357, %v345
        %v526 = vpack.c.bf16 %v370, %v358
        %v527 = vpack.c.bf16 %v371, %v359
        %v528 = vpack.c.bf16 %v372, %v360
        %v529 = vpack.c.bf16 %v373, %v361
        %v530 = vpack.c.bf16 %v374, %v362
        %v531 = vpack.c.bf16 %v375, %v363
        %v532 = vpack.c.bf16 %v376, %v364
        %v533 = vpack.c.bf16 %v377, %v365
        %v534 = vpack.c.bf16 %v378, %v366
        %v535 = vpack.c.bf16 %v379, %v367
        %v536 = vpack.c.bf16 %v380, %v368
        %v537 = vpack.c.bf16 %v381, %v369
        %v538 = vpack.c.bf16 %v394, %v382
        %v539 = vpack.c.bf16 %v395, %v383
        %v540 = vpack.c.bf16 %v396, %v384
        %v541 = vpack.c.bf16 %v397, %v385
        %v542 = vpack.c.bf16 %v398, %v386
        %v543 = vpack.c.bf16 %v399, %v387
        %v544 = vpack.c.bf16 %v400, %v388
        %v545 = vpack.c.bf16 %v401, %v389
        %v546 = vpack.c.bf16 %v402, %v390
        %v547 = vpack.c.bf16 %v403, %v391
        %v548 = vpack.c.bf16 %v404, %v392
        %v549 = vpack.c.bf16 %v405, %v393
        %v550 = vpack.c.bf16 %v418, %v406
        %v551 = vpack.c.bf16 %v419, %v407
        %v552 = vpack.c.bf16 %v420, %v408
        %v553 = vpack.c.bf16 %v421, %v409
        %v554 = vpack.c.bf16 %v422, %v410
        %v555 = vpack.c.bf16 %v423, %v411
        %v556 = vpack.c.bf16 %v424, %v412
        %v557 = vpack.c.bf16 %v425, %v413
        %v558 = vpack.c.bf16 %v426, %v414
        %v559 = vpack.c.bf16 %v427, %v415
        %v560 = vpack.c.bf16 %v428, %v416
        %v561 = vpack.c.bf16 %v429, %v417
        %v562 = vpack.c.bf16 %v442, %v430
        %v563 = vpack.c.bf16 %v443, %v431
        %v564 = vpack.c.bf16 %v444, %v432
        %v565 = vpack.c.bf16 %v445, %v433
        %v566 = vpack.c.bf16 %v446, %v434
        %v567 = vpack.c.bf16 %v447, %v435
        %v568 = vpack.c.bf16 %v448, %v436
        %v569 = vpack.c.bf16 %v449, %v437
        %v570 = vpack.c.bf16 %v450, %v438
        %v571 = vpack.c.bf16 %v451, %v439
        %v572 = vpack.c.bf16 %v452, %v440
        %v573 = vpack.c.bf16 %v453, %v441
        %v574 = vpack.c.bf16 %v466, %v454
        %v575 = vpack.c.bf16 %v467, %v455
        %v576 = vpack.c.bf16 %v468, %v456
        %v577 = vpack.c.bf16 %v469, %v457
        %v578 = vpack.c.bf16 %v470, %v458
        %v579 = vpack.c.bf16 %v471, %v459
        %v580 = vpack.c.bf16 %v472, %v460
        %v581 = vpack.c.bf16 %v473, %v461
        %v582 = vpack.c.bf16 %v474, %v462
        %v583 = vpack.c.bf16 %v475, %v463
        %v584 = vpack.c.bf16 %v476, %v464
        %v585 = vpack.c.bf16 %v477, %v465
        %v586 = vpack.c.bf16 %v490, %v478
        %v587 = vpack.c.bf16 %v491, %v479
        %v588 = vpack.c.bf16 %v492, %v480
        %v589 = vpack.c.bf16 %v493, %v481
        %v590 = vpack.c.bf16 %v494, %v482
        %v591 = vpack.c.bf16 %v495, %v483
        %v592 = vpack.c.bf16 %v496, %v484
        %v593 = vpack.c.bf16 %v497, %v485
        %v594 = vpack.c.bf16 %v498, %v486
        %v595 = vpack.c.bf16 %v499, %v487
        %v596 = vpack.c.bf16 %v500, %v488
        %v597 = vpack.c.bf16 %v501, %v489
        %v598 = vld [vmem:[#allocation9] sm:$0xff]
        %v599 = vld [vmem:[#allocation9 + $0x8] sm:$0xf]
        %v602 = vlaneseq
        %v603 = vshrl.u32 %v602, 7
        %v604 = vsub.s32 0, %v603
        %v605 = vrot.slane %v598, %v604
        %v606 = vlaneseq
        %v607 = vshrl.u32 %v606, 7
        %v608 = vsub.s32 1, %v607
        %v609 = vrot.slane %v598, %v608
        %v610 = vlaneseq
        %v611 = vshrl.u32 %v610, 7
        %v612 = vsub.s32 2, %v611
        %v613 = vrot.slane %v598, %v612
        %v614 = vlaneseq
        %v615 = vshrl.u32 %v614, 7
        %v616 = vsub.s32 3, %v615
        %v617 = vrot.slane %v598, %v616
        %v618 = vlaneseq
        %v619 = vshrl.u32 %v618, 7
        %v620 = vsub.s32 4, %v619
        %v621 = vrot.slane %v598, %v620
        %v622 = vlaneseq
        %v623 = vshrl.u32 %v622, 7
        %v624 = vsub.s32 5, %v623
        %v625 = vrot.slane %v598, %v624
        %v626 = vlaneseq
        %v627 = vshrl.u32 %v626, 7
        %v628 = vsub.s32 6, %v627
        %v629 = vrot.slane %v598, %v628
        %v630 = vlaneseq
        %v631 = vshrl.u32 %v630, 7
        %v632 = vsub.s32 7, %v631
        %v633 = vrot.slane %v598, %v632
        %v634 = vlaneseq
        %v635 = vshrl.u32 %v634, 7
        %v636 = vsub.s32 0, %v635
        %v637 = vrot.slane %v599, %v636
        %v638 = vlaneseq
        %v639 = vshrl.u32 %v638, 7
        %v640 = vsub.s32 1, %v639
        %v641 = vrot.slane %v599, %v640
        %v642 = vlaneseq
        %v643 = vshrl.u32 %v642, 7
        %v644 = vsub.s32 2, %v643
        %v645 = vrot.slane %v599, %v644
        %v646 = vlaneseq
        %v647 = vshrl.u32 %v646, 7
        %v648 = vsub.s32 3, %v647
        %v649 = vrot.slane %v599, %v648
        %662 = vmatprep.subr.bf16.mxu0 %v503
        %663 = vmatpush1.bf16.msra.mxu0 %v502
        %664 = vmatprep.subr.bf16.mxu0 %v515
        %665 = vmatpush1.bf16.msra.mxu0 %v514
        %666 = vmatprep.subr.bf16.mxu0 %v527
        %667 = vmatpush1.bf16.msra.mxu0 %v526
        %668 = vmatprep.subr.bf16.mxu0 %v539
        %669 = vmatpush1.bf16.msra.mxu0 %v538
        %670 = vmatprep.subr.bf16.mxu0 %v551
        %671 = vmatpush1.bf16.msra.mxu0 %v550
        %672 = vmatprep.subr.bf16.mxu0 %v563
        %673 = vmatpush1.bf16.msra.mxu0 %v562
        %674 = vmatprep.subr.bf16.mxu0 %v575
        %675 = vmatpush1.bf16.msra.mxu0 %v574
        %676 = vmatprep.subr.bf16.mxu0 %v587
        %677 = vmatpush1.bf16.msra.mxu0 %v586
        %678 = vmatprep.subr.bf16.mxu0 0
        %679 = vmatpush1.bf16.msra.mxu0 0
        %680 = vmatprep.subr.bf16.mxu0 0
        %681 = vmatpush1.bf16.msra.mxu0 0
        %682 = vmatprep.subr.bf16.mxu0 0
        %683 = vmatpush1.bf16.msra.mxu0 0
        %684 = vmatprep.subr.bf16.mxu0 0
        %685 = vmatpush1.bf16.msra.mxu0 0
        %686 = vmatprep.subr.bf16.mxu0 0
        %687 = vmatpush1.bf16.msra.mxu0 0
        %688 = vmatprep.subr.bf16.mxu0 0
        %689 = vmatpush1.bf16.msra.mxu0 0
        %690 = vmatprep.subr.bf16.mxu0 0
        %691 = vmatpush1.bf16.msra.mxu0 0
        %692 = vmatprep.subr.bf16.mxu0 0
        %693 = vmatpush1.bf16.msra.mxu0 0
        %694 = vmatprep.mubr.bf16.mxu0 0
        %695 = vmatmul.mubr.bf16.gmra.mrb[0].mxu0 %v302
        %v696 = vpop.f32.mrb[0].mxu0
        %v697 = vadd.f32 %v605, %v696
        %v698 = vpop.f32.mrb[0].mxu0
        %v699 = vadd.f32 %v609, %v698
        %v700 = vpop.f32.mrb[0].mxu0
        %v701 = vadd.f32 %v605, %v700
        %v702 = vpop.f32.mrb[0].mxu0
        %v703 = vadd.f32 %v609, %v702
        %704 = vmatprep.mubr.bf16.mxu0 0
        %705 = vmatmul.mubr.bf16.gmra.mrb[0].mxu0 %v303
        %v706 = vpop.f32.mrb[0].mxu0
        %v707 = vadd.f32 %v605, %v706
        %v708 = vpop.f32.mrb[0].mxu0
        %v709 = vadd.f32 %v609, %v708
        %v710 = vpop.f32.mrb[0].mxu0
        %v711 = vadd.f32 %v605, %v710
        %v712 = vpop.f32.mrb[0].mxu0
        %v713 = vadd.f32 %v609, %v712
        %714 = vmatprep.mubr.bf16.mxu0 0
        %715 = vmatmul.mubr.bf16.gmra.mrb[0].mxu0 %v304
        %v716 = vpop.f32.mrb[0].mxu0
        %v717 = vadd.f32 %v605, %v716
        %v718 = vpop.f32.mrb[0].mxu0
        %v719 = vadd.f32 %v609, %v718
        %v720 = vpop.f32.mrb[0].mxu0
        %v721 = vadd.f32 %v605, %v720
        %v722 = vpop.f32.mrb[0].mxu0
        %v723 = vadd.f32 %v609, %v722
        %724 = vmatprep.mubr.bf16.mxu0 0
        %725 = vmatmul.mubr.bf16.gmra.mrb[0].mxu0 %v305
        %v726 = vpop.f32.mrb[0].mxu0
        %v727 = vadd.f32 %v605, %v726
        %v728 = vpop.f32.mrb[0].mxu0
        %v729 = vadd.f32 %v609, %v728
        %v730 = vpop.f32.mrb[0].mxu0
        %v731 = vadd.f32 %v605, %v730
        %v732 = vpop.f32.mrb[0].mxu0
        %v733 = vadd.f32 %v609, %v732
        %734 = vmatprep.mubr.bf16.mxu0 0
        %735 = vmatmul.mubr.bf16.gmra.mrb[0].mxu0 %v306
        %v736 = vpop.f32.mrb[0].mxu0
        %v737 = vadd.f32 %v605, %v736
        %v738 = vpop.f32.mrb[0].mxu0
        %v739 = vadd.f32 %v609, %v738
        %v740 = vpop.f32.mrb[0].mxu0
        %v741 = vadd.f32 %v605, %v740
        %v742 = vpop.f32.mrb[0].mxu0
        %v743 = vadd.f32 %v609, %v742
        %744 = vmatprep.mubr.bf16.mxu0 0
        %745 = vmatmul.mubr.bf16.gmra.mrb[0].mxu0 %v307
        %v746 = vpop.f32.mrb[0].mxu0
        %v747 = vadd.f32 %v605, %v746
        %v748 = vpop.f32.mrb[0].mxu0
        %v749 = vadd.f32 %v609, %v748
        %v750 = vpop.f32.mrb[0].mxu0
        %v751 = vadd.f32 %v605, %v750
        %v752 = vpop.f32.mrb[0].mxu0
        %v753 = vadd.f32 %v609, %v752
        %754 = vmatprep.mubr.bf16.mxu0 0
        %755 = vmatmul.mubr.bf16.gmra.mrb[0].mxu0 %v308
        %v756 = vpop.f32.mrb[0].mxu0
        %v757 = vadd.f32 %v605, %v756
        %v758 = vpop.f32.mrb[0].mxu0
        %v759 = vadd.f32 %v609, %v758
        %v760 = vpop.f32.mrb[0].mxu0
        %v761 = vadd.f32 %v605, %v760
        %v762 = vpop.f32.mrb[0].mxu0
        %v763 = vadd.f32 %v609, %v762
        %764 = vmatprep.mubr.bf16.mxu0 0
        %765 = vmatmul.mubr.bf16.gmra.mrb[0].mxu0 %v309
        %v766 = vpop.f32.mrb[0].mxu0
        %v767 = vadd.f32 %v605, %v766
        %v768 = vpop.f32.mrb[0].mxu0
        %v769 = vadd.f32 %v609, %v768
        %v770 = vpop.f32.mrb[0].mxu0
        %v771 = vadd.f32 %v605, %v770
        %v772 = vpop.f32.mrb[0].mxu0
        %v773 = vadd.f32 %v609, %v772
        %774 = vdwg.mxu0
        %775 = vmatprep.subr.bf16.mxu0 %v505
        %776 = vmatpush1.bf16.msra.mxu0 %v504
        %777 = vmatprep.subr.bf16.mxu0 %v517
        %778 = vmatpush1.bf16.msra.mxu0 %v516
        %779 = vmatprep.subr.bf16.mxu0 %v529
        %780 = vmatpush1.bf16.msra.mxu0 %v528
        %781 = vmatprep.subr.bf16.mxu0 %v541
        %782 = vmatpush1.bf16.msra.mxu0 %v540
        %783 = vmatprep.subr.bf16.mxu0 %v553
        %784 = vmatpush1.bf16.msra.mxu0 %v552
        %785 = vmatprep.subr.bf16.mxu0 %v565
        %786 = vmatpush1.bf16.msra.mxu0 %v564
        %787 = vmatprep.subr.bf16.mxu0 %v577
        %788 = vmatpush1.bf16.msra.mxu0 %v576
        %789 = vmatprep.subr.bf16.mxu0 %v589
        %790 = vmatpush1.bf16.msra.mxu0 %v588
        %791 = vmatprep.subr.bf16.mxu0 0
        %792 = vmatpush1.bf16.msra.mxu0 0
        %793 = vmatprep.subr.bf16.mxu0 0
        %794 = vmatpush1.bf16.msra.mxu0 0
        %795 = vmatprep.subr.bf16.mxu0 0
        %796 = vmatpush1.bf16.msra.mxu0 0
        %797 = vmatprep.subr.bf16.mxu0 0
        %798 = vmatpush1.bf16.msra.mxu0 0
        %799 = vmatprep.subr.bf16.mxu0 0
        %800 = vmatpush1.bf16.msra.mxu0 0
        %801 = vmatprep.subr.bf16.mxu0 0
        %802 = vmatpush1.bf16.msra.mxu0 0
        %803 = vmatprep.subr.bf16.mxu0 0
        %804 = vmatpush1.bf16.msra.mxu0 0
        %805 = vmatprep.subr.bf16.mxu0 0
        %806 = vmatpush1.bf16.msra.mxu0 0
        %807 = vmatprep.mubr.bf16.mxu0 0
        %808 = vmatmul.mubr.bf16.gmra.mrb[0].mxu0 %v302
        %v809 = vpop.f32.mrb[0].mxu0
        %v810 = vadd.f32 %v613, %v809
        %v811 = vpop.f32.mrb[0].mxu0
        %v812 = vadd.f32 %v617, %v811
        %v813 = vpop.f32.mrb[0].mxu0
        %v814 = vadd.f32 %v613, %v813
        %v815 = vpop.f32.mrb[0].mxu0
        %v816 = vadd.f32 %v617, %v815
        %817 = vmatprep.mubr.bf16.mxu0 0
        %818 = vmatmul.mubr.bf16.gmra.mrb[0].mxu0 %v303
        %v819 = vpop.f32.mrb[0].mxu0
        %v820 = vadd.f32 %v613, %v819
        %v821 = vpop.f32.mrb[0].mxu0
        %v822 = vadd.f32 %v617, %v821
        %v823 = vpop.f32.mrb[0].mxu0
        %v824 = vadd.f32 %v613, %v823
        %v825 = vpop.f32.mrb[0].mxu0
        %v826 = vadd.f32 %v617, %v825
        %827 = vmatprep.mubr.bf16.mxu0 0
        %828 = vmatmul.mubr.bf16.gmra.mrb[0].mxu0 %v304
        %v829 = vpop.f32.mrb[0].mxu0
        %v830 = vadd.f32 %v613, %v829
        %v831 = vpop.f32.mrb[0].mxu0
        %v832 = vadd.f32 %v617, %v831
        %v833 = vpop.f32.mrb[0].mxu0
        %v834 = vadd.f32 %v613, %v833
        %v835 = vpop.f32.mrb[0].mxu0
        %v836 = vadd.f32 %v617, %v835
        %837 = vmatprep.mubr.bf16.mxu0 0
        %838 = vmatmul.mubr.bf16.gmra.mrb[0].mxu0 %v305
        %v839 = vpop.f32.mrb[0].mxu0
        %v840 = vadd.f32 %v613, %v839
        %v841 = vpop.f32.mrb[0].mxu0
        %v842 = vadd.f32 %v617, %v841
        %v843 = vpop.f32.mrb[0].mxu0
        %v844 = vadd.f32 %v613, %v843
        %v845 = vpop.f32.mrb[0].mxu0
        %v846 = vadd.f32 %v617, %v845
        %847 = vmatprep.mubr.bf16.mxu0 0
        %848 = vmatmul.mubr.bf16.gmra.mrb[0].mxu0 %v306
        %v849 = vpop.f32.mrb[0].mxu0
        %v850 = vadd.f32 %v613, %v849
        %v851 = vpop.f32.mrb[0].mxu0
        %v852 = vadd.f32 %v617, %v851
        %v853 = vpop.f32.mrb[0].mxu0
        %v854 = vadd.f32 %v613, %v853
        %v855 = vpop.f32.mrb[0].mxu0
        %v856 = vadd.f32 %v617, %v855
        %857 = vmatprep.mubr.bf16.mxu0 0
        %858 = vmatmul.mubr.bf16.gmra.mrb[0].mxu0 %v307
        %v859 = vpop.f32.mrb[0].mxu0
        %v860 = vadd.f32 %v613, %v859
        %v861 = vpop.f32.mrb[0].mxu0
        %v862 = vadd.f32 %v617, %v861
        %v863 = vpop.f32.mrb[0].mxu0
        %v864 = vadd.f32 %v613, %v863
        %v865 = vpop.f32.mrb[0].mxu0
        %v866 = vadd.f32 %v617, %v865
        %867 = vmatprep.mubr.bf16.mxu0 0
        %868 = vmatmul.mubr.bf16.gmra.mrb[0].mxu0 %v308
        %v869 = vpop.f32.mrb[0].mxu0
        %v870 = vadd.f32 %v613, %v869
        %v871 = vpop.f32.mrb[0].mxu0
        %v872 = vadd.f32 %v617, %v871
        %v873 = vpop.f32.mrb[0].mxu0
        %v874 = vadd.f32 %v613, %v873
        %v875 = vpop.f32.mrb[0].mxu0
        %v876 = vadd.f32 %v617, %v875
        %877 = vmatprep.mubr.bf16.mxu0 0
        %878 = vmatmul.mubr.bf16.gmra.mrb[0].mxu0 %v309
        %v879 = vpop.f32.mrb[0].mxu0
        %v880 = vadd.f32 %v613, %v879
        %v881 = vpop.f32.mrb[0].mxu0
        %v882 = vadd.f32 %v617, %v881
        %v883 = vpop.f32.mrb[0].mxu0
        %v884 = vadd.f32 %v613, %v883
        %v885 = vpop.f32.mrb[0].mxu0
        %v886 = vadd.f32 %v617, %v885
        %887 = vdwg.mxu0
        %888 = vmatprep.subr.bf16.mxu0 %v507
        %889 = vmatpush1.bf16.msra.mxu0 %v506
        %890 = vmatprep.subr.bf16.mxu0 %v519
        %891 = vmatpush1.bf16.msra.mxu0 %v518
        %892 = vmatprep.subr.bf16.mxu0 %v531
        %893 = vmatpush1.bf16.msra.mxu0 %v530
        %894 = vmatprep.subr.bf16.mxu0 %v543
        %895 = vmatpush1.bf16.msra.mxu0 %v542
        %896 = vmatprep.subr.bf16.mxu0 %v555
        %897 = vmatpush1.bf16.msra.mxu0 %v554
        %898 = vmatprep.subr.bf16.mxu0 %v567
        %899 = vmatpush1.bf16.msra.mxu0 %v566
        %900 = vmatprep.subr.bf16.mxu0 %v579
        %901 = vmatpush1.bf16.msra.mxu0 %v578
        %902 = vmatprep.subr.bf16.mxu0 %v591
        %903 = vmatpush1.bf16.msra.mxu0 %v590
        %904 = vmatprep.subr.bf16.mxu0 0
        %905 = vmatpush1.bf16.msra.mxu0 0
        %906 = vmatprep.subr.bf16.mxu0 0
        %907 = vmatpush1.bf16.msra.mxu0 0
        %908 = vmatprep.subr.bf16.mxu0 0
        %909 = vmatpush1.bf16.msra.mxu0 0
        %910 = vmatprep.subr.bf16.mxu0 0
        %911 = vmatpush1.bf16.msra.mxu0 0
        %912 = vmatprep.subr.bf16.mxu0 0
        %913 = vmatpush1.bf16.msra.mxu0 0
        %914 = vmatprep.subr.bf16.mxu0 0
        %915 = vmatpush1.bf16.msra.mxu0 0
        %916 = vmatprep.subr.bf16.mxu0 0
        %917 = vmatpush1.bf16.msra.mxu0 0
        %918 = vmatprep.subr.bf16.mxu0 0
        %919 = vmatpush1.bf16.msra.mxu0 0
        %920 = vmatprep.mubr.bf16.mxu0 0
        %921 = vmatmul.mubr.bf16.gmra.mrb[0].mxu0 %v302
        %v922 = vpop.f32.mrb[0].mxu0
        %v923 = vadd.f32 %v621, %v922
        %v924 = vpop.f32.mrb[0].mxu0
        %v925 = vadd.f32 %v625, %v924
        %v926 = vpop.f32.mrb[0].mxu0
        %v927 = vadd.f32 %v621, %v926
        %v928 = vpop.f32.mrb[0].mxu0
        %v929 = vadd.f32 %v625, %v928
        %930 = vmatprep.mubr.bf16.mxu0 0
        %931 = vmatmul.mubr.bf16.gmra.mrb[0].mxu0 %v303
        %v932 = vpop.f32.mrb[0].mxu0
        %v933 = vadd.f32 %v621, %v932
        %v934 = vpop.f32.mrb[0].mxu0
        %v935 = vadd.f32 %v625, %v934
        %v936 = vpop.f32.mrb[0].mxu0
        %v937 = vadd.f32 %v621, %v936
        %v938 = vpop.f32.mrb[0].mxu0
        %v939 = vadd.f32 %v625, %v938
        %940 = vmatprep.mubr.bf16.mxu0 0
        %941 = vmatmul.mubr.bf16.gmra.mrb[0].mxu0 %v304
        %v942 = vpop.f32.mrb[0].mxu0
        %v943 = vadd.f32 %v621, %v942
        %v944 = vpop.f32.mrb[0].mxu0
        %v945 = vadd.f32 %v625, %v944
        %v946 = vpop.f32.mrb[0].mxu0
        %v947 = vadd.f32 %v621, %v946
        %v948 = vpop.f32.mrb[0].mxu0
        %v949 = vadd.f32 %v625, %v948
        %950 = vmatprep.mubr.bf16.mxu0 0
        %951 = vmatmul.mubr.bf16.gmra.mrb[0].mxu0 %v305
        %v952 = vpop.f32.mrb[0].mxu0
        %v953 = vadd.f32 %v621, %v952
        %v954 = vpop.f32.mrb[0].mxu0
        %v955 = vadd.f32 %v625, %v954
        %v956 = vpop.f32.mrb[0].mxu0
        %v957 = vadd.f32 %v621, %v956
        %v958 = vpop.f32.mrb[0].mxu0
        %v959 = vadd.f32 %v625, %v958
        %960 = vmatprep.mubr.bf16.mxu0 0
        %961 = vmatmul.mubr.bf16.gmra.mrb[0].mxu0 %v306
        %v962 = vpop.f32.mrb[0].mxu0
        %v963 = vadd.f32 %v621, %v962
        %v964 = vpop.f32.mrb[0].mxu0
        %v965 = vadd.f32 %v625, %v964
        %v966 = vpop.f32.mrb[0].mxu0
        %v967 = vadd.f32 %v621, %v966
        %v968 = vpop.f32.mrb[0].mxu0
        %v969 = vadd.f32 %v625, %v968
        %970 = vmatprep.mubr.bf16.mxu0 0
        %971 = vmatmul.mubr.bf16.gmra.mrb[0].mxu0 %v307
        %v972 = vpop.f32.mrb[0].mxu0
        %v973 = vadd.f32 %v621, %v972
        %v974 = vpop.f32.mrb[0].mxu0
        %v975 = vadd.f32 %v625, %v974
        %v976 = vpop.f32.mrb[0].mxu0
        %v977 = vadd.f32 %v621, %v976
        %v978 = vpop.f32.mrb[0].mxu0
        %v979 = vadd.f32 %v625, %v978
        %980 = vmatprep.mubr.bf16.mxu0 0
        %981 = vmatmul.mubr.bf16.gmra.mrb[0].mxu0 %v308
        %v982 = vpop.f32.mrb[0].mxu0
        %v983 = vadd.f32 %v621, %v982
        %v984 = vpop.f32.mrb[0].mxu0
        %v985 = vadd.f32 %v625, %v984
        %v986 = vpop.f32.mrb[0].mxu0
        %v987 = vadd.f32 %v621, %v986
        %v988 = vpop.f32.mrb[0].mxu0
        %v989 = vadd.f32 %v625, %v988
        %990 = vmatprep.mubr.bf16.mxu0 0
        %991 = vmatmul.mubr.bf16.gmra.mrb[0].mxu0 %v309
        %v992 = vpop.f32.mrb[0].mxu0
        %v993 = vadd.f32 %v621, %v992
        %v994 = vpop.f32.mrb[0].mxu0
        %v995 = vadd.f32 %v625, %v994
        %v996 = vpop.f32.mrb[0].mxu0
        %v997 = vadd.f32 %v621, %v996
        %v998 = vpop.f32.mrb[0].mxu0
        %v999 = vadd.f32 %v625, %v998
        %1000 = vdwg.mxu0
        %1001 = vmatprep.subr.bf16.mxu0 %v509
        %1002 = vmatpush1.bf16.msra.mxu0 %v508
        %1003 = vmatprep.subr.bf16.mxu0 %v521
        %1004 = vmatpush1.bf16.msra.mxu0 %v520
        %1005 = vmatprep.subr.bf16.mxu0 %v533
        %1006 = vmatpush1.bf16.msra.mxu0 %v532
        %1007 = vmatprep.subr.bf16.mxu0 %v545
        %1008 = vmatpush1.bf16.msra.mxu0 %v544
        %1009 = vmatprep.subr.bf16.mxu0 %v557
        %1010 = vmatpush1.bf16.msra.mxu0 %v556
        %1011 = vmatprep.subr.bf16.mxu0 %v569
        %1012 = vmatpush1.bf16.msra.mxu0 %v568
        %1013 = vmatprep.subr.bf16.mxu0 %v581
        %1014 = vmatpush1.bf16.msra.mxu0 %v580
        %1015 = vmatprep.subr.bf16.mxu0 %v593
        %1016 = vmatpush1.bf16.msra.mxu0 %v592
        %1017 = vmatprep.subr.bf16.mxu0 0
        %1018 = vmatpush1.bf16.msra.mxu0 0
        %1019 = vmatprep.subr.bf16.mxu0 0
        %1020 = vmatpush1.bf16.msra.mxu0 0
        %1021 = vmatprep.subr.bf16.mxu0 0
        %1022 = vmatpush1.bf16.msra.mxu0 0
        %1023 = vmatprep.subr.bf16.mxu0 0
        %1024 = vmatpush1.bf16.msra.mxu0 0
        %1025 = vmatprep.subr.bf16.mxu0 0
        %1026 = vmatpush1.bf16.msra.mxu0 0
        %1027 = vmatprep.subr.bf16.mxu0 0
        %1028 = vmatpush1.bf16.msra.mxu0 0
        %1029 = vmatprep.subr.bf16.mxu0 0
        %1030 = vmatpush1.bf16.msra.mxu0 0
        %1031 = vmatprep.subr.bf16.mxu0 0
        %1032 = vmatpush1.bf16.msra.mxu0 0
        %1033 = vmatprep.mubr.bf16.mxu0 0
        %1034 = vmatmul.mubr.bf16.gmra.mrb[0].mxu0 %v302
        %v1035 = vpop.f32.mrb[0].mxu0
        %v1036 = vadd.f32 %v629, %v1035
        %v1037 = vpop.f32.mrb[0].mxu0
        %v1038 = vadd.f32 %v633, %v1037
        %v1039 = vpop.f32.mrb[0].mxu0
        %v1040 = vadd.f32 %v629, %v1039
        %v1041 = vpop.f32.mrb[0].mxu0
        %v1042 = vadd.f32 %v633, %v1041
        %1043 = vmatprep.mubr.bf16.mxu0 0
        %1044 = vmatmul.mubr.bf16.gmra.mrb[0].mxu0 %v303
        %v1045 = vpop.f32.mrb[0].mxu0
        %v1046 = vadd.f32 %v629, %v1045
        %v1047 = vpop.f32.mrb[0].mxu0
        %v1048 = vadd.f32 %v633, %v1047
        %v1049 = vpop.f32.mrb[0].mxu0
        %v1050 = vadd.f32 %v629, %v1049
        %v1051 = vpop.f32.mrb[0].mxu0
        %v1052 = vadd.f32 %v633, %v1051
        %1053 = vmatprep.mubr.bf16.mxu0 0
        %1054 = vmatmul.mubr.bf16.gmra.mrb[0].mxu0 %v304
        %v1055 = vpop.f32.mrb[0].mxu0
        %v1056 = vadd.f32 %v629, %v1055
        %v1057 = vpop.f32.mrb[0].mxu0
        %v1058 = vadd.f32 %v633, %v1057
        %v1059 = vpop.f32.mrb[0].mxu0
        %v1060 = vadd.f32 %v629, %v1059
        %v1061 = vpop.f32.mrb[0].mxu0
        %v1062 = vadd.f32 %v633, %v1061
        %1063 = vmatprep.mubr.bf16.mxu0 0
        %1064 = vmatmul.mubr.bf16.gmra.mrb[0].mxu0 %v305
        %v1065 = vpop.f32.mrb[0].mxu0
        %v1066 = vadd.f32 %v629, %v1065
        %v1067 = vpop.f32.mrb[0].mxu0
        %v1068 = vadd.f32 %v633, %v1067
        %v1069 = vpop.f32.mrb[0].mxu0
        %v1070 = vadd.f32 %v629, %v1069
        %v1071 = vpop.f32.mrb[0].mxu0
        %v1072 = vadd.f32 %v633, %v1071
        %1073 = vmatprep.mubr.bf16.mxu0 0
        %1074 = vmatmul.mubr.bf16.gmra.mrb[0].mxu0 %v306
        %v1075 = vpop.f32.mrb[0].mxu0
        %v1076 = vadd.f32 %v629, %v1075
        %v1077 = vpop.f32.mrb[0].mxu0
        %v1078 = vadd.f32 %v633, %v1077
        %v1079 = vpop.f32.mrb[0].mxu0
        %v1080 = vadd.f32 %v629, %v1079
        %v1081 = vpop.f32.mrb[0].mxu0
        %v1082 = vadd.f32 %v633, %v1081
        %1083 = vmatprep.mubr.bf16.mxu0 0
        %1084 = vmatmul.mubr.bf16.gmra.mrb[0].mxu0 %v307
        %v1085 = vpop.f32.mrb[0].mxu0
        %v1086 = vadd.f32 %v629, %v1085
        %v1087 = vpop.f32.mrb[0].mxu0
        %v1088 = vadd.f32 %v633, %v1087
        %v1089 = vpop.f32.mrb[0].mxu0
        %v1090 = vadd.f32 %v629, %v1089
        %v1091 = vpop.f32.mrb[0].mxu0
        %v1092 = vadd.f32 %v633, %v1091
        %1093 = vmatprep.mubr.bf16.mxu0 0
        %1094 = vmatmul.mubr.bf16.gmra.mrb[0].mxu0 %v308
        %v1095 = vpop.f32.mrb[0].mxu0
        %v1096 = vadd.f32 %v629, %v1095
        %v1097 = vpop.f32.mrb[0].mxu0
        %v1098 = vadd.f32 %v633, %v1097
        %v1099 = vpop.f32.mrb[0].mxu0
        %v1100 = vadd.f32 %v629, %v1099
        %v1101 = vpop.f32.mrb[0].mxu0
        %v1102 = vadd.f32 %v633, %v1101
        %1103 = vmatprep.mubr.bf16.mxu0 0
        %1104 = vmatmul.mubr.bf16.gmra.mrb[0].mxu0 %v309
        %v1105 = vpop.f32.mrb[0].mxu0
        %v1106 = vadd.f32 %v629, %v1105
        %v1107 = vpop.f32.mrb[0].mxu0
        %v1108 = vadd.f32 %v633, %v1107
        %v1109 = vpop.f32.mrb[0].mxu0
        %v1110 = vadd.f32 %v629, %v1109
        %v1111 = vpop.f32.mrb[0].mxu0
        %v1112 = vadd.f32 %v633, %v1111
        %1113 = vdwg.mxu0
        %1114 = vmatprep.subr.bf16.mxu0 %v511
        %1115 = vmatpush1.bf16.msra.mxu0 %v510
        %1116 = vmatprep.subr.bf16.mxu0 %v523
        %1117 = vmatpush1.bf16.msra.mxu0 %v522
        %1118 = vmatprep.subr.bf16.mxu0 %v535
        %1119 = vmatpush1.bf16.msra.mxu0 %v534
        %1120 = vmatprep.subr.bf16.mxu0 %v547
        %1121 = vmatpush1.bf16.msra.mxu0 %v546
        %1122 = vmatprep.subr.bf16.mxu0 %v559
        %1123 = vmatpush1.bf16.msra.mxu0 %v558
        %1124 = vmatprep.subr.bf16.mxu0 %v571
        %1125 = vmatpush1.bf16.msra.mxu0 %v570
        %1126 = vmatprep.subr.bf16.mxu0 %v583
        %1127 = vmatpush1.bf16.msra.mxu0 %v582
        %1128 = vmatprep.subr.bf16.mxu0 %v595
        %1129 = vmatpush1.bf16.msra.mxu0 %v594
        %1130 = vmatprep.subr.bf16.mxu0 0
        %1131 = vmatpush1.bf16.msra.mxu0 0
        %1132 = vmatprep.subr.bf16.mxu0 0
        %1133 = vmatpush1.bf16.msra.mxu0 0
        %1134 = vmatprep.subr.bf16.mxu0 0
        %1135 = vmatpush1.bf16.msra.mxu0 0
        %1136 = vmatprep.subr.bf16.mxu0 0
        %1137 = vmatpush1.bf16.msra.mxu0 0
        %1138 = vmatprep.subr.bf16.mxu0 0
        %1139 = vmatpush1.bf16.msra.mxu0 0
        %1140 = vmatprep.subr.bf16.mxu0 0
        %1141 = vmatpush1.bf16.msra.mxu0 0
        %1142 = vmatprep.subr.bf16.mxu0 0
        %1143 = vmatpush1.bf16.msra.mxu0 0
        %1144 = vmatprep.subr.bf16.mxu0 0
        %1145 = vmatpush1.bf16.msra.mxu0 0
        %1146 = vmatprep.mubr.bf16.mxu0 0
        %1147 = vmatmul.mubr.bf16.gmra.mrb[0].mxu0 %v302
        %v1148 = vpop.f32.mrb[0].mxu0
        %v1149 = vadd.f32 %v637, %v1148
        %v1150 = vpop.f32.mrb[0].mxu0
        %v1151 = vadd.f32 %v641, %v1150
        %v1152 = vpop.f32.mrb[0].mxu0
        %v1153 = vadd.f32 %v637, %v1152
        %v1154 = vpop.f32.mrb[0].mxu0
        %v1155 = vadd.f32 %v641, %v1154
        %1156 = vmatprep.mubr.bf16.mxu0 0
        %1157 = vmatmul.mubr.bf16.gmra.mrb[0].mxu0 %v303
        %v1158 = vpop.f32.mrb[0].mxu0
        %v1159 = vadd.f32 %v637, %v1158
        %v1160 = vpop.f32.mrb[0].mxu0
        %v1161 = vadd.f32 %v641, %v1160
        %v1162 = vpop.f32.mrb[0].mxu0
        %v1163 = vadd.f32 %v637, %v1162
        %v1164 = vpop.f32.mrb[0].mxu0
        %v1165 = vadd.f32 %v641, %v1164
        %1166 = vmatprep.mubr.bf16.mxu0 0
        %1167 = vmatmul.mubr.bf16.gmra.mrb[0].mxu0 %v304
        %v1168 = vpop.f32.mrb[0].mxu0
        %v1169 = vadd.f32 %v637, %v1168
        %v1170 = vpop.f32.mrb[0].mxu0
        %v1171 = vadd.f32 %v641, %v1170
        %v1172 = vpop.f32.mrb[0].mxu0
        %v1173 = vadd.f32 %v637, %v1172
        %v1174 = vpop.f32.mrb[0].mxu0
        %v1175 = vadd.f32 %v641, %v1174
        %1176 = vmatprep.mubr.bf16.mxu0 0
        %1177 = vmatmul.mubr.bf16.gmra.mrb[0].mxu0 %v305
        %v1178 = vpop.f32.mrb[0].mxu0
        %v1179 = vadd.f32 %v637, %v1178
        %v1180 = vpop.f32.mrb[0].mxu0
        %v1181 = vadd.f32 %v641, %v1180
        %v1182 = vpop.f32.mrb[0].mxu0
        %v1183 = vadd.f32 %v637, %v1182
        %v1184 = vpop.f32.mrb[0].mxu0
        %v1185 = vadd.f32 %v641, %v1184
        %1186 = vmatprep.mubr.bf16.mxu0 0
        %1187 = vmatmul.mubr.bf16.gmra.mrb[0].mxu0 %v306
        %v1188 = vpop.f32.mrb[0].mxu0
        %v1189 = vadd.f32 %v637, %v1188
        %v1190 = vpop.f32.mrb[0].mxu0
        %v1191 = vadd.f32 %v641, %v1190
        %v1192 = vpop.f32.mrb[0].mxu0
        %v1193 = vadd.f32 %v637, %v1192
        %v1194 = vpop.f32.mrb[0].mxu0
        %v1195 = vadd.f32 %v641, %v1194
        %1196 = vmatprep.mubr.bf16.mxu0 0
        %1197 = vmatmul.mubr.bf16.gmra.mrb[0].mxu0 %v307
        %v1198 = vpop.f32.mrb[0].mxu0
        %v1199 = vadd.f32 %v637, %v1198
        %v1200 = vpop.f32.mrb[0].mxu0
        %v1201 = vadd.f32 %v641, %v1200
        %v1202 = vpop.f32.mrb[0].mxu0
        %v1203 = vadd.f32 %v637, %v1202
        %v1204 = vpop.f32.mrb[0].mxu0
        %v1205 = vadd.f32 %v641, %v1204
        %1206 = vmatprep.mubr.bf16.mxu0 0
        %1207 = vmatmul.mubr.bf16.gmra.mrb[0].mxu0 %v308
        %v1208 = vpop.f32.mrb[0].mxu0
        %v1209 = vadd.f32 %v637, %v1208
        %v1210 = vpop.f32.mrb[0].mxu0
        %v1211 = vadd.f32 %v641, %v1210
        %v1212 = vpop.f32.mrb[0].mxu0
        %v1213 = vadd.f32 %v637, %v1212
        %v1214 = vpop.f32.mrb[0].mxu0
        %v1215 = vadd.f32 %v641, %v1214
        %1216 = vmatprep.mubr.bf16.mxu0 0
        %1217 = vmatmul.mubr.bf16.gmra.mrb[0].mxu0 %v309
        %v1218 = vpop.f32.mrb[0].mxu0
        %v1219 = vadd.f32 %v637, %v1218
        %v1220 = vpop.f32.mrb[0].mxu0
        %v1221 = vadd.f32 %v641, %v1220
        %v1222 = vpop.f32.mrb[0].mxu0
        %v1223 = vadd.f32 %v637, %v1222
        %v1224 = vpop.f32.mrb[0].mxu0
        %v1225 = vadd.f32 %v641, %v1224
        %1226 = vdwg.mxu0
        %1227 = vmatprep.subr.bf16.mxu0 %v513
        %1228 = vmatpush1.bf16.msra.mxu0 %v512
        %1229 = vmatprep.subr.bf16.mxu0 %v525
        %1230 = vmatpush1.bf16.msra.mxu0 %v524
        %1231 = vmatprep.subr.bf16.mxu0 %v537
        %1232 = vmatpush1.bf16.msra.mxu0 %v536
        %1233 = vmatprep.subr.bf16.mxu0 %v549
        %1234 = vmatpush1.bf16.msra.mxu0 %v548
        %1235 = vmatprep.subr.bf16.mxu0 %v561
        %1236 = vmatpush1.bf16.msra.mxu0 %v560
        %1237 = vmatprep.subr.bf16.mxu0 %v573
        %1238 = vmatpush1.bf16.msra.mxu0 %v572
        %1239 = vmatprep.subr.bf16.mxu0 %v585
        %1240 = vmatpush1.bf16.msra.mxu0 %v584
        %1241 = vmatprep.subr.bf16.mxu0 %v597
        %1242 = vmatpush1.bf16.msra.mxu0 %v596
        %1243 = vmatprep.subr.bf16.mxu0 0
        %1244 = vmatpush1.bf16.msra.mxu0 0
        %1245 = vmatprep.subr.bf16.mxu0 0
        %1246 = vmatpush1.bf16.msra.mxu0 0
        %1247 = vmatprep.subr.bf16.mxu0 0
        %1248 = vmatpush1.bf16.msra.mxu0 0
        %1249 = vmatprep.subr.bf16.mxu0 0
        %1250 = vmatpush1.bf16.msra.mxu0 0
        %1251 = vmatprep.subr.bf16.mxu0 0
        %1252 = vmatpush1.bf16.msra.mxu0 0
        %1253 = vmatprep.subr.bf16.mxu0 0
        %1254 = vmatpush1.bf16.msra.mxu0 0
        %1255 = vmatprep.subr.bf16.mxu0 0
        %1256 = vmatpush1.bf16.msra.mxu0 0
        %1257 = vmatprep.subr.bf16.mxu0 0
        %1258 = vmatpush1.bf16.msra.mxu0 0
        %1259 = vmatprep.mubr.bf16.mxu0 0
        %1260 = vmatmul.mubr.bf16.gmra.mrb[0].mxu0 %v302
        %v1261 = vpop.f32.mrb[0].mxu0
        %v1262 = vadd.f32 %v645, %v1261
        %v1263 = vpop.f32.mrb[0].mxu0
        %v1264 = vadd.f32 %v649, %v1263
        %v1265 = vpop.f32.mrb[0].mxu0
        %v1266 = vadd.f32 %v645, %v1265
        %v1267 = vpop.f32.mrb[0].mxu0
        %v1268 = vadd.f32 %v649, %v1267
        %1269 = vmatprep.mubr.bf16.mxu0 0
        %1270 = vmatmul.mubr.bf16.gmra.mrb[0].mxu0 %v303
        %v1271 = vpop.f32.mrb[0].mxu0
        %v1272 = vadd.f32 %v645, %v1271
        %v1273 = vpop.f32.mrb[0].mxu0
        %v1274 = vadd.f32 %v649, %v1273
        %v1275 = vpop.f32.mrb[0].mxu0
        %v1276 = vadd.f32 %v645, %v1275
        %v1277 = vpop.f32.mrb[0].mxu0
        %v1278 = vadd.f32 %v649, %v1277
        %1279 = vmatprep.mubr.bf16.mxu0 0
        %1280 = vmatmul.mubr.bf16.gmra.mrb[0].mxu0 %v304
        %v1281 = vpop.f32.mrb[0].mxu0
        %v1282 = vadd.f32 %v645, %v1281
        %v1283 = vpop.f32.mrb[0].mxu0
        %v1284 = vadd.f32 %v649, %v1283
        %v1285 = vpop.f32.mrb[0].mxu0
        %v1286 = vadd.f32 %v645, %v1285
        %v1287 = vpop.f32.mrb[0].mxu0
        %v1288 = vadd.f32 %v649, %v1287
        %1289 = vmatprep.mubr.bf16.mxu0 0
        %1290 = vmatmul.mubr.bf16.gmra.mrb[0].mxu0 %v305
        %v1291 = vpop.f32.mrb[0].mxu0
        %v1292 = vadd.f32 %v645, %v1291
        %v1293 = vpop.f32.mrb[0].mxu0
        %v1294 = vadd.f32 %v649, %v1293
        %v1295 = vpop.f32.mrb[0].mxu0
        %v1296 = vadd.f32 %v645, %v1295
        %v1297 = vpop.f32.mrb[0].mxu0
        %v1298 = vadd.f32 %v649, %v1297
        %1299 = vmatprep.mubr.bf16.mxu0 0
        %1300 = vmatmul.mubr.bf16.gmra.mrb[0].mxu0 %v306
        %v1301 = vpop.f32.mrb[0].mxu0
        %v1302 = vadd.f32 %v645, %v1301
        %v1303 = vpop.f32.mrb[0].mxu0
        %v1304 = vadd.f32 %v649, %v1303
        %v1305 = vpop.f32.mrb[0].mxu0
        %v1306 = vadd.f32 %v645, %v1305
        %v1307 = vpop.f32.mrb[0].mxu0
        %v1308 = vadd.f32 %v649, %v1307
        %1309 = vmatprep.mubr.bf16.mxu0 0
        %1310 = vmatmul.mubr.bf16.gmra.mrb[0].mxu0 %v307
        %v1311 = vpop.f32.mrb[0].mxu0
        %v1312 = vadd.f32 %v645, %v1311
        %v1313 = vpop.f32.mrb[0].mxu0
        %v1314 = vadd.f32 %v649, %v1313
        %v1315 = vpop.f32.mrb[0].mxu0
        %v1316 = vadd.f32 %v645, %v1315
        %v1317 = vpop.f32.mrb[0].mxu0
        %v1318 = vadd.f32 %v649, %v1317
        %1319 = vmatprep.mubr.bf16.mxu0 0
        %1320 = vmatmul.mubr.bf16.gmra.mrb[0].mxu0 %v308
        %v1321 = vpop.f32.mrb[0].mxu0
        %v1322 = vadd.f32 %v645, %v1321
        %v1323 = vpop.f32.mrb[0].mxu0
        %v1324 = vadd.f32 %v649, %v1323
        %v1325 = vpop.f32.mrb[0].mxu0
        %v1326 = vadd.f32 %v645, %v1325
        %v1327 = vpop.f32.mrb[0].mxu0
        %v1328 = vadd.f32 %v649, %v1327
        %1329 = vmatprep.mubr.bf16.mxu0 0
        %1330 = vmatmul.mubr.bf16.gmra.mrb[0].mxu0 %v309
        %v1331 = vpop.f32.mrb[0].mxu0
        %v1332 = vadd.f32 %v645, %v1331
        %v1333 = vpop.f32.mrb[0].mxu0
        %v1334 = vadd.f32 %v649, %v1333
        %v1335 = vpop.f32.mrb[0].mxu0
        %v1336 = vadd.f32 %v645, %v1335
        %v1337 = vpop.f32.mrb[0].mxu0
        %v1338 = vadd.f32 %v649, %v1337
        %1339 = vdwg.mxu0
        %v1340 = vpack.c.bf16 %v701, %v697
        %v1341 = vpack.c.bf16 %v703, %v699
        %v1342 = vpack.c.bf16 %v814, %v810
        %v1343 = vpack.c.bf16 %v816, %v812
        %v1344 = vpack.c.bf16 %v927, %v923
        %v1345 = vpack.c.bf16 %v929, %v925
        %v1346 = vpack.c.bf16 %v1040, %v1036
        %v1347 = vpack.c.bf16 %v1042, %v1038
        %v1348 = vpack.c.bf16 %v1153, %v1149
        %v1349 = vpack.c.bf16 %v1155, %v1151
        %v1350 = vpack.c.bf16 %v1266, %v1262
        %v1351 = vpack.c.bf16 %v1268, %v1264
        %v1352 = vpack.c.bf16 %v711, %v707
        %v1353 = vpack.c.bf16 %v713, %v709
        %v1354 = vpack.c.bf16 %v824, %v820
        %v1355 = vpack.c.bf16 %v826, %v822
        %v1356 = vpack.c.bf16 %v937, %v933
        %v1357 = vpack.c.bf16 %v939, %v935
        %v1358 = vpack.c.bf16 %v1050, %v1046
        %v1359 = vpack.c.bf16 %v1052, %v1048
        %v1360 = vpack.c.bf16 %v1163, %v1159
        %v1361 = vpack.c.bf16 %v1165, %v1161
        %v1362 = vpack.c.bf16 %v1276, %v1272
        %v1363 = vpack.c.bf16 %v1278, %v1274
        %v1364 = vpack.c.bf16 %v721, %v717
        %v1365 = vpack.c.bf16 %v723, %v719
        %v1366 = vpack.c.bf16 %v834, %v830
        %v1367 = vpack.c.bf16 %v836, %v832
        %v1368 = vpack.c.bf16 %v947, %v943
        %v1369 = vpack.c.bf16 %v949, %v945
        %v1370 = vpack.c.bf16 %v1060, %v1056
        %v1371 = vpack.c.bf16 %v1062, %v1058
        %v1372 = vpack.c.bf16 %v1173, %v1169
        %v1373 = vpack.c.bf16 %v1175, %v1171
        %v1374 = vpack.c.bf16 %v1286, %v1282
        %v1375 = vpack.c.bf16 %v1288, %v1284
        %v1376 = vpack.c.bf16 %v731, %v727
        %v1377 = vpack.c.bf16 %v733, %v729
        %v1378 = vpack.c.bf16 %v844, %v840
        %v1379 = vpack.c.bf16 %v846, %v842
        %v1380 = vpack.c.bf16 %v957, %v953
        %v1381 = vpack.c.bf16 %v959, %v955
        %v1382 = vpack.c.bf16 %v1070, %v1066
        %v1383 = vpack.c.bf16 %v1072, %v1068
        %v1384 = vpack.c.bf16 %v1183, %v1179
        %v1385 = vpack.c.bf16 %v1185, %v1181
        %v1386 = vpack.c.bf16 %v1296, %v1292
        %v1387 = vpack.c.bf16 %v1298, %v1294
        %v1388 = vpack.c.bf16 %v741, %v737
        %v1389 = vpack.c.bf16 %v743, %v739
        %v1390 = vpack.c.bf16 %v854, %v850
        %v1391 = vpack.c.bf16 %v856, %v852
        %v1392 = vpack.c.bf16 %v967, %v963
        %v1393 = vpack.c.bf16 %v969, %v965
        %v1394 = vpack.c.bf16 %v1080, %v1076
        %v1395 = vpack.c.bf16 %v1082, %v1078
        %v1396 = vpack.c.bf16 %v1193, %v1189
        %v1397 = vpack.c.bf16 %v1195, %v1191
        %v1398 = vpack.c.bf16 %v1306, %v1302
        %v1399 = vpack.c.bf16 %v1308, %v1304
        %v1400 = vpack.c.bf16 %v751, %v747
        %v1401 = vpack.c.bf16 %v753, %v749
        %v1402 = vpack.c.bf16 %v864, %v860
        %v1403 = vpack.c.bf16 %v866, %v862
        %v1404 = vpack.c.bf16 %v977, %v973
        %v1405 = vpack.c.bf16 %v979, %v975
        %v1406 = vpack.c.bf16 %v1090, %v1086
        %v1407 = vpack.c.bf16 %v1092, %v1088
        %v1408 = vpack.c.bf16 %v1203, %v1199
        %v1409 = vpack.c.bf16 %v1205, %v1201
        %v1410 = vpack.c.bf16 %v1316, %v1312
        %v1411 = vpack.c.bf16 %v1318, %v1314
        %v1412 = vpack.c.bf16 %v761, %v757
        %v1413 = vpack.c.bf16 %v763, %v759
        %v1414 = vpack.c.bf16 %v874, %v870
        %v1415 = vpack.c.bf16 %v876, %v872
        %v1416 = vpack.c.bf16 %v987, %v983
        %v1417 = vpack.c.bf16 %v989, %v985
        %v1418 = vpack.c.bf16 %v1100, %v1096
        %v1419 = vpack.c.bf16 %v1102, %v1098
        %v1420 = vpack.c.bf16 %v1213, %v1209
        %v1421 = vpack.c.bf16 %v1215, %v1211
        %v1422 = vpack.c.bf16 %v1326, %v1322
        %v1423 = vpack.c.bf16 %v1328, %v1324
        %v1424 = vpack.c.bf16 %v771, %v767
        %v1425 = vpack.c.bf16 %v773, %v769
        %v1426 = vpack.c.bf16 %v884, %v880
        %v1427 = vpack.c.bf16 %v886, %v882
        %v1428 = vpack.c.bf16 %v997, %v993
        %v1429 = vpack.c.bf16 %v999, %v995
        %v1430 = vpack.c.bf16 %v1110, %v1106
        %v1431 = vpack.c.bf16 %v1112, %v1108
        %v1432 = vpack.c.bf16 %v1223, %v1219
        %v1433 = vpack.c.bf16 %v1225, %v1221
        %v1434 = vpack.c.bf16 %v1336, %v1332
        %v1435 = vpack.c.bf16 %v1338, %v1334
        %1436 = vst [vmem:[#allocation2] sm:$0xff] %v1340
        %1437 = vst [vmem:[#allocation2 + $0x8] sm:$0xff] %v1341
        %1438 = vst [vmem:[#allocation2 + $0x10] sm:$0xff] %v1342
        %1439 = vst [vmem:[#allocation2 + $0x18] sm:$0xff] %v1343
        %1440 = vst [vmem:[#allocation2 + $0x20] sm:$0xff] %v1344
        %1441 = vst [vmem:[#allocation2 + $0x28] sm:$0xff] %v1345
        %1442 = vst [vmem:[#allocation2 + $0x30] sm:$0xff] %v1346
        %1443 = vst [vmem:[#allocation2 + $0x38] sm:$0xff] %v1347
        %1444 = vst [vmem:[#allocation2 + $0x40] sm:$0xff] %v1348
        %1445 = vst [vmem:[#allocation2 + $0x48] sm:$0xff] %v1349
        %1446 = vst [vmem:[#allocation2 + $0x50] sm:$0xff] %v1350
        %1447 = vst [vmem:[#allocation2 + $0x58] sm:$0xff] %v1351
        %1448 = vst [vmem:[#allocation2 + $0x60] sm:$0xff] %v1352
        %1449 = vst [vmem:[#allocation2 + $0x68] sm:$0xff] %v1353
        %1450 = vst [vmem:[#allocation2 + $0x70] sm:$0xff] %v1354
        %1451 = vst [vmem:[#allocation2 + $0x78] sm:$0xff] %v1355
        %1452 = vst [vmem:[#allocation2 + $0x80] sm:$0xff] %v1356
        %1453 = vst [vmem:[#allocation2 + $0x88] sm:$0xff] %v1357
        %1454 = vst [vmem:[#allocation2 + $0x90] sm:$0xff] %v1358
        %1455 = vst [vmem:[#allocation2 + $0x98] sm:$0xff] %v1359
        %1456 = vst [vmem:[#allocation2 + $0xa0] sm:$0xff] %v1360
        %1457 = vst [vmem:[#allocation2 + $0xa8] sm:$0xff] %v1361
        %1458 = vst [vmem:[#allocation2 + $0xb0] sm:$0xff] %v1362
        %1459 = vst [vmem:[#allocation2 + $0xb8] sm:$0xff] %v1363
        %1460 = vst [vmem:[#allocation2 + $0xc0] sm:$0xff] %v1364
        %1461 = vst [vmem:[#allocation2 + $0xc8] sm:$0xff] %v1365
        %1462 = vst [vmem:[#allocation2 + $0xd0] sm:$0xff] %v1366
        %1463 = vst [vmem:[#allocation2 + $0xd8] sm:$0xff] %v1367
        %1464 = vst [vmem:[#allocation2 + $0xe0] sm:$0xff] %v1368
        %1465 = vst [vmem:[#allocation2 + $0xe8] sm:$0xff] %v1369
        %1466 = vst [vmem:[#allocation2 + $0xf0] sm:$0xff] %v1370
        %1467 = vst [vmem:[#allocation2 + $0xf8] sm:$0xff] %v1371
        %1468 = vst [vmem:[#allocation2 + $0x100] sm:$0xff] %v1372
        %1469 = vst [vmem:[#allocation2 + $0x108] sm:$0xff] %v1373
        %1470 = vst [vmem:[#allocation2 + $0x110] sm:$0xff] %v1374
        %1471 = vst [vmem:[#allocation2 + $0x118] sm:$0xff] %v1375
        %1472 = vst [vmem:[#allocation2 + $0x120] sm:$0xff] %v1376
        %1473 = vst [vmem:[#allocation2 + $0x128] sm:$0xff] %v1377
        %1474 = vst [vmem:[#allocation2 + $0x130] sm:$0xff] %v1378
        %1475 = vst [vmem:[#allocation2 + $0x138] sm:$0xff] %v1379
        %1476 = vst [vmem:[#allocation2 + $0x140] sm:$0xff] %v1380
        %1477 = vst [vmem:[#allocation2 + $0x148] sm:$0xff] %v1381
        %1478 = vst [vmem:[#allocation2 + $0x150] sm:$0xff] %v1382
        %1479 = vst [vmem:[#allocation2 + $0x158] sm:$0xff] %v1383
        %1480 = vst [vmem:[#allocation2 + $0x160] sm:$0xff] %v1384
        %1481 = vst [vmem:[#allocation2 + $0x168] sm:$0xff] %v1385
        %1482 = vst [vmem:[#allocation2 + $0x170] sm:$0xff] %v1386
        %1483 = vst [vmem:[#allocation2 + $0x178] sm:$0xff] %v1387
        %1484 = vst [vmem:[#allocation2 + $0x180] sm:$0xff] %v1388
        %1485 = vst [vmem:[#allocation2 + $0x188] sm:$0xff] %v1389
        %1486 = vst [vmem:[#allocation2 + $0x190] sm:$0xff] %v1390
        %1487 = vst [vmem:[#allocation2 + $0x198] sm:$0xff] %v1391
        %1488 = vst [vmem:[#allocation2 + $0x1a0] sm:$0xff] %v1392
        %1489 = vst [vmem:[#allocation2 + $0x1a8] sm:$0xff] %v1393
        %1490 = vst [vmem:[#allocation2 + $0x1b0] sm:$0xff] %v1394
        %1491 = vst [vmem:[#allocation2 + $0x1b8] sm:$0xff] %v1395
        %1492 = vst [vmem:[#allocation2 + $0x1c0] sm:$0xff] %v1396
        %1493 = vst [vmem:[#allocation2 + $0x1c8] sm:$0xff] %v1397
        %1494 = vst [vmem:[#allocation2 + $0x1d0] sm:$0xff] %v1398
        %1495 = vst [vmem:[#allocation2 + $0x1d8] sm:$0xff] %v1399
        %1496 = vst [vmem:[#allocation2 + $0x1e0] sm:$0xff] %v1400
        %1497 = vst [vmem:[#allocation2 + $0x1e8] sm:$0xff] %v1401
        %1498 = vst [vmem:[#allocation2 + $0x1f0] sm:$0xff] %v1402
        %1499 = vst [vmem:[#allocation2 + $0x1f8] sm:$0xff] %v1403
        %1500 = vst [vmem:[#allocation2 + $0x200] sm:$0xff] %v1404
        %1501 = vst [vmem:[#allocation2 + $0x208] sm:$0xff] %v1405
        %1502 = vst [vmem:[#allocation2 + $0x210] sm:$0xff] %v1406
        %1503 = vst [vmem:[#allocation2 + $0x218] sm:$0xff] %v1407
        %1504 = vst [vmem:[#allocation2 + $0x220] sm:$0xff] %v1408
        %1505 = vst [vmem:[#allocation2 + $0x228] sm:$0xff] %v1409
        %1506 = vst [vmem:[#allocation2 + $0x230] sm:$0xff] %v1410
        %1507 = vst [vmem:[#allocation2 + $0x238] sm:$0xff] %v1411
        %1508 = vst [vmem:[#allocation2 + $0x240] sm:$0xff] %v1412
        %1509 = vst [vmem:[#allocation2 + $0x248] sm:$0xff] %v1413
        %1510 = vst [vmem:[#allocation2 + $0x250] sm:$0xff] %v1414
        %1511 = vst [vmem:[#allocation2 + $0x258] sm:$0xff] %v1415
        %1512 = vst [vmem:[#allocation2 + $0x260] sm:$0xff] %v1416
        %1513 = vst [vmem:[#allocation2 + $0x268] sm:$0xff] %v1417
        %1514 = vst [vmem:[#allocation2 + $0x270] sm:$0xff] %v1418
        %1515 = vst [vmem:[#allocation2 + $0x278] sm:$0xff] %v1419
        %1516 = vst [vmem:[#allocation2 + $0x280] sm:$0xff] %v1420
        %1517 = vst [vmem:[#allocation2 + $0x288] sm:$0xff] %v1421
        %1518 = vst [vmem:[#allocation2 + $0x290] sm:$0xff] %v1422
        %1519 = vst [vmem:[#allocation2 + $0x298] sm:$0xff] %v1423
        %1520 = vst [vmem:[#allocation2 + $0x2a0] sm:$0xff] %v1424
        %1521 = vst [vmem:[#allocation2 + $0x2a8] sm:$0xff] %v1425
        %1522 = vst [vmem:[#allocation2 + $0x2b0] sm:$0xff] %v1426
        %1523 = vst [vmem:[#allocation2 + $0x2b8] sm:$0xff] %v1427
        %1524 = vst [vmem:[#allocation2 + $0x2c0] sm:$0xff] %v1428
        %1525 = vst [vmem:[#allocation2 + $0x2c8] sm:$0xff] %v1429
        %1526 = vst [vmem:[#allocation2 + $0x2d0] sm:$0xff] %v1430
        %1527 = vst [vmem:[#allocation2 + $0x2d8] sm:$0xff] %v1431
        %1528 = vst [vmem:[#allocation2 + $0x2e0] sm:$0xff] %v1432
        %1529 = vst [vmem:[#allocation2 + $0x2e8] sm:$0xff] %v1433
        %1530 = vst [vmem:[#allocation2 + $0x2f0] sm:$0xff] %v1434
        %1531 = vst [vmem:[#allocation2 + $0x2f8] sm:$0xff] %v1435
        %v1532 = vld [vmem:[#allocation2] sm:$0xff]
        %v1533 = vld [vmem:[#allocation2 + $0x60] sm:$0xff]
        %v1534 = vld [vmem:[#allocation2 + $0xc0] sm:$0xff]
        %v1535 = vld [vmem:[#allocation2 + $0x120] sm:$0xff]
        %v1536 = vld [vmem:[#allocation2 + $0x180] sm:$0xff]
        %v1537 = vld [vmem:[#allocation2 + $0x1e0] sm:$0xff]
        %v1538 = vld [vmem:[#allocation2 + $0x240] sm:$0xff]
        %v1539 = vld [vmem:[#allocation2 + $0x2a0] sm:$0xff]
        %v1540 = vld [vmem:[#allocation2 + $0x20] sm:$0xff]
        %v1541 = vld [vmem:[#allocation2 + $0x80] sm:$0xff]
        %v1542 = vld [vmem:[#allocation2 + $0xe0] sm:$0xff]
        %v1543 = vld [vmem:[#allocation2 + $0x140] sm:$0xff]
        %v1544 = vld [vmem:[#allocation2 + $0x1a0] sm:$0xff]
        %v1545 = vld [vmem:[#allocation2 + $0x200] sm:$0xff]
        %v1546 = vld [vmem:[#allocation2 + $0x260] sm:$0xff]
        %v1547 = vld [vmem:[#allocation2 + $0x2c0] sm:$0xff]
        %v1548 = vld [vmem:[#allocation2 + $0x40] sm:$0xff]
        %v1549 = vld [vmem:[#allocation2 + $0xa0] sm:$0xff]
        %v1550 = vld [vmem:[#allocation2 + $0x100] sm:$0xff]
        %v1551 = vld [vmem:[#allocation2 + $0x160] sm:$0xff]
        %v1552 = vld [vmem:[#allocation2 + $0x1c0] sm:$0xff]
        %v1553 = vld [vmem:[#allocation2 + $0x220] sm:$0xff]
        %v1554 = vld [vmem:[#allocation2 + $0x280] sm:$0xff]
        %v1555 = vld [vmem:[#allocation2 + $0x2e0] sm:$0xff]
        %1556 = vmatprep.subr.bf16.mxu0 0
        %1557 = vmatpush1.bf16.xpose.msra.mxu0 %v1540
        %1558 = vmatprep.subr.bf16.mxu0 0
        %1559 = vmatpush1.bf16.xpose.msra.mxu0 %v1541
        %1560 = vmatprep.subr.bf16.mxu0 0
        %1561 = vmatpush1.bf16.xpose.msra.mxu0 %v1542
        %1562 = vmatprep.subr.bf16.mxu0 0
        %1563 = vmatpush1.bf16.xpose.msra.mxu0 %v1543
        %1564 = vmatprep.subr.bf16.mxu0 0
        %1565 = vmatpush1.bf16.xpose.msra.mxu0 %v1544
        %1566 = vmatprep.subr.bf16.mxu0 0
        %1567 = vmatpush1.bf16.xpose.msra.mxu0 %v1545
        %1568 = vmatprep.subr.bf16.mxu0 0
        %1569 = vmatpush1.bf16.xpose.msra.mxu0 %v1546
        %1570 = vmatprep.subr.bf16.mxu0 0
        %1571 = vmatpush1.bf16.xpose.msra.mxu0 %v1547
        %1572 = vmatprep.subr.bf16.mxu0 0
        %1573 = vmatpush1.bf16.xpose.msra.mxu0 0
        %1574 = vmatprep.subr.bf16.mxu0 0
        %1575 = vmatpush1.bf16.xpose.msra.mxu0 0
        %1576 = vmatprep.subr.bf16.mxu0 0
        %1577 = vmatpush1.bf16.xpose.msra.mxu0 0
        %1578 = vmatprep.subr.bf16.mxu0 0
        %1579 = vmatpush1.bf16.xpose.msra.mxu0 0
        %1580 = vmatprep.subr.bf16.mxu0 0
        %1581 = vmatpush1.bf16.xpose.msra.mxu0 0
        %1582 = vmatprep.subr.bf16.mxu0 0
        %1583 = vmatpush1.bf16.xpose.msra.mxu0 0
        %1584 = vmatprep.subr.bf16.mxu0 0
        %1585 = vmatpush1.bf16.xpose.msra.mxu0 0
        %1586 = vmatprep.subr.bf16.mxu0 0
        %1587 = vmatpush1.bf16.xpose.msra.mxu0 0
        %1588 = vmatprep.mubr.bf16.mxu0 0
        %1589 = vmatmul.mubr.bf16.gmra.mrb[0].mxu0 %v1532
        %v1590 = vpop.f32.mrb[0].mxu0
        %v1591 = vadd.f32 0.0, %v1590
        %v1592 = vpop.f32.mrb[0].mxu0
        %v1593 = vpop.f32.mrb[0].mxu0
        %v1594 = vadd.f32 0.0, %v1593
        %v1595 = vpop.f32.mrb[0].mxu0
        %1596 = vmatprep.mubr.bf16.mxu0 0
        %1597 = vmatmul.mubr.bf16.gmra.mrb[0].mxu0 %v1533
        %v1598 = vpop.f32.mrb[0].mxu0
        %v1599 = vadd.f32 0.0, %v1598
        %v1600 = vpop.f32.mrb[0].mxu0
        %v1601 = vpop.f32.mrb[0].mxu0
        %v1602 = vadd.f32 0.0, %v1601
        %v1603 = vpop.f32.mrb[0].mxu0
        %1604 = vmatprep.mubr.bf16.mxu0 0
        %1605 = vmatmul.mubr.bf16.gmra.mrb[0].mxu0 %v1534
        %v1606 = vpop.f32.mrb[0].mxu0
        %v1607 = vadd.f32 0.0, %v1606
        %v1608 = vpop.f32.mrb[0].mxu0
        %v1609 = vpop.f32.mrb[0].mxu0
        %v1610 = vadd.f32 0.0, %v1609
        %v1611 = vpop.f32.mrb[0].mxu0
        %1612 = vmatprep.mubr.bf16.mxu0 0
        %1613 = vmatmul.mubr.bf16.gmra.mrb[0].mxu0 %v1535
        %v1614 = vpop.f32.mrb[0].mxu0
        %v1615 = vadd.f32 0.0, %v1614
        %v1616 = vpop.f32.mrb[0].mxu0
        %v1617 = vpop.f32.mrb[0].mxu0
        %v1618 = vadd.f32 0.0, %v1617
        %v1619 = vpop.f32.mrb[0].mxu0
        %1620 = vmatprep.mubr.bf16.mxu0 0
        %1621 = vmatmul.mubr.bf16.gmra.mrb[0].mxu0 %v1536
        %v1622 = vpop.f32.mrb[0].mxu0
        %v1623 = vadd.f32 0.0, %v1622
        %v1624 = vpop.f32.mrb[0].mxu0
        %v1625 = vpop.f32.mrb[0].mxu0
        %v1626 = vadd.f32 0.0, %v1625
        %v1627 = vpop.f32.mrb[0].mxu0
        %1628 = vmatprep.mubr.bf16.mxu0 0
        %1629 = vmatmul.mubr.bf16.gmra.mrb[0].mxu0 %v1537
        %v1630 = vpop.f32.mrb[0].mxu0
        %v1631 = vadd.f32 0.0, %v1630
        %v1632 = vpop.f32.mrb[0].mxu0
        %v1633 = vpop.f32.mrb[0].mxu0
        %v1634 = vadd.f32 0.0, %v1633
        %v1635 = vpop.f32.mrb[0].mxu0
        %1636 = vmatprep.mubr.bf16.mxu0 0
        %1637 = vmatmul.mubr.bf16.gmra.mrb[0].mxu0 %v1538
        %v1638 = vpop.f32.mrb[0].mxu0
        %v1639 = vadd.f32 0.0, %v1638
        %v1640 = vpop.f32.mrb[0].mxu0
        %v1641 = vpop.f32.mrb[0].mxu0
        %v1642 = vadd.f32 0.0, %v1641
        %v1643 = vpop.f32.mrb[0].mxu0
        %1644 = vmatprep.mubr.bf16.mxu0 0
        %1645 = vmatmul.mubr.bf16.gmra.mrb[0].mxu0 %v1539
        %v1646 = vpop.f32.mrb[0].mxu0
        %v1647 = vadd.f32 0.0, %v1646
        %v1648 = vpop.f32.mrb[0].mxu0
        %v1649 = vpop.f32.mrb[0].mxu0
        %v1650 = vadd.f32 0.0, %v1649
        %v1651 = vpop.f32.mrb[0].mxu0
        %1652 = vdwg.mxu0
        %1653 = vmax.xlane.f32.xlu0 %v1591
        %v1654 = vpop.xlane.xlu0 %1653
        %1655 = vmax.xlane.f32.xlu0 %v1594
        %v1656 = vpop.xlane.xlu0 %1655
        %1657 = vmax.xlane.f32.xlu0 %v1599
        %v1658 = vpop.xlane.xlu0 %1657
        %1659 = vmax.xlane.f32.xlu0 %v1602
        %v1660 = vpop.xlane.xlu0 %1659
        %1661 = vmax.xlane.f32.xlu0 %v1607
        %v1662 = vpop.xlane.xlu0 %1661
        %1663 = vmax.xlane.f32.xlu0 %v1610
        %v1664 = vpop.xlane.xlu0 %1663
        %1665 = vmax.xlane.f32.xlu0 %v1615
        %v1666 = vpop.xlane.xlu0 %1665
        %1667 = vmax.xlane.f32.xlu0 %v1618
        %v1668 = vpop.xlane.xlu0 %1667
        %1669 = vmax.xlane.f32.xlu0 %v1623
        %v1670 = vpop.xlane.xlu0 %1669
        %1671 = vmax.xlane.f32.xlu0 %v1626
        %v1672 = vpop.xlane.xlu0 %1671
        %1673 = vmax.xlane.f32.xlu0 %v1631
        %v1674 = vpop.xlane.xlu0 %1673
        %1675 = vmax.xlane.f32.xlu0 %v1634
        %v1676 = vpop.xlane.xlu0 %1675
        %1677 = vmax.xlane.f32.xlu0 %v1639
        %v1678 = vpop.xlane.xlu0 %1677
        %1679 = vmax.xlane.f32.xlu0 %v1642
        %v1680 = vpop.xlane.xlu0 %1679
        %1681 = vmax.xlane.f32.xlu0 %v1647
        %v1682 = vpop.xlane.xlu0 %1681
        %1683 = vmax.xlane.f32.xlu0 %v1650
        %v1684 = vpop.xlane.xlu0 %1683
        %v1685 = vsub.f32 %v1591, %v1654
        %v1686 = vsub.f32 %v1594, %v1656
        %v1687 = vsub.f32 %v1599, %v1658
        %v1688 = vsub.f32 %v1602, %v1660
        %v1689 = vsub.f32 %v1607, %v1662
        %v1690 = vsub.f32 %v1610, %v1664
        %v1691 = vsub.f32 %v1615, %v1666
        %v1692 = vsub.f32 %v1618, %v1668
        %v1693 = vsub.f32 %v1623, %v1670
        %v1694 = vsub.f32 %v1626, %v1672
        %v1695 = vsub.f32 %v1631, %v1674
        %v1696 = vsub.f32 %v1634, %v1676
        %v1697 = vsub.f32 %v1639, %v1678
        %v1698 = vsub.f32 %v1642, %v1680
        %v1699 = vsub.f32 %v1647, %v1682
        %v1700 = vsub.f32 %v1650, %v1684
        %v1701 = vmul.f32 %v1685, 1.442695
        %v1702 = vpow.pop %v1701
        %v1703 = vmul.f32 %v1686, 1.442695
        %v1704 = vpow.pop %v1703
        %v1705 = vmul.f32 %v1687, 1.442695
        %v1706 = vpow.pop %v1705
        %v1707 = vmul.f32 %v1688, 1.442695
        %v1708 = vpow.pop %v1707
        %v1709 = vmul.f32 %v1689, 1.442695
        %v1710 = vpow.pop %v1709
        %v1711 = vmul.f32 %v1690, 1.442695
        %v1712 = vpow.pop %v1711
        %v1713 = vmul.f32 %v1691, 1.442695
        %v1714 = vpow.pop %v1713
        %v1715 = vmul.f32 %v1692, 1.442695
        %v1716 = vpow.pop %v1715
        %v1717 = vmul.f32 %v1693, 1.442695
        %v1718 = vpow.pop %v1717
        %v1719 = vmul.f32 %v1694, 1.442695
        %v1720 = vpow.pop %v1719
        %v1721 = vmul.f32 %v1695, 1.442695
        %v1722 = vpow.pop %v1721
        %v1723 = vmul.f32 %v1696, 1.442695
        %v1724 = vpow.pop %v1723
        %v1725 = vmul.f32 %v1697, 1.442695
        %v1726 = vpow.pop %v1725
        %v1727 = vmul.f32 %v1698, 1.442695
        %v1728 = vpow.pop %v1727
        %v1729 = vmul.f32 %v1699, 1.442695
        %v1730 = vpow.pop %v1729
        %v1731 = vmul.f32 %v1700, 1.442695
        %v1732 = vpow.pop %v1731
        %1733 = vadd.xlane.f32.xlu0 %v1702
        %v1734 = vpop.xlane.xlu0 %1733
        %1735 = vadd.xlane.f32.xlu0 %v1704
        %v1736 = vpop.xlane.xlu0 %1735
        %1737 = vadd.xlane.f32.xlu0 %v1706
        %v1738 = vpop.xlane.xlu0 %1737
        %1739 = vadd.xlane.f32.xlu0 %v1708
        %v1740 = vpop.xlane.xlu0 %1739
        %1741 = vadd.xlane.f32.xlu0 %v1710
        %v1742 = vpop.xlane.xlu0 %1741
        %1743 = vadd.xlane.f32.xlu0 %v1712
        %v1744 = vpop.xlane.xlu0 %1743
        %1745 = vadd.xlane.f32.xlu0 %v1714
        %v1746 = vpop.xlane.xlu0 %1745
        %1747 = vadd.xlane.f32.xlu0 %v1716
        %v1748 = vpop.xlane.xlu0 %1747
        %1749 = vadd.xlane.f32.xlu0 %v1718
        %v1750 = vpop.xlane.xlu0 %1749
        %1751 = vadd.xlane.f32.xlu0 %v1720
        %v1752 = vpop.xlane.xlu0 %1751
        %1753 = vadd.xlane.f32.xlu0 %v1722
        %v1754 = vpop.xlane.xlu0 %1753
        %1755 = vadd.xlane.f32.xlu0 %v1724
        %v1756 = vpop.xlane.xlu0 %1755
        %1757 = vadd.xlane.f32.xlu0 %v1726
        %v1758 = vpop.xlane.xlu0 %1757
        %1759 = vadd.xlane.f32.xlu0 %v1728
        %v1760 = vpop.xlane.xlu0 %1759
        %1761 = vadd.xlane.f32.xlu0 %v1730
        %v1762 = vpop.xlane.xlu0 %1761
        %1763 = vadd.xlane.f32.xlu0 %v1732
        %v1764 = vpop.xlane.xlu0 %1763
        %v1765 = vrcp.pop %v1734
        %v1766 = vrcp.pop %v1736
        %v1767 = vrcp.pop %v1738
        %v1768 = vrcp.pop %v1740
        %v1769 = vrcp.pop %v1742
        %v1770 = vrcp.pop %v1744
        %v1771 = vrcp.pop %v1746
        %v1772 = vrcp.pop %v1748
        %v1773 = vrcp.pop %v1750
        %v1774 = vrcp.pop %v1752
        %v1775 = vrcp.pop %v1754
        %v1776 = vrcp.pop %v1756
        %v1777 = vrcp.pop %v1758
        %v1778 = vrcp.pop %v1760
        %v1779 = vrcp.pop %v1762
        %v1780 = vrcp.pop %v1764
        %v1781 = vpack.c.bf16 %v1704, %v1702
        %v1782 = vpack.c.bf16 %v1708, %v1706
        %v1783 = vpack.c.bf16 %v1712, %v1710
        %v1784 = vpack.c.bf16 %v1716, %v1714
        %v1785 = vpack.c.bf16 %v1720, %v1718
        %v1786 = vpack.c.bf16 %v1724, %v1722
        %v1787 = vpack.c.bf16 %v1728, %v1726
        %v1788 = vpack.c.bf16 %v1732, %v1730
        %1789 = vmatprep.subr.bf16.mxu0 0
        %1790 = vmatpush1.bf16.msra.mxu0 %v1548
        %1791 = vmatprep.subr.bf16.mxu0 0
        %1792 = vmatpush1.bf16.msra.mxu0 %v1549
        %1793 = vmatprep.subr.bf16.mxu0 0
        %1794 = vmatpush1.bf16.msra.mxu0 %v1550
        %1795 = vmatprep.subr.bf16.mxu0 0
        %1796 = vmatpush1.bf16.msra.mxu0 %v1551
        %1797 = vmatprep.subr.bf16.mxu0 0
        %1798 = vmatpush1.bf16.msra.mxu0 %v1552
        %1799 = vmatprep.subr.bf16.mxu0 0
        %1800 = vmatpush1.bf16.msra.mxu0 %v1553
        %1801 = vmatprep.subr.bf16.mxu0 0
        %1802 = vmatpush1.bf16.msra.mxu0 %v1554
        %1803 = vmatprep.subr.bf16.mxu0 0
        %1804 = vmatpush1.bf16.msra.mxu0 %v1555
        %1805 = vmatprep.subr.bf16.mxu0 0
        %1806 = vmatpush1.bf16.msra.mxu0 0
        %1807 = vmatprep.subr.bf16.mxu0 0
        %1808 = vmatpush1.bf16.msra.mxu0 0
        %1809 = vmatprep.subr.bf16.mxu0 0
        %1810 = vmatpush1.bf16.msra.mxu0 0
        %1811 = vmatprep.subr.bf16.mxu0 0
        %1812 = vmatpush1.bf16.msra.mxu0 0
        %1813 = vmatprep.subr.bf16.mxu0 0
        %1814 = vmatpush1.bf16.msra.mxu0 0
        %1815 = vmatprep.subr.bf16.mxu0 0
        %1816 = vmatpush1.bf16.msra.mxu0 0
        %1817 = vmatprep.subr.bf16.mxu0 0
        %1818 = vmatpush1.bf16.msra.mxu0 0
        %1819 = vmatprep.subr.bf16.mxu0 0
        %1820 = vmatpush1.bf16.msra.mxu0 0
        %1821 = vmatprep.mubr.bf16.mxu0 0
        %1822 = vmatmul.mubr.bf16.gmra.mrb[0].mxu0 %v1781
        %v1823 = vpop.f32.mrb[0].mxu0
        %v1824 = vadd.f32 0.0, %v1823
        %v1825 = vpop.f32.mrb[0].mxu0
        %v1826 = vpop.f32.mrb[0].mxu0
        %v1827 = vadd.f32 0.0, %v1826
        %v1828 = vpop.f32.mrb[0].mxu0
        %1829 = vmatprep.mubr.bf16.mxu0 0
        %1830 = vmatmul.mubr.bf16.gmra.mrb[0].mxu0 %v1782
        %v1831 = vpop.f32.mrb[0].mxu0
        %v1832 = vadd.f32 0.0, %v1831
        %v1833 = vpop.f32.mrb[0].mxu0
        %v1834 = vpop.f32.mrb[0].mxu0
        %v1835 = vadd.f32 0.0, %v1834
        %v1836 = vpop.f32.mrb[0].mxu0
        %1837 = vmatprep.mubr.bf16.mxu0 0
        %1838 = vmatmul.mubr.bf16.gmra.mrb[0].mxu0 %v1783
        %v1839 = vpop.f32.mrb[0].mxu0
        %v1840 = vadd.f32 0.0, %v1839
        %v1841 = vpop.f32.mrb[0].mxu0
        %v1842 = vpop.f32.mrb[0].mxu0
        %v1843 = vadd.f32 0.0, %v1842
        %v1844 = vpop.f32.mrb[0].mxu0
        %1845 = vmatprep.mubr.bf16.mxu0 0
        %1846 = vmatmul.mubr.bf16.gmra.mrb[0].mxu0 %v1784
        %v1847 = vpop.f32.mrb[0].mxu0
        %v1848 = vadd.f32 0.0, %v1847
        %v1849 = vpop.f32.mrb[0].mxu0
        %v1850 = vpop.f32.mrb[0].mxu0
        %v1851 = vadd.f32 0.0, %v1850
        %v1852 = vpop.f32.mrb[0].mxu0
        %1853 = vmatprep.mubr.bf16.mxu0 0
        %1854 = vmatmul.mubr.bf16.gmra.mrb[0].mxu0 %v1785
        %v1855 = vpop.f32.mrb[0].mxu0
        %v1856 = vadd.f32 0.0, %v1855
        %v1857 = vpop.f32.mrb[0].mxu0
        %v1858 = vpop.f32.mrb[0].mxu0
        %v1859 = vadd.f32 0.0, %v1858
        %v1860 = vpop.f32.mrb[0].mxu0
        %1861 = vmatprep.mubr.bf16.mxu0 0
        %1862 = vmatmul.mubr.bf16.gmra.mrb[0].mxu0 %v1786
        %v1863 = vpop.f32.mrb[0].mxu0
        %v1864 = vadd.f32 0.0, %v1863
        %v1865 = vpop.f32.mrb[0].mxu0
        %v1866 = vpop.f32.mrb[0].mxu0
        %v1867 = vadd.f32 0.0, %v1866
        %v1868 = vpop.f32.mrb[0].mxu0
        %1869 = vmatprep.mubr.bf16.mxu0 0
        %1870 = vmatmul.mubr.bf16.gmra.mrb[0].mxu0 %v1787
        %v1871 = vpop.f32.mrb[0].mxu0
        %v1872 = vadd.f32 0.0, %v1871
        %v1873 = vpop.f32.mrb[0].mxu0
        %v1874 = vpop.f32.mrb[0].mxu0
        %v1875 = vadd.f32 0.0, %v1874
        %v1876 = vpop.f32.mrb[0].mxu0
        %1877 = vmatprep.mubr.bf16.mxu0 0
        %1878 = vmatmul.mubr.bf16.gmra.mrb[0].mxu0 %v1788
        %v1879 = vpop.f32.mrb[0].mxu0
        %v1880 = vadd.f32 0.0, %v1879
        %v1881 = vpop.f32.mrb[0].mxu0
        %v1882 = vpop.f32.mrb[0].mxu0
        %v1883 = vadd.f32 0.0, %v1882
        %v1884 = vpop.f32.mrb[0].mxu0
        %1885 = vdwg.mxu0
        %v1886 = vmul.f32 %v1824, %v1765
        %v1887 = vmul.f32 %v1827, %v1766
        %v1888 = vmul.f32 %v1832, %v1767
        %v1889 = vmul.f32 %v1835, %v1768
        %v1890 = vmul.f32 %v1840, %v1769
        %v1891 = vmul.f32 %v1843, %v1770
        %v1892 = vmul.f32 %v1848, %v1771
        %v1893 = vmul.f32 %v1851, %v1772
        %v1894 = vmul.f32 %v1856, %v1773
        %v1895 = vmul.f32 %v1859, %v1774
        %v1896 = vmul.f32 %v1864, %v1775
        %v1897 = vmul.f32 %v1867, %v1776
        %v1898 = vmul.f32 %v1872, %v1777
        %v1899 = vmul.f32 %v1875, %v1778
        %v1900 = vmul.f32 %v1880, %v1779
        %v1901 = vmul.f32 %v1883, %v1780
        %v1902 = vpack.c.bf16 %v1887, %v1886
        %v1903 = vpack.c.bf16 %v1889, %v1888
        %v1904 = vpack.c.bf16 %v1891, %v1890
        %v1905 = vpack.c.bf16 %v1893, %v1892
        %v1906 = vpack.c.bf16 %v1895, %v1894
        %v1907 = vpack.c.bf16 %v1897, %v1896
        %v1908 = vpack.c.bf16 %v1899, %v1898
        %v1909 = vpack.c.bf16 %v1901, %v1900
        %1910 = vst [vmem:[#allocation3] sm:$0xff] %v1902
        %1911 = vst [vmem:[#allocation3 + $0x20] sm:$0xff] %v1903
        %1912 = vst [vmem:[#allocation3 + $0x40] sm:$0xff] %v1904
        %1913 = vst [vmem:[#allocation3 + $0x60] sm:$0xff] %v1905
        %1914 = vst [vmem:[#allocation3 + $0x80] sm:$0xff] %v1906
        %1915 = vst [vmem:[#allocation3 + $0xa0] sm:$0xff] %v1907
        %1916 = vst [vmem:[#allocation3 + $0xc0] sm:$0xff] %v1908
        %1917 = vst [vmem:[#allocation3 + $0xe0] sm:$0xff] %v1909
        %v1918 = vld [vmem:[#allocation2 + $0x8] sm:$0xff]
        %v1919 = vld [vmem:[#allocation2 + $0x68] sm:$0xff]
        %v1920 = vld [vmem:[#allocation2 + $0xc8] sm:$0xff]
        %v1921 = vld [vmem:[#allocation2 + $0x128] sm:$0xff]
        %v1922 = vld [vmem:[#allocation2 + $0x188] sm:$0xff]
        %v1923 = vld [vmem:[#allocation2 + $0x1e8] sm:$0xff]
        %v1924 = vld [vmem:[#allocation2 + $0x248] sm:$0xff]
        %v1925 = vld [vmem:[#allocation2 + $0x2a8] sm:$0xff]
        %v1926 = vld [vmem:[#allocation2 + $0x28] sm:$0xff]
        %v1927 = vld [vmem:[#allocation2 + $0x88] sm:$0xff]
        %v1928 = vld [vmem:[#allocation2 + $0xe8] sm:$0xff]
        %v1929 = vld [vmem:[#allocation2 + $0x148] sm:$0xff]
        %v1930 = vld [vmem:[#allocation2 + $0x1a8] sm:$0xff]
        %v1931 = vld [vmem:[#allocation2 + $0x208] sm:$0xff]
        %v1932 = vld [vmem:[#allocation2 + $0x268] sm:$0xff]
        %v1933 = vld [vmem:[#allocation2 + $0x2c8] sm:$0xff]
        %v1934 = vld [vmem:[#allocation2 + $0x48] sm:$0xff]
        %v1935 = vld [vmem:[#allocation2 + $0xa8] sm:$0xff]
        %v1936 = vld [vmem:[#allocation2 + $0x108] sm:$0xff]
        %v1937 = vld [vmem:[#allocation2 + $0x168] sm:$0xff]
        %v1938 = vld [vmem:[#allocation2 + $0x1c8] sm:$0xff]
        %v1939 = vld [vmem:[#allocation2 + $0x228] sm:$0xff]
        %v1940 = vld [vmem:[#allocation2 + $0x288] sm:$0xff]
        %v1941 = vld [vmem:[#allocation2 + $0x2e8] sm:$0xff]
        %1942 = vmatprep.subr.bf16.mxu0 0
        %1943 = vmatpush1.bf16.xpose.msra.mxu0 %v1926
        %1944 = vmatprep.subr.bf16.mxu0 0
        %1945 = vmatpush1.bf16.xpose.msra.mxu0 %v1927
        %1946 = vmatprep.subr.bf16.mxu0 0
        %1947 = vmatpush1.bf16.xpose.msra.mxu0 %v1928
        %1948 = vmatprep.subr.bf16.mxu0 0
        %1949 = vmatpush1.bf16.xpose.msra.mxu0 %v1929
        %1950 = vmatprep.subr.bf16.mxu0 0
        %1951 = vmatpush1.bf16.xpose.msra.mxu0 %v1930
        %1952 = vmatprep.subr.bf16.mxu0 0
        %1953 = vmatpush1.bf16.xpose.msra.mxu0 %v1931
        %1954 = vmatprep.subr.bf16.mxu0 0
        %1955 = vmatpush1.bf16.xpose.msra.mxu0 %v1932
        %1956 = vmatprep.subr.bf16.mxu0 0
        %1957 = vmatpush1.bf16.xpose.msra.mxu0 %v1933
        %1958 = vmatprep.subr.bf16.mxu0 0
        %1959 = vmatpush1.bf16.xpose.msra.mxu0 0
        %1960 = vmatprep.subr.bf16.mxu0 0
        %1961 = vmatpush1.bf16.xpose.msra.mxu0 0
        %1962 = vmatprep.subr.bf16.mxu0 0
        %1963 = vmatpush1.bf16.xpose.msra.mxu0 0
        %1964 = vmatprep.subr.bf16.mxu0 0
        %1965 = vmatpush1.bf16.xpose.msra.mxu0 0
        %1966 = vmatprep.subr.bf16.mxu0 0
        %1967 = vmatpush1.bf16.xpose.msra.mxu0 0
        %1968 = vmatprep.subr.bf16.mxu0 0
        %1969 = vmatpush1.bf16.xpose.msra.mxu0 0
        %1970 = vmatprep.subr.bf16.mxu0 0
        %1971 = vmatpush1.bf16.xpose.msra.mxu0 0
        %1972 = vmatprep.subr.bf16.mxu0 0
        %1973 = vmatpush1.bf16.xpose.msra.mxu0 0
        %1974 = vmatprep.mubr.bf16.mxu0 0
        %1975 = vmatmul.mubr.bf16.gmra.mrb[0].mxu0 %v1918
        %v1976 = vpop.f32.mrb[0].mxu0
        %v1977 = vadd.f32 0.0, %v1976
        %v1978 = vpop.f32.mrb[0].mxu0
        %v1979 = vpop.f32.mrb[0].mxu0
        %v1980 = vadd.f32 0.0, %v1979
        %v1981 = vpop.f32.mrb[0].mxu0
        %1982 = vmatprep.mubr.bf16.mxu0 0
        %1983 = vmatmul.mubr.bf16.gmra.mrb[0].mxu0 %v1919
        %v1984 = vpop.f32.mrb[0].mxu0
        %v1985 = vadd.f32 0.0, %v1984
        %v1986 = vpop.f32.mrb[0].mxu0
        %v1987 = vpop.f32.mrb[0].mxu0
        %v1988 = vadd.f32 0.0, %v1987
        %v1989 = vpop.f32.mrb[0].mxu0
        %1990 = vmatprep.mubr.bf16.mxu0 0
        %1991 = vmatmul.mubr.bf16.gmra.mrb[0].mxu0 %v1920
        %v1992 = vpop.f32.mrb[0].mxu0
        %v1993 = vadd.f32 0.0, %v1992
        %v1994 = vpop.f32.mrb[0].mxu0
        %v1995 = vpop.f32.mrb[0].mxu0
        %v1996 = vadd.f32 0.0, %v1995
        %v1997 = vpop.f32.mrb[0].mxu0
        %1998 = vmatprep.mubr.bf16.mxu0 0
        %1999 = vmatmul.mubr.bf16.gmra.mrb[0].mxu0 %v1921
        %v2000 = vpop.f32.mrb[0].mxu0
        %v2001 = vadd.f32 0.0, %v2000
        %v2002 = vpop.f32.mrb[0].mxu0
        %v2003 = vpop.f32.mrb[0].mxu0
        %v2004 = vadd.f32 0.0, %v2003
        %v2005 = vpop.f32.mrb[0].mxu0
        %2006 = vmatprep.mubr.bf16.mxu0 0
        %2007 = vmatmul.mubr.bf16.gmra.mrb[0].mxu0 %v1922
        %v2008 = vpop.f32.mrb[0].mxu0
        %v2009 = vadd.f32 0.0, %v2008
        %v2010 = vpop.f32.mrb[0].mxu0
        %v2011 = vpop.f32.mrb[0].mxu0
        %v2012 = vadd.f32 0.0, %v2011
        %v2013 = vpop.f32.mrb[0].mxu0
        %2014 = vmatprep.mubr.bf16.mxu0 0
        %2015 = vmatmul.mubr.bf16.gmra.mrb[0].mxu0 %v1923
        %v2016 = vpop.f32.mrb[0].mxu0
        %v2017 = vadd.f32 0.0, %v2016
        %v2018 = vpop.f32.mrb[0].mxu0
        %v2019 = vpop.f32.mrb[0].mxu0
        %v2020 = vadd.f32 0.0, %v2019
        %v2021 = vpop.f32.mrb[0].mxu0
        %2022 = vmatprep.mubr.bf16.mxu0 0
        %2023 = vmatmul.mubr.bf16.gmra.mrb[0].mxu0 %v1924
        %v2024 = vpop.f32.mrb[0].mxu0
        %v2025 = vadd.f32 0.0, %v2024
        %v2026 = vpop.f32.mrb[0].mxu0
        %v2027 = vpop.f32.mrb[0].mxu0
        %v2028 = vadd.f32 0.0, %v2027
        %v2029 = vpop.f32.mrb[0].mxu0
        %2030 = vmatprep.mubr.bf16.mxu0 0
        %2031 = vmatmul.mubr.bf16.gmra.mrb[0].mxu0 %v1925
        %v2032 = vpop.f32.mrb[0].mxu0
        %v2033 = vadd.f32 0.0, %v2032
        %v2034 = vpop.f32.mrb[0].mxu0
        %v2035 = vpop.f32.mrb[0].mxu0
        %v2036 = vadd.f32 0.0, %v2035
        %v2037 = vpop.f32.mrb[0].mxu0
        %2038 = vdwg.mxu0
        %2039 = vmax.xlane.f32.xlu0 %v1977
        %v2040 = vpop.xlane.xlu0 %2039
        %2041 = vmax.xlane.f32.xlu0 %v1980
        %v2042 = vpop.xlane.xlu0 %2041
        %2043 = vmax.xlane.f32.xlu0 %v1985
        %v2044 = vpop.xlane.xlu0 %2043
        %2045 = vmax.xlane.f32.xlu0 %v1988
        %v2046 = vpop.xlane.xlu0 %2045
        %2047 = vmax.xlane.f32.xlu0 %v1993
        %v2048 = vpop.xlane.xlu0 %2047
        %2049 = vmax.xlane.f32.xlu0 %v1996
        %v2050 = vpop.xlane.xlu0 %2049
        %2051 = vmax.xlane.f32.xlu0 %v2001
        %v2052 = vpop.xlane.xlu0 %2051
        %2053 = vmax.xlane.f32.xlu0 %v2004
        %v2054 = vpop.xlane.xlu0 %2053
        %2055 = vmax.xlane.f32.xlu0 %v2009
        %v2056 = vpop.xlane.xlu0 %2055
        %2057 = vmax.xlane.f32.xlu0 %v2012
        %v2058 = vpop.xlane.xlu0 %2057
        %2059 = vmax.xlane.f32.xlu0 %v2017
        %v2060 = vpop.xlane.xlu0 %2059
        %2061 = vmax.xlane.f32.xlu0 %v2020
        %v2062 = vpop.xlane.xlu0 %2061
        %2063 = vmax.xlane.f32.xlu0 %v2025
        %v2064 = vpop.xlane.xlu0 %2063
        %2065 = vmax.xlane.f32.xlu0 %v2028
        %v2066 = vpop.xlane.xlu0 %2065
        %2067 = vmax.xlane.f32.xlu0 %v2033
        %v2068 = vpop.xlane.xlu0 %2067
        %2069 = vmax.xlane.f32.xlu0 %v2036
        %v2070 = vpop.xlane.xlu0 %2069
        %v2071 = vsub.f32 %v1977, %v2040
        %v2072 = vsub.f32 %v1980, %v2042
        %v2073 = vsub.f32 %v1985, %v2044
        %v2074 = vsub.f32 %v1988, %v2046
        %v2075 = vsub.f32 %v1993, %v2048
        %v2076 = vsub.f32 %v1996, %v2050
        %v2077 = vsub.f32 %v2001, %v2052
        %v2078 = vsub.f32 %v2004, %v2054
        %v2079 = vsub.f32 %v2009, %v2056
        %v2080 = vsub.f32 %v2012, %v2058
        %v2081 = vsub.f32 %v2017, %v2060
        %v2082 = vsub.f32 %v2020, %v2062
        %v2083 = vsub.f32 %v2025, %v2064
        %v2084 = vsub.f32 %v2028, %v2066
        %v2085 = vsub.f32 %v2033, %v2068
        %v2086 = vsub.f32 %v2036, %v2070
        %v2087 = vmul.f32 %v2071, 1.442695
        %v2088 = vpow.pop %v2087
        %v2089 = vmul.f32 %v2072, 1.442695
        %v2090 = vpow.pop %v2089
        %v2091 = vmul.f32 %v2073, 1.442695
        %v2092 = vpow.pop %v2091
        %v2093 = vmul.f32 %v2074, 1.442695
        %v2094 = vpow.pop %v2093
        %v2095 = vmul.f32 %v2075, 1.442695
        %v2096 = vpow.pop %v2095
        %v2097 = vmul.f32 %v2076, 1.442695
        %v2098 = vpow.pop %v2097
        %v2099 = vmul.f32 %v2077, 1.442695
        %v2100 = vpow.pop %v2099
        %v2101 = vmul.f32 %v2078, 1.442695
        %v2102 = vpow.pop %v2101
        %v2103 = vmul.f32 %v2079, 1.442695
        %v2104 = vpow.pop %v2103
        %v2105 = vmul.f32 %v2080, 1.442695
        %v2106 = vpow.pop %v2105
        %v2107 = vmul.f32 %v2081, 1.442695
        %v2108 = vpow.pop %v2107
        %v2109 = vmul.f32 %v2082, 1.442695
        %v2110 = vpow.pop %v2109
        %v2111 = vmul.f32 %v2083, 1.442695
        %v2112 = vpow.pop %v2111
        %v2113 = vmul.f32 %v2084, 1.442695
        %v2114 = vpow.pop %v2113
        %v2115 = vmul.f32 %v2085, 1.442695
        %v2116 = vpow.pop %v2115
        %v2117 = vmul.f32 %v2086, 1.442695
        %v2118 = vpow.pop %v2117
        %2119 = vadd.xlane.f32.xlu0 %v2088
        %v2120 = vpop.xlane.xlu0 %2119
        %2121 = vadd.xlane.f32.xlu0 %v2090
        %v2122 = vpop.xlane.xlu0 %2121
        %2123 = vadd.xlane.f32.xlu0 %v2092
        %v2124 = vpop.xlane.xlu0 %2123
        %2125 = vadd.xlane.f32.xlu0 %v2094
        %v2126 = vpop.xlane.xlu0 %2125
        %2127 = vadd.xlane.f32.xlu0 %v2096
        %v2128 = vpop.xlane.xlu0 %2127
        %2129 = vadd.xlane.f32.xlu0 %v2098
        %v2130 = vpop.xlane.xlu0 %2129
        %2131 = vadd.xlane.f32.xlu0 %v2100
        %v2132 = vpop.xlane.xlu0 %2131
        %2133 = vadd.xlane.f32.xlu0 %v2102
        %v2134 = vpop.xlane.xlu0 %2133
        %2135 = vadd.xlane.f32.xlu0 %v2104
        %v2136 = vpop.xlane.xlu0 %2135
        %2137 = vadd.xlane.f32.xlu0 %v2106
        %v2138 = vpop.xlane.xlu0 %2137
        %2139 = vadd.xlane.f32.xlu0 %v2108
        %v2140 = vpop.xlane.xlu0 %2139
        %2141 = vadd.xlane.f32.xlu0 %v2110
        %v2142 = vpop.xlane.xlu0 %2141
        %2143 = vadd.xlane.f32.xlu0 %v2112
        %v2144 = vpop.xlane.xlu0 %2143
        %2145 = vadd.xlane.f32.xlu0 %v2114
        %v2146 = vpop.xlane.xlu0 %2145
        %2147 = vadd.xlane.f32.xlu0 %v2116
        %v2148 = vpop.xlane.xlu0 %2147
        %2149 = vadd.xlane.f32.xlu0 %v2118
        %v2150 = vpop.xlane.xlu0 %2149
        %v2151 = vrcp.pop %v2120
        %v2152 = vrcp.pop %v2122
        %v2153 = vrcp.pop %v2124
        %v2154 = vrcp.pop %v2126
        %v2155 = vrcp.pop %v2128
        %v2156 = vrcp.pop %v2130
        %v2157 = vrcp.pop %v2132
        %v2158 = vrcp.pop %v2134
        %v2159 = vrcp.pop %v2136
        %v2160 = vrcp.pop %v2138
        %v2161 = vrcp.pop %v2140
        %v2162 = vrcp.pop %v2142
        %v2163 = vrcp.pop %v2144
        %v2164 = vrcp.pop %v2146
        %v2165 = vrcp.pop %v2148
        %v2166 = vrcp.pop %v2150
        %v2167 = vpack.c.bf16 %v2090, %v2088
        %v2168 = vpack.c.bf16 %v2094, %v2092
        %v2169 = vpack.c.bf16 %v2098, %v2096
        %v2170 = vpack.c.bf16 %v2102, %v2100
        %v2171 = vpack.c.bf16 %v2106, %v2104
        %v2172 = vpack.c.bf16 %v2110, %v2108
        %v2173 = vpack.c.bf16 %v2114, %v2112
        %v2174 = vpack.c.bf16 %v2118, %v2116
        %2175 = vmatprep.subr.bf16.mxu0 0
        %2176 = vmatpush1.bf16.msra.mxu0 %v1934
        %2177 = vmatprep.subr.bf16.mxu0 0
        %2178 = vmatpush1.bf16.msra.mxu0 %v1935
        %2179 = vmatprep.subr.bf16.mxu0 0
        %2180 = vmatpush1.bf16.msra.mxu0 %v1936
        %2181 = vmatprep.subr.bf16.mxu0 0
        %2182 = vmatpush1.bf16.msra.mxu0 %v1937
        %2183 = vmatprep.subr.bf16.mxu0 0
        %2184 = vmatpush1.bf16.msra.mxu0 %v1938
        %2185 = vmatprep.subr.bf16.mxu0 0
        %2186 = vmatpush1.bf16.msra.mxu0 %v1939
        %2187 = vmatprep.subr.bf16.mxu0 0
        %2188 = vmatpush1.bf16.msra.mxu0 %v1940
        %2189 = vmatprep.subr.bf16.mxu0 0
        %2190 = vmatpush1.bf16.msra.mxu0 %v1941
        %2191 = vmatprep.subr.bf16.mxu0 0
        %2192 = vmatpush1.bf16.msra.mxu0 0
        %2193 = vmatprep.subr.bf16.mxu0 0
        %2194 = vmatpush1.bf16.msra.mxu0 0
        %2195 = vmatprep.subr.bf16.mxu0 0
        %2196 = vmatpush1.bf16.msra.mxu0 0
        %2197 = vmatprep.subr.bf16.mxu0 0
        %2198 = vmatpush1.bf16.msra.mxu0 0
        %2199 = vmatprep.subr.bf16.mxu0 0
        %2200 = vmatpush1.bf16.msra.mxu0 0
        %2201 = vmatprep.subr.bf16.mxu0 0
        %2202 = vmatpush1.bf16.msra.mxu0 0
        %2203 = vmatprep.subr.bf16.mxu0 0
        %2204 = vmatpush1.bf16.msra.mxu0 0
        %2205 = vmatprep.subr.bf16.mxu0 0
        %2206 = vmatpush1.bf16.msra.mxu0 0
        %2207 = vmatprep.mubr.bf16.mxu0 0
        %2208 = vmatmul.mubr.bf16.gmra.mrb[0].mxu0 %v2167
        %v2209 = vpop.f32.mrb[0].mxu0
        %v2210 = vadd.f32 0.0, %v2209
        %v2211 = vpop.f32.mrb[0].mxu0
        %v2212 = vpop.f32.mrb[0].mxu0
        %v2213 = vadd.f32 0.0, %v2212
        %v2214 = vpop.f32.mrb[0].mxu0
        %2215 = vmatprep.mubr.bf16.mxu0 0
        %2216 = vmatmul.mubr.bf16.gmra.mrb[0].mxu0 %v2168
        %v2217 = vpop.f32.mrb[0].mxu0
        %v2218 = vadd.f32 0.0, %v2217
        %v2219 = vpop.f32.mrb[0].mxu0
        %v2220 = vpop.f32.mrb[0].mxu0
        %v2221 = vadd.f32 0.0, %v2220
        %v2222 = vpop.f32.mrb[0].mxu0
        %2223 = vmatprep.mubr.bf16.mxu0 0
        %2224 = vmatmul.mubr.bf16.gmra.mrb[0].mxu0 %v2169
        %v2225 = vpop.f32.mrb[0].mxu0
        %v2226 = vadd.f32 0.0, %v2225
        %v2227 = vpop.f32.mrb[0].mxu0
        %v2228 = vpop.f32.mrb[0].mxu0
        %v2229 = vadd.f32 0.0, %v2228
        %v2230 = vpop.f32.mrb[0].mxu0
        %2231 = vmatprep.mubr.bf16.mxu0 0
        %2232 = vmatmul.mubr.bf16.gmra.mrb[0].mxu0 %v2170
        %v2233 = vpop.f32.mrb[0].mxu0
        %v2234 = vadd.f32 0.0, %v2233
        %v2235 = vpop.f32.mrb[0].mxu0
        %v2236 = vpop.f32.mrb[0].mxu0
        %v2237 = vadd.f32 0.0, %v2236
        %v2238 = vpop.f32.mrb[0].mxu0
        %2239 = vmatprep.mubr.bf16.mxu0 0
        %2240 = vmatmul.mubr.bf16.gmra.mrb[0].mxu0 %v2171
        %v2241 = vpop.f32.mrb[0].mxu0
        %v2242 = vadd.f32 0.0, %v2241
        %v2243 = vpop.f32.mrb[0].mxu0
        %v2244 = vpop.f32.mrb[0].mxu0
        %v2245 = vadd.f32 0.0, %v2244
        %v2246 = vpop.f32.mrb[0].mxu0
        %2247 = vmatprep.mubr.bf16.mxu0 0
        %2248 = vmatmul.mubr.bf16.gmra.mrb[0].mxu0 %v2172
        %v2249 = vpop.f32.mrb[0].mxu0
        %v2250 = vadd.f32 0.0, %v2249
        %v2251 = vpop.f32.mrb[0].mxu0
        %v2252 = vpop.f32.mrb[0].mxu0
        %v2253 = vadd.f32 0.0, %v2252
        %v2254 = vpop.f32.mrb[0].mxu0
        %2255 = vmatprep.mubr.bf16.mxu0 0
        %2256 = vmatmul.mubr.bf16.gmra.mrb[0].mxu0 %v2173
        %v2257 = vpop.f32.mrb[0].mxu0
        %v2258 = vadd.f32 0.0, %v2257
        %v2259 = vpop.f32.mrb[0].mxu0
        %v2260 = vpop.f32.mrb[0].mxu0
        %v2261 = vadd.f32 0.0, %v2260
        %v2262 = vpop.f32.mrb[0].mxu0
        %2263 = vmatprep.mubr.bf16.mxu0 0
        %2264 = vmatmul.mubr.bf16.gmra.mrb[0].mxu0 %v2174
        %v2265 = vpop.f32.mrb[0].mxu0
        %v2266 = vadd.f32 0.0, %v2265
        %v2267 = vpop.f32.mrb[0].mxu0
        %v2268 = vpop.f32.mrb[0].mxu0
        %v2269 = vadd.f32 0.0, %v2268
        %v2270 = vpop.f32.mrb[0].mxu0
        %2271 = vdwg.mxu0
        %v2272 = vmul.f32 %v2210, %v2151
        %v2273 = vmul.f32 %v2213, %v2152
        %v2274 = vmul.f32 %v2218, %v2153
        %v2275 = vmul.f32 %v2221, %v2154
        %v2276 = vmul.f32 %v2226, %v2155
        %v2277 = vmul.f32 %v2229, %v2156
        %v2278 = vmul.f32 %v2234, %v2157
        %v2279 = vmul.f32 %v2237, %v2158
        %v2280 = vmul.f32 %v2242, %v2159
        %v2281 = vmul.f32 %v2245, %v2160
        %v2282 = vmul.f32 %v2250, %v2161
        %v2283 = vmul.f32 %v2253, %v2162
        %v2284 = vmul.f32 %v2258, %v2163
        %v2285 = vmul.f32 %v2261, %v2164
        %v2286 = vmul.f32 %v2266, %v2165
        %v2287 = vmul.f32 %v2269, %v2166
        %v2288 = vpack.c.bf16 %v2273, %v2272
        %v2289 = vpack.c.bf16 %v2275, %v2274
        %v2290 = vpack.c.bf16 %v2277, %v2276
        %v2291 = vpack.c.bf16 %v2279, %v2278
        %v2292 = vpack.c.bf16 %v2281, %v2280
        %v2293 = vpack.c.bf16 %v2283, %v2282
        %v2294 = vpack.c.bf16 %v2285, %v2284
        %v2295 = vpack.c.bf16 %v2287, %v2286
        %2296 = vst [vmem:[#allocation3 + $0x8] sm:$0xff] %v2288
        %2297 = vst [vmem:[#allocation3 + $0x28] sm:$0xff] %v2289
        %2298 = vst [vmem:[#allocation3 + $0x48] sm:$0xff] %v2290
        %2299 = vst [vmem:[#allocation3 + $0x68] sm:$0xff] %v2291
        %2300 = vst [vmem:[#allocation3 + $0x88] sm:$0xff] %v2292
        %2301 = vst [vmem:[#allocation3 + $0xa8] sm:$0xff] %v2293
        %2302 = vst [vmem:[#allocation3 + $0xc8] sm:$0xff] %v2294
        %2303 = vst [vmem:[#allocation3 + $0xe8] sm:$0xff] %v2295
        %v2304 = vld [vmem:[#allocation2 + $0x10] sm:$0xff]
        %v2305 = vld [vmem:[#allocation2 + $0x70] sm:$0xff]
        %v2306 = vld [vmem:[#allocation2 + $0xd0] sm:$0xff]
        %v2307 = vld [vmem:[#allocation2 + $0x130] sm:$0xff]
        %v2308 = vld [vmem:[#allocation2 + $0x190] sm:$0xff]
        %v2309 = vld [vmem:[#allocation2 + $0x1f0] sm:$0xff]
        %v2310 = vld [vmem:[#allocation2 + $0x250] sm:$0xff]
        %v2311 = vld [vmem:[#allocation2 + $0x2b0] sm:$0xff]
        %v2312 = vld [vmem:[#allocation2 + $0x30] sm:$0xff]
        %v2313 = vld [vmem:[#allocation2 + $0x90] sm:$0xff]
        %v2314 = vld [vmem:[#allocation2 + $0xf0] sm:$0xff]
        %v2315 = vld [vmem:[#allocation2 + $0x150] sm:$0xff]
        %v2316 = vld [vmem:[#allocation2 + $0x1b0] sm:$0xff]
        %v2317 = vld [vmem:[#allocation2 + $0x210] sm:$0xff]
        %v2318 = vld [vmem:[#allocation2 + $0x270] sm:$0xff]
        %v2319 = vld [vmem:[#allocation2 + $0x2d0] sm:$0xff]
        %v2320 = vld [vmem:[#allocation2 + $0x50] sm:$0xff]
        %v2321 = vld [vmem:[#allocation2 + $0xb0] sm:$0xff]
        %v2322 = vld [vmem:[#allocation2 + $0x110] sm:$0xff]
        %v2323 = vld [vmem:[#allocation2 + $0x170] sm:$0xff]
        %v2324 = vld [vmem:[#allocation2 + $0x1d0] sm:$0xff]
        %v2325 = vld [vmem:[#allocation2 + $0x230] sm:$0xff]
        %v2326 = vld [vmem:[#allocation2 + $0x290] sm:$0xff]
        %v2327 = vld [vmem:[#allocation2 + $0x2f0] sm:$0xff]
        %2328 = vmatprep.subr.bf16.mxu0 0
        %2329 = vmatpush1.bf16.xpose.msra.mxu0 %v2312
        %2330 = vmatprep.subr.bf16.mxu0 0
        %2331 = vmatpush1.bf16.xpose.msra.mxu0 %v2313
        %2332 = vmatprep.subr.bf16.mxu0 0
        %2333 = vmatpush1.bf16.xpose.msra.mxu0 %v2314
        %2334 = vmatprep.subr.bf16.mxu0 0
        %2335 = vmatpush1.bf16.xpose.msra.mxu0 %v2315
        %2336 = vmatprep.subr.bf16.mxu0 0
        %2337 = vmatpush1.bf16.xpose.msra.mxu0 %v2316
        %2338 = vmatprep.subr.bf16.mxu0 0
        %2339 = vmatpush1.bf16.xpose.msra.mxu0 %v2317
        %2340 = vmatprep.subr.bf16.mxu0 0
        %2341 = vmatpush1.bf16.xpose.msra.mxu0 %v2318
        %2342 = vmatprep.subr.bf16.mxu0 0
        %2343 = vmatpush1.bf16.xpose.msra.mxu0 %v2319
        %2344 = vmatprep.subr.bf16.mxu0 0
        %2345 = vmatpush1.bf16.xpose.msra.mxu0 0
        %2346 = vmatprep.subr.bf16.mxu0 0
        %2347 = vmatpush1.bf16.xpose.msra.mxu0 0
        %2348 = vmatprep.subr.bf16.mxu0 0
        %2349 = vmatpush1.bf16.xpose.msra.mxu0 0
        %2350 = vmatprep.subr.bf16.mxu0 0
        %2351 = vmatpush1.bf16.xpose.msra.mxu0 0
        %2352 = vmatprep.subr.bf16.mxu0 0
        %2353 = vmatpush1.bf16.xpose.msra.mxu0 0
        %2354 = vmatprep.subr.bf16.mxu0 0
        %2355 = vmatpush1.bf16.xpose.msra.mxu0 0
        %2356 = vmatprep.subr.bf16.mxu0 0
        %2357 = vmatpush1.bf16.xpose.msra.mxu0 0
        %2358 = vmatprep.subr.bf16.mxu0 0
        %2359 = vmatpush1.bf16.xpose.msra.mxu0 0
        %2360 = vmatprep.mubr.bf16.mxu0 0
        %2361 = vmatmul.mubr.bf16.gmra.mrb[0].mxu0 %v2304
        %v2362 = vpop.f32.mrb[0].mxu0
        %v2363 = vadd.f32 0.0, %v2362
        %v2364 = vpop.f32.mrb[0].mxu0
        %v2365 = vpop.f32.mrb[0].mxu0
        %v2366 = vadd.f32 0.0, %v2365
        %v2367 = vpop.f32.mrb[0].mxu0
        %2368 = vmatprep.mubr.bf16.mxu0 0
        %2369 = vmatmul.mubr.bf16.gmra.mrb[0].mxu0 %v2305
        %v2370 = vpop.f32.mrb[0].mxu0
        %v2371 = vadd.f32 0.0, %v2370
        %v2372 = vpop.f32.mrb[0].mxu0
        %v2373 = vpop.f32.mrb[0].mxu0
        %v2374 = vadd.f32 0.0, %v2373
        %v2375 = vpop.f32.mrb[0].mxu0
        %2376 = vmatprep.mubr.bf16.mxu0 0
        %2377 = vmatmul.mubr.bf16.gmra.mrb[0].mxu0 %v2306
        %v2378 = vpop.f32.mrb[0].mxu0
        %v2379 = vadd.f32 0.0, %v2378
        %v2380 = vpop.f32.mrb[0].mxu0
        %v2381 = vpop.f32.mrb[0].mxu0
        %v2382 = vadd.f32 0.0, %v2381
        %v2383 = vpop.f32.mrb[0].mxu0
        %2384 = vmatprep.mubr.bf16.mxu0 0
        %2385 = vmatmul.mubr.bf16.gmra.mrb[0].mxu0 %v2307
        %v2386 = vpop.f32.mrb[0].mxu0
        %v2387 = vadd.f32 0.0, %v2386
        %v2388 = vpop.f32.mrb[0].mxu0
        %v2389 = vpop.f32.mrb[0].mxu0
        %v2390 = vadd.f32 0.0, %v2389
        %v2391 = vpop.f32.mrb[0].mxu0
        %2392 = vmatprep.mubr.bf16.mxu0 0
        %2393 = vmatmul.mubr.bf16.gmra.mrb[0].mxu0 %v2308
        %v2394 = vpop.f32.mrb[0].mxu0
        %v2395 = vadd.f32 0.0, %v2394
        %v2396 = vpop.f32.mrb[0].mxu0
        %v2397 = vpop.f32.mrb[0].mxu0
        %v2398 = vadd.f32 0.0, %v2397
        %v2399 = vpop.f32.mrb[0].mxu0
        %2400 = vmatprep.mubr.bf16.mxu0 0
        %2401 = vmatmul.mubr.bf16.gmra.mrb[0].mxu0 %v2309
        %v2402 = vpop.f32.mrb[0].mxu0
        %v2403 = vadd.f32 0.0, %v2402
        %v2404 = vpop.f32.mrb[0].mxu0
        %v2405 = vpop.f32.mrb[0].mxu0
        %v2406 = vadd.f32 0.0, %v2405
        %v2407 = vpop.f32.mrb[0].mxu0
        %2408 = vmatprep.mubr.bf16.mxu0 0
        %2409 = vmatmul.mubr.bf16.gmra.mrb[0].mxu0 %v2310
        %v2410 = vpop.f32.mrb[0].mxu0
        %v2411 = vadd.f32 0.0, %v2410
        %v2412 = vpop.f32.mrb[0].mxu0
        %v2413 = vpop.f32.mrb[0].mxu0
        %v2414 = vadd.f32 0.0, %v2413
        %v2415 = vpop.f32.mrb[0].mxu0
        %2416 = vmatprep.mubr.bf16.mxu0 0
        %2417 = vmatmul.mubr.bf16.gmra.mrb[0].mxu0 %v2311
        %v2418 = vpop.f32.mrb[0].mxu0
        %v2419 = vadd.f32 0.0, %v2418
        %v2420 = vpop.f32.mrb[0].mxu0
        %v2421 = vpop.f32.mrb[0].mxu0
        %v2422 = vadd.f32 0.0, %v2421
        %v2423 = vpop.f32.mrb[0].mxu0
        %2424 = vdwg.mxu0
        %2425 = vmax.xlane.f32.xlu0 %v2363
        %v2426 = vpop.xlane.xlu0 %2425
        %2427 = vmax.xlane.f32.xlu0 %v2366
        %v2428 = vpop.xlane.xlu0 %2427
        %2429 = vmax.xlane.f32.xlu0 %v2371
        %v2430 = vpop.xlane.xlu0 %2429
        %2431 = vmax.xlane.f32.xlu0 %v2374
        %v2432 = vpop.xlane.xlu0 %2431
        %2433 = vmax.xlane.f32.xlu0 %v2379
        %v2434 = vpop.xlane.xlu0 %2433
        %2435 = vmax.xlane.f32.xlu0 %v2382
        %v2436 = vpop.xlane.xlu0 %2435
        %2437 = vmax.xlane.f32.xlu0 %v2387
        %v2438 = vpop.xlane.xlu0 %2437
        %2439 = vmax.xlane.f32.xlu0 %v2390
        %v2440 = vpop.xlane.xlu0 %2439
        %2441 = vmax.xlane.f32.xlu0 %v2395
        %v2442 = vpop.xlane.xlu0 %2441
        %2443 = vmax.xlane.f32.xlu0 %v2398
        %v2444 = vpop.xlane.xlu0 %2443
        %2445 = vmax.xlane.f32.xlu0 %v2403
        %v2446 = vpop.xlane.xlu0 %2445
        %2447 = vmax.xlane.f32.xlu0 %v2406
        %v2448 = vpop.xlane.xlu0 %2447
        %2449 = vmax.xlane.f32.xlu0 %v2411
        %v2450 = vpop.xlane.xlu0 %2449
        %2451 = vmax.xlane.f32.xlu0 %v2414
        %v2452 = vpop.xlane.xlu0 %2451
        %2453 = vmax.xlane.f32.xlu0 %v2419
        %v2454 = vpop.xlane.xlu0 %2453
        %2455 = vmax.xlane.f32.xlu0 %v2422
        %v2456 = vpop.xlane.xlu0 %2455
        %v2457 = vsub.f32 %v2363, %v2426
        %v2458 = vsub.f32 %v2366, %v2428
        %v2459 = vsub.f32 %v2371, %v2430
        %v2460 = vsub.f32 %v2374, %v2432
        %v2461 = vsub.f32 %v2379, %v2434
        %v2462 = vsub.f32 %v2382, %v2436
        %v2463 = vsub.f32 %v2387, %v2438
        %v2464 = vsub.f32 %v2390, %v2440
        %v2465 = vsub.f32 %v2395, %v2442
        %v2466 = vsub.f32 %v2398, %v2444
        %v2467 = vsub.f32 %v2403, %v2446
        %v2468 = vsub.f32 %v2406, %v2448
        %v2469 = vsub.f32 %v2411, %v2450
        %v2470 = vsub.f32 %v2414, %v2452
        %v2471 = vsub.f32 %v2419, %v2454
        %v2472 = vsub.f32 %v2422, %v2456
        %v2473 = vmul.f32 %v2457, 1.442695
        %v2474 = vpow.pop %v2473
        %v2475 = vmul.f32 %v2458, 1.442695
        %v2476 = vpow.pop %v2475
        %v2477 = vmul.f32 %v2459, 1.442695
        %v2478 = vpow.pop %v2477
        %v2479 = vmul.f32 %v2460, 1.442695
        %v2480 = vpow.pop %v2479
        %v2481 = vmul.f32 %v2461, 1.442695
        %v2482 = vpow.pop %v2481
        %v2483 = vmul.f32 %v2462, 1.442695
        %v2484 = vpow.pop %v2483
        %v2485 = vmul.f32 %v2463, 1.442695
        %v2486 = vpow.pop %v2485
        %v2487 = vmul.f32 %v2464, 1.442695
        %v2488 = vpow.pop %v2487
        %v2489 = vmul.f32 %v2465, 1.442695
        %v2490 = vpow.pop %v2489
        %v2491 = vmul.f32 %v2466, 1.442695
        %v2492 = vpow.pop %v2491
        %v2493 = vmul.f32 %v2467, 1.442695
        %v2494 = vpow.pop %v2493
        %v2495 = vmul.f32 %v2468, 1.442695
        %v2496 = vpow.pop %v2495
        %v2497 = vmul.f32 %v2469, 1.442695
        %v2498 = vpow.pop %v2497
        %v2499 = vmul.f32 %v2470, 1.442695
        %v2500 = vpow.pop %v2499
        %v2501 = vmul.f32 %v2471, 1.442695
        %v2502 = vpow.pop %v2501
        %v2503 = vmul.f32 %v2472, 1.442695
        %v2504 = vpow.pop %v2503
        %2505 = vadd.xlane.f32.xlu0 %v2474
        %v2506 = vpop.xlane.xlu0 %2505
        %2507 = vadd.xlane.f32.xlu0 %v2476
        %v2508 = vpop.xlane.xlu0 %2507
        %2509 = vadd.xlane.f32.xlu0 %v2478
        %v2510 = vpop.xlane.xlu0 %2509
        %2511 = vadd.xlane.f32.xlu0 %v2480
        %v2512 = vpop.xlane.xlu0 %2511
        %2513 = vadd.xlane.f32.xlu0 %v2482
        %v2514 = vpop.xlane.xlu0 %2513
        %2515 = vadd.xlane.f32.xlu0 %v2484
        %v2516 = vpop.xlane.xlu0 %2515
        %2517 = vadd.xlane.f32.xlu0 %v2486
        %v2518 = vpop.xlane.xlu0 %2517
        %2519 = vadd.xlane.f32.xlu0 %v2488
        %v2520 = vpop.xlane.xlu0 %2519
        %2521 = vadd.xlane.f32.xlu0 %v2490
        %v2522 = vpop.xlane.xlu0 %2521
        %2523 = vadd.xlane.f32.xlu0 %v2492
        %v2524 = vpop.xlane.xlu0 %2523
        %2525 = vadd.xlane.f32.xlu0 %v2494
        %v2526 = vpop.xlane.xlu0 %2525
        %2527 = vadd.xlane.f32.xlu0 %v2496
        %v2528 = vpop.xlane.xlu0 %2527
        %2529 = vadd.xlane.f32.xlu0 %v2498
        %v2530 = vpop.xlane.xlu0 %2529
        %2531 = vadd.xlane.f32.xlu0 %v2500
        %v2532 = vpop.xlane.xlu0 %2531
        %2533 = vadd.xlane.f32.xlu0 %v2502
        %v2534 = vpop.xlane.xlu0 %2533
        %2535 = vadd.xlane.f32.xlu0 %v2504
        %v2536 = vpop.xlane.xlu0 %2535
        %v2537 = vrcp.pop %v2506
        %v2538 = vrcp.pop %v2508
        %v2539 = vrcp.pop %v2510
        %v2540 = vrcp.pop %v2512
        %v2541 = vrcp.pop %v2514
        %v2542 = vrcp.pop %v2516
        %v2543 = vrcp.pop %v2518
        %v2544 = vrcp.pop %v2520
        %v2545 = vrcp.pop %v2522
        %v2546 = vrcp.pop %v2524
        %v2547 = vrcp.pop %v2526
        %v2548 = vrcp.pop %v2528
        %v2549 = vrcp.pop %v2530
        %v2550 = vrcp.pop %v2532
        %v2551 = vrcp.pop %v2534
        %v2552 = vrcp.pop %v2536
        %v2553 = vpack.c.bf16 %v2476, %v2474
        %v2554 = vpack.c.bf16 %v2480, %v2478
        %v2555 = vpack.c.bf16 %v2484, %v2482
        %v2556 = vpack.c.bf16 %v2488, %v2486
        %v2557 = vpack.c.bf16 %v2492, %v2490
        %v2558 = vpack.c.bf16 %v2496, %v2494
        %v2559 = vpack.c.bf16 %v2500, %v2498
        %v2560 = vpack.c.bf16 %v2504, %v2502
        %2561 = vmatprep.subr.bf16.mxu0 0
        %2562 = vmatpush1.bf16.msra.mxu0 %v2320
        %2563 = vmatprep.subr.bf16.mxu0 0
        %2564 = vmatpush1.bf16.msra.mxu0 %v2321
        %2565 = vmatprep.subr.bf16.mxu0 0
        %2566 = vmatpush1.bf16.msra.mxu0 %v2322
        %2567 = vmatprep.subr.bf16.mxu0 0
        %2568 = vmatpush1.bf16.msra.mxu0 %v2323
        %2569 = vmatprep.subr.bf16.mxu0 0
        %2570 = vmatpush1.bf16.msra.mxu0 %v2324
        %2571 = vmatprep.subr.bf16.mxu0 0
        %2572 = vmatpush1.bf16.msra.mxu0 %v2325
        %2573 = vmatprep.subr.bf16.mxu0 0
        %2574 = vmatpush1.bf16.msra.mxu0 %v2326
        %2575 = vmatprep.subr.bf16.mxu0 0
        %2576 = vmatpush1.bf16.msra.mxu0 %v2327
        %2577 = vmatprep.subr.bf16.mxu0 0
        %2578 = vmatpush1.bf16.msra.mxu0 0
        %2579 = vmatprep.subr.bf16.mxu0 0
        %2580 = vmatpush1.bf16.msra.mxu0 0
        %2581 = vmatprep.subr.bf16.mxu0 0
        %2582 = vmatpush1.bf16.msra.mxu0 0
        %2583 = vmatprep.subr.bf16.mxu0 0
        %2584 = vmatpush1.bf16.msra.mxu0 0
        %2585 = vmatprep.subr.bf16.mxu0 0
        %2586 = vmatpush1.bf16.msra.mxu0 0
        %2587 = vmatprep.subr.bf16.mxu0 0
        %2588 = vmatpush1.bf16.msra.mxu0 0
        %2589 = vmatprep.subr.bf16.mxu0 0
        %2590 = vmatpush1.bf16.msra.mxu0 0
        %2591 = vmatprep.subr.bf16.mxu0 0
        %2592 = vmatpush1.bf16.msra.mxu0 0
        %2593 = vmatprep.mubr.bf16.mxu0 0
        %2594 = vmatmul.mubr.bf16.gmra.mrb[0].mxu0 %v2553
        %v2595 = vpop.f32.mrb[0].mxu0
        %v2596 = vadd.f32 0.0, %v2595
        %v2597 = vpop.f32.mrb[0].mxu0
        %v2598 = vpop.f32.mrb[0].mxu0
        %v2599 = vadd.f32 0.0, %v2598
        %v2600 = vpop.f32.mrb[0].mxu0
        %2601 = vmatprep.mubr.bf16.mxu0 0
        %2602 = vmatmul.mubr.bf16.gmra.mrb[0].mxu0 %v2554
        %v2603 = vpop.f32.mrb[0].mxu0
        %v2604 = vadd.f32 0.0, %v2603
        %v2605 = vpop.f32.mrb[0].mxu0
        %v2606 = vpop.f32.mrb[0].mxu0
        %v2607 = vadd.f32 0.0, %v2606
        %v2608 = vpop.f32.mrb[0].mxu0
        %2609 = vmatprep.mubr.bf16.mxu0 0
        %2610 = vmatmul.mubr.bf16.gmra.mrb[0].mxu0 %v2555
        %v2611 = vpop.f32.mrb[0].mxu0
        %v2612 = vadd.f32 0.0, %v2611
        %v2613 = vpop.f32.mrb[0].mxu0
        %v2614 = vpop.f32.mrb[0].mxu0
        %v2615 = vadd.f32 0.0, %v2614
        %v2616 = vpop.f32.mrb[0].mxu0
        %2617 = vmatprep.mubr.bf16.mxu0 0
        %2618 = vmatmul.mubr.bf16.gmra.mrb[0].mxu0 %v2556
        %v2619 = vpop.f32.mrb[0].mxu0
        %v2620 = vadd.f32 0.0, %v2619
        %v2621 = vpop.f32.mrb[0].mxu0
        %v2622 = vpop.f32.mrb[0].mxu0
        %v2623 = vadd.f32 0.0, %v2622
        %v2624 = vpop.f32.mrb[0].mxu0
        %2625 = vmatprep.mubr.bf16.mxu0 0
        %2626 = vmatmul.mubr.bf16.gmra.mrb[0].mxu0 %v2557
        %v2627 = vpop.f32.mrb[0].mxu0
        %v2628 = vadd.f32 0.0, %v2627
        %v2629 = vpop.f32.mrb[0].mxu0
        %v2630 = vpop.f32.mrb[0].mxu0
        %v2631 = vadd.f32 0.0, %v2630
        %v2632 = vpop.f32.mrb[0].mxu0
        %2633 = vmatprep.mubr.bf16.mxu0 0
        %2634 = vmatmul.mubr.bf16.gmra.mrb[0].mxu0 %v2558
        %v2635 = vpop.f32.mrb[0].mxu0
        %v2636 = vadd.f32 0.0, %v2635
        %v2637 = vpop.f32.mrb[0].mxu0
        %v2638 = vpop.f32.mrb[0].mxu0
        %v2639 = vadd.f32 0.0, %v2638
        %v2640 = vpop.f32.mrb[0].mxu0
        %2641 = vmatprep.mubr.bf16.mxu0 0
        %2642 = vmatmul.mubr.bf16.gmra.mrb[0].mxu0 %v2559
        %v2643 = vpop.f32.mrb[0].mxu0
        %v2644 = vadd.f32 0.0, %v2643
        %v2645 = vpop.f32.mrb[0].mxu0
        %v2646 = vpop.f32.mrb[0].mxu0
        %v2647 = vadd.f32 0.0, %v2646
        %v2648 = vpop.f32.mrb[0].mxu0
        %2649 = vmatprep.mubr.bf16.mxu0 0
        %2650 = vmatmul.mubr.bf16.gmra.mrb[0].mxu0 %v2560
        %v2651 = vpop.f32.mrb[0].mxu0
        %v2652 = vadd.f32 0.0, %v2651
        %v2653 = vpop.f32.mrb[0].mxu0
        %v2654 = vpop.f32.mrb[0].mxu0
        %v2655 = vadd.f32 0.0, %v2654
        %v2656 = vpop.f32.mrb[0].mxu0
        %2657 = vdwg.mxu0
        %v2658 = vmul.f32 %v2596, %v2537
        %v2659 = vmul.f32 %v2599, %v2538
        %v2660 = vmul.f32 %v2604, %v2539
        %v2661 = vmul.f32 %v2607, %v2540
        %v2662 = vmul.f32 %v2612, %v2541
        %v2663 = vmul.f32 %v2615, %v2542
        %v2664 = vmul.f32 %v2620, %v2543
        %v2665 = vmul.f32 %v2623, %v2544
        %v2666 = vmul.f32 %v2628, %v2545
        %v2667 = vmul.f32 %v2631, %v2546
        %v2668 = vmul.f32 %v2636, %v2547
        %v2669 = vmul.f32 %v2639, %v2548
        %v2670 = vmul.f32 %v2644, %v2549
        %v2671 = vmul.f32 %v2647, %v2550
        %v2672 = vmul.f32 %v2652, %v2551
        %v2673 = vmul.f32 %v2655, %v2552
        %v2674 = vpack.c.bf16 %v2659, %v2658
        %v2675 = vpack.c.bf16 %v2661, %v2660
        %v2676 = vpack.c.bf16 %v2663, %v2662
        %v2677 = vpack.c.bf16 %v2665, %v2664
        %v2678 = vpack.c.bf16 %v2667, %v2666
        %v2679 = vpack.c.bf16 %v2669, %v2668
        %v2680 = vpack.c.bf16 %v2671, %v2670
        %v2681 = vpack.c.bf16 %v2673, %v2672
        %2682 = vst [vmem:[#allocation3 + $0x10] sm:$0xff] %v2674
        %2683 = vst [vmem:[#allocation3 + $0x30] sm:$0xff] %v2675
        %2684 = vst [vmem:[#allocation3 + $0x50] sm:$0xff] %v2676
        %2685 = vst [vmem:[#allocation3 + $0x70] sm:$0xff] %v2677
        %2686 = vst [vmem:[#allocation3 + $0x90] sm:$0xff] %v2678
        %2687 = vst [vmem:[#allocation3 + $0xb0] sm:$0xff] %v2679
        %2688 = vst [vmem:[#allocation3 + $0xd0] sm:$0xff] %v2680
        %2689 = vst [vmem:[#allocation3 + $0xf0] sm:$0xff] %v2681
        %v2690 = vld [vmem:[#allocation2 + $0x18] sm:$0xff]
        %v2691 = vld [vmem:[#allocation2 + $0x78] sm:$0xff]
        %v2692 = vld [vmem:[#allocation2 + $0xd8] sm:$0xff]
        %v2693 = vld [vmem:[#allocation2 + $0x138] sm:$0xff]
        %v2694 = vld [vmem:[#allocation2 + $0x198] sm:$0xff]
        %v2695 = vld [vmem:[#allocation2 + $0x1f8] sm:$0xff]
        %v2696 = vld [vmem:[#allocation2 + $0x258] sm:$0xff]
        %v2697 = vld [vmem:[#allocation2 + $0x2b8] sm:$0xff]
        %v2698 = vld [vmem:[#allocation2 + $0x38] sm:$0xff]
        %v2699 = vld [vmem:[#allocation2 + $0x98] sm:$0xff]
        %v2700 = vld [vmem:[#allocation2 + $0xf8] sm:$0xff]
        %v2701 = vld [vmem:[#allocation2 + $0x158] sm:$0xff]
        %v2702 = vld [vmem:[#allocation2 + $0x1b8] sm:$0xff]
        %v2703 = vld [vmem:[#allocation2 + $0x218] sm:$0xff]
        %v2704 = vld [vmem:[#allocation2 + $0x278] sm:$0xff]
        %v2705 = vld [vmem:[#allocation2 + $0x2d8] sm:$0xff]
        %v2706 = vld [vmem:[#allocation2 + $0x58] sm:$0xff]
        %v2707 = vld [vmem:[#allocation2 + $0xb8] sm:$0xff]
        %v2708 = vld [vmem:[#allocation2 + $0x118] sm:$0xff]
        %v2709 = vld [vmem:[#allocation2 + $0x178] sm:$0xff]
        %v2710 = vld [vmem:[#allocation2 + $0x1d8] sm:$0xff]
        %v2711 = vld [vmem:[#allocation2 + $0x238] sm:$0xff]
        %v2712 = vld [vmem:[#allocation2 + $0x298] sm:$0xff]
        %v2713 = vld [vmem:[#allocation2 + $0x2f8] sm:$0xff]
        %2714 = vmatprep.subr.bf16.mxu0 0
        %2715 = vmatpush1.bf16.xpose.msra.mxu0 %v2698
        %2716 = vmatprep.subr.bf16.mxu0 0
        %2717 = vmatpush1.bf16.xpose.msra.mxu0 %v2699
        %2718 = vmatprep.subr.bf16.mxu0 0
        %2719 = vmatpush1.bf16.xpose.msra.mxu0 %v2700
        %2720 = vmatprep.subr.bf16.mxu0 0
        %2721 = vmatpush1.bf16.xpose.msra.mxu0 %v2701
        %2722 = vmatprep.subr.bf16.mxu0 0
        %2723 = vmatpush1.bf16.xpose.msra.mxu0 %v2702
        %2724 = vmatprep.subr.bf16.mxu0 0
        %2725 = vmatpush1.bf16.xpose.msra.mxu0 %v2703
        %2726 = vmatprep.subr.bf16.mxu0 0
        %2727 = vmatpush1.bf16.xpose.msra.mxu0 %v2704
        %2728 = vmatprep.subr.bf16.mxu0 0
        %2729 = vmatpush1.bf16.xpose.msra.mxu0 %v2705
        %2730 = vmatprep.subr.bf16.mxu0 0
        %2731 = vmatpush1.bf16.xpose.msra.mxu0 0
        %2732 = vmatprep.subr.bf16.mxu0 0
        %2733 = vmatpush1.bf16.xpose.msra.mxu0 0
        %2734 = vmatprep.subr.bf16.mxu0 0
        %2735 = vmatpush1.bf16.xpose.msra.mxu0 0
        %2736 = vmatprep.subr.bf16.mxu0 0
        %2737 = vmatpush1.bf16.xpose.msra.mxu0 0
        %2738 = vmatprep.subr.bf16.mxu0 0
        %2739 = vmatpush1.bf16.xpose.msra.mxu0 0
        %2740 = vmatprep.subr.bf16.mxu0 0
        %2741 = vmatpush1.bf16.xpose.msra.mxu0 0
        %2742 = vmatprep.subr.bf16.mxu0 0
        %2743 = vmatpush1.bf16.xpose.msra.mxu0 0
        %2744 = vmatprep.subr.bf16.mxu0 0
        %2745 = vmatpush1.bf16.xpose.msra.mxu0 0
        %2746 = vmatprep.mubr.bf16.mxu0 0
        %2747 = vmatmul.mubr.bf16.gmra.mrb[0].mxu0 %v2690
        %v2748 = vpop.f32.mrb[0].mxu0
        %v2749 = vadd.f32 0.0, %v2748
        %v2750 = vpop.f32.mrb[0].mxu0
        %v2751 = vpop.f32.mrb[0].mxu0
        %v2752 = vadd.f32 0.0, %v2751
        %v2753 = vpop.f32.mrb[0].mxu0
        %2754 = vmatprep.mubr.bf16.mxu0 0
        %2755 = vmatmul.mubr.bf16.gmra.mrb[0].mxu0 %v2691
        %v2756 = vpop.f32.mrb[0].mxu0
        %v2757 = vadd.f32 0.0, %v2756
        %v2758 = vpop.f32.mrb[0].mxu0
        %v2759 = vpop.f32.mrb[0].mxu0
        %v2760 = vadd.f32 0.0, %v2759
        %v2761 = vpop.f32.mrb[0].mxu0
        %2762 = vmatprep.mubr.bf16.mxu0 0
        %2763 = vmatmul.mubr.bf16.gmra.mrb[0].mxu0 %v2692
        %v2764 = vpop.f32.mrb[0].mxu0
        %v2765 = vadd.f32 0.0, %v2764
        %v2766 = vpop.f32.mrb[0].mxu0
        %v2767 = vpop.f32.mrb[0].mxu0
        %v2768 = vadd.f32 0.0, %v2767
        %v2769 = vpop.f32.mrb[0].mxu0
        %2770 = vmatprep.mubr.bf16.mxu0 0
        %2771 = vmatmul.mubr.bf16.gmra.mrb[0].mxu0 %v2693
        %v2772 = vpop.f32.mrb[0].mxu0
        %v2773 = vadd.f32 0.0, %v2772
        %v2774 = vpop.f32.mrb[0].mxu0
        %v2775 = vpop.f32.mrb[0].mxu0
        %v2776 = vadd.f32 0.0, %v2775
        %v2777 = vpop.f32.mrb[0].mxu0
        %2778 = vmatprep.mubr.bf16.mxu0 0
        %2779 = vmatmul.mubr.bf16.gmra.mrb[0].mxu0 %v2694
        %v2780 = vpop.f32.mrb[0].mxu0
        %v2781 = vadd.f32 0.0, %v2780
        %v2782 = vpop.f32.mrb[0].mxu0
        %v2783 = vpop.f32.mrb[0].mxu0
        %v2784 = vadd.f32 0.0, %v2783
        %v2785 = vpop.f32.mrb[0].mxu0
        %2786 = vmatprep.mubr.bf16.mxu0 0
        %2787 = vmatmul.mubr.bf16.gmra.mrb[0].mxu0 %v2695
        %v2788 = vpop.f32.mrb[0].mxu0
        %v2789 = vadd.f32 0.0, %v2788
        %v2790 = vpop.f32.mrb[0].mxu0
        %v2791 = vpop.f32.mrb[0].mxu0
        %v2792 = vadd.f32 0.0, %v2791
        %v2793 = vpop.f32.mrb[0].mxu0
        %2794 = vmatprep.mubr.bf16.mxu0 0
        %2795 = vmatmul.mubr.bf16.gmra.mrb[0].mxu0 %v2696
        %v2796 = vpop.f32.mrb[0].mxu0
        %v2797 = vadd.f32 0.0, %v2796
        %v2798 = vpop.f32.mrb[0].mxu0
        %v2799 = vpop.f32.mrb[0].mxu0
        %v2800 = vadd.f32 0.0, %v2799
        %v2801 = vpop.f32.mrb[0].mxu0
        %2802 = vmatprep.mubr.bf16.mxu0 0
        %2803 = vmatmul.mubr.bf16.gmra.mrb[0].mxu0 %v2697
        %v2804 = vpop.f32.mrb[0].mxu0
        %v2805 = vadd.f32 0.0, %v2804
        %v2806 = vpop.f32.mrb[0].mxu0
        %v2807 = vpop.f32.mrb[0].mxu0
        %v2808 = vadd.f32 0.0, %v2807
        %v2809 = vpop.f32.mrb[0].mxu0
        %2810 = vdwg.mxu0
        %2811 = vmax.xlane.f32.xlu0 %v2749
        %v2812 = vpop.xlane.xlu0 %2811
        %2813 = vmax.xlane.f32.xlu0 %v2752
        %v2814 = vpop.xlane.xlu0 %2813
        %2815 = vmax.xlane.f32.xlu0 %v2757
        %v2816 = vpop.xlane.xlu0 %2815
        %2817 = vmax.xlane.f32.xlu0 %v2760
        %v2818 = vpop.xlane.xlu0 %2817
        %2819 = vmax.xlane.f32.xlu0 %v2765
        %v2820 = vpop.xlane.xlu0 %2819
        %2821 = vmax.xlane.f32.xlu0 %v2768
        %v2822 = vpop.xlane.xlu0 %2821
        %2823 = vmax.xlane.f32.xlu0 %v2773
        %v2824 = vpop.xlane.xlu0 %2823
        %2825 = vmax.xlane.f32.xlu0 %v2776
        %v2826 = vpop.xlane.xlu0 %2825
        %2827 = vmax.xlane.f32.xlu0 %v2781
        %v2828 = vpop.xlane.xlu0 %2827
        %2829 = vmax.xlane.f32.xlu0 %v2784
        %v2830 = vpop.xlane.xlu0 %2829
        %2831 = vmax.xlane.f32.xlu0 %v2789
        %v2832 = vpop.xlane.xlu0 %2831
        %2833 = vmax.xlane.f32.xlu0 %v2792
        %v2834 = vpop.xlane.xlu0 %2833
        %2835 = vmax.xlane.f32.xlu0 %v2797
        %v2836 = vpop.xlane.xlu0 %2835
        %2837 = vmax.xlane.f32.xlu0 %v2800
        %v2838 = vpop.xlane.xlu0 %2837
        %2839 = vmax.xlane.f32.xlu0 %v2805
        %v2840 = vpop.xlane.xlu0 %2839
        %2841 = vmax.xlane.f32.xlu0 %v2808
        %v2842 = vpop.xlane.xlu0 %2841
        %v2843 = vsub.f32 %v2749, %v2812
        %v2844 = vsub.f32 %v2752, %v2814
        %v2845 = vsub.f32 %v2757, %v2816
        %v2846 = vsub.f32 %v2760, %v2818
        %v2847 = vsub.f32 %v2765, %v2820
        %v2848 = vsub.f32 %v2768, %v2822
        %v2849 = vsub.f32 %v2773, %v2824
        %v2850 = vsub.f32 %v2776, %v2826
        %v2851 = vsub.f32 %v2781, %v2828
        %v2852 = vsub.f32 %v2784, %v2830
        %v2853 = vsub.f32 %v2789, %v2832
        %v2854 = vsub.f32 %v2792, %v2834
        %v2855 = vsub.f32 %v2797, %v2836
        %v2856 = vsub.f32 %v2800, %v2838
        %v2857 = vsub.f32 %v2805, %v2840
        %v2858 = vsub.f32 %v2808, %v2842
        %v2859 = vmul.f32 %v2843, 1.442695
        %v2860 = vpow.pop %v2859
        %v2861 = vmul.f32 %v2844, 1.442695
        %v2862 = vpow.pop %v2861
        %v2863 = vmul.f32 %v2845, 1.442695
        %v2864 = vpow.pop %v2863
        %v2865 = vmul.f32 %v2846, 1.442695
        %v2866 = vpow.pop %v2865
        %v2867 = vmul.f32 %v2847, 1.442695
        %v2868 = vpow.pop %v2867
        %v2869 = vmul.f32 %v2848, 1.442695
        %v2870 = vpow.pop %v2869
        %v2871 = vmul.f32 %v2849, 1.442695
        %v2872 = vpow.pop %v2871
        %v2873 = vmul.f32 %v2850, 1.442695
        %v2874 = vpow.pop %v2873
        %v2875 = vmul.f32 %v2851, 1.442695
        %v2876 = vpow.pop %v2875
        %v2877 = vmul.f32 %v2852, 1.442695
        %v2878 = vpow.pop %v2877
        %v2879 = vmul.f32 %v2853, 1.442695
        %v2880 = vpow.pop %v2879
        %v2881 = vmul.f32 %v2854, 1.442695
        %v2882 = vpow.pop %v2881
        %v2883 = vmul.f32 %v2855, 1.442695
        %v2884 = vpow.pop %v2883
        %v2885 = vmul.f32 %v2856, 1.442695
        %v2886 = vpow.pop %v2885
        %v2887 = vmul.f32 %v2857, 1.442695
        %v2888 = vpow.pop %v2887
        %v2889 = vmul.f32 %v2858, 1.442695
        %v2890 = vpow.pop %v2889
        %2891 = vadd.xlane.f32.xlu0 %v2860
        %v2892 = vpop.xlane.xlu0 %2891
        %2893 = vadd.xlane.f32.xlu0 %v2862
        %v2894 = vpop.xlane.xlu0 %2893
        %2895 = vadd.xlane.f32.xlu0 %v2864
        %v2896 = vpop.xlane.xlu0 %2895
        %2897 = vadd.xlane.f32.xlu0 %v2866
        %v2898 = vpop.xlane.xlu0 %2897
        %2899 = vadd.xlane.f32.xlu0 %v2868
        %v2900 = vpop.xlane.xlu0 %2899
        %2901 = vadd.xlane.f32.xlu0 %v2870
        %v2902 = vpop.xlane.xlu0 %2901
        %2903 = vadd.xlane.f32.xlu0 %v2872
        %v2904 = vpop.xlane.xlu0 %2903
        %2905 = vadd.xlane.f32.xlu0 %v2874
        %v2906 = vpop.xlane.xlu0 %2905
        %2907 = vadd.xlane.f32.xlu0 %v2876
        %v2908 = vpop.xlane.xlu0 %2907
        %2909 = vadd.xlane.f32.xlu0 %v2878
        %v2910 = vpop.xlane.xlu0 %2909
        %2911 = vadd.xlane.f32.xlu0 %v2880
        %v2912 = vpop.xlane.xlu0 %2911
        %2913 = vadd.xlane.f32.xlu0 %v2882
        %v2914 = vpop.xlane.xlu0 %2913
        %2915 = vadd.xlane.f32.xlu0 %v2884
        %v2916 = vpop.xlane.xlu0 %2915
        %2917 = vadd.xlane.f32.xlu0 %v2886
        %v2918 = vpop.xlane.xlu0 %2917
        %2919 = vadd.xlane.f32.xlu0 %v2888
        %v2920 = vpop.xlane.xlu0 %2919
        %2921 = vadd.xlane.f32.xlu0 %v2890
        %v2922 = vpop.xlane.xlu0 %2921
        %v2923 = vrcp.pop %v2892
        %v2924 = vrcp.pop %v2894
        %v2925 = vrcp.pop %v2896
        %v2926 = vrcp.pop %v2898
        %v2927 = vrcp.pop %v2900
        %v2928 = vrcp.pop %v2902
        %v2929 = vrcp.pop %v2904
        %v2930 = vrcp.pop %v2906
        %v2931 = vrcp.pop %v2908
        %v2932 = vrcp.pop %v2910
        %v2933 = vrcp.pop %v2912
        %v2934 = vrcp.pop %v2914
        %v2935 = vrcp.pop %v2916
        %v2936 = vrcp.pop %v2918
        %v2937 = vrcp.pop %v2920
        %v2938 = vrcp.pop %v2922
        %v2939 = vpack.c.bf16 %v2862, %v2860
        %v2940 = vpack.c.bf16 %v2866, %v2864
        %v2941 = vpack.c.bf16 %v2870, %v2868
        %v2942 = vpack.c.bf16 %v2874, %v2872
        %v2943 = vpack.c.bf16 %v2878, %v2876
        %v2944 = vpack.c.bf16 %v2882, %v2880
        %v2945 = vpack.c.bf16 %v2886, %v2884
        %v2946 = vpack.c.bf16 %v2890, %v2888
        %2947 = vmatprep.subr.bf16.mxu0 0
        %2948 = vmatpush1.bf16.msra.mxu0 %v2706
        %2949 = vmatprep.subr.bf16.mxu0 0
        %2950 = vmatpush1.bf16.msra.mxu0 %v2707
        %2951 = vmatprep.subr.bf16.mxu0 0
        %2952 = vmatpush1.bf16.msra.mxu0 %v2708
        %2953 = vmatprep.subr.bf16.mxu0 0
        %2954 = vmatpush1.bf16.msra.mxu0 %v2709
        %2955 = vmatprep.subr.bf16.mxu0 0
        %2956 = vmatpush1.bf16.msra.mxu0 %v2710
        %2957 = vmatprep.subr.bf16.mxu0 0
        %2958 = vmatpush1.bf16.msra.mxu0 %v2711
        %2959 = vmatprep.subr.bf16.mxu0 0
        %2960 = vmatpush1.bf16.msra.mxu0 %v2712
        %2961 = vmatprep.subr.bf16.mxu0 0
        %2962 = vmatpush1.bf16.msra.mxu0 %v2713
        %2963 = vmatprep.subr.bf16.mxu0 0
        %2964 = vmatpush1.bf16.msra.mxu0 0
        %2965 = vmatprep.subr.bf16.mxu0 0
        %2966 = vmatpush1.bf16.msra.mxu0 0
        %2967 = vmatprep.subr.bf16.mxu0 0
        %2968 = vmatpush1.bf16.msra.mxu0 0
        %2969 = vmatprep.subr.bf16.mxu0 0
        %2970 = vmatpush1.bf16.msra.mxu0 0
        %2971 = vmatprep.subr.bf16.mxu0 0
        %2972 = vmatpush1.bf16.msra.mxu0 0
        %2973 = vmatprep.subr.bf16.mxu0 0
        %2974 = vmatpush1.bf16.msra.mxu0 0
        %2975 = vmatprep.subr.bf16.mxu0 0
        %2976 = vmatpush1.bf16.msra.mxu0 0
        %2977 = vmatprep.subr.bf16.mxu0 0
        %2978 = vmatpush1.bf16.msra.mxu0 0
        %2979 = vmatprep.mubr.bf16.mxu0 0
        %2980 = vmatmul.mubr.bf16.gmra.mrb[0].mxu0 %v2939
        %v2981 = vpop.f32.mrb[0].mxu0
        %v2982 = vadd.f32 0.0, %v2981
        %v2983 = vpop.f32.mrb[0].mxu0
        %v2984 = vpop.f32.mrb[0].mxu0
        %v2985 = vadd.f32 0.0, %v2984
        %v2986 = vpop.f32.mrb[0].mxu0
        %2987 = vmatprep.mubr.bf16.mxu0 0
        %2988 = vmatmul.mubr.bf16.gmra.mrb[0].mxu0 %v2940
        %v2989 = vpop.f32.mrb[0].mxu0
        %v2990 = vadd.f32 0.0, %v2989
        %v2991 = vpop.f32.mrb[0].mxu0
        %v2992 = vpop.f32.mrb[0].mxu0
        %v2993 = vadd.f32 0.0, %v2992
        %v2994 = vpop.f32.mrb[0].mxu0
        %2995 = vmatprep.mubr.bf16.mxu0 0
        %2996 = vmatmul.mubr.bf16.gmra.mrb[0].mxu0 %v2941
        %v2997 = vpop.f32.mrb[0].mxu0
        %v2998 = vadd.f32 0.0, %v2997
        %v2999 = vpop.f32.mrb[0].mxu0
        %v3000 = vpop.f32.mrb[0].mxu0
        %v3001 = vadd.f32 0.0, %v3000
        %v3002 = vpop.f32.mrb[0].mxu0
        %3003 = vmatprep.mubr.bf16.mxu0 0
        %3004 = vmatmul.mubr.bf16.gmra.mrb[0].mxu0 %v2942
        %v3005 = vpop.f32.mrb[0].mxu0
        %v3006 = vadd.f32 0.0, %v3005
        %v3007 = vpop.f32.mrb[0].mxu0
        %v3008 = vpop.f32.mrb[0].mxu0
        %v3009 = vadd.f32 0.0, %v3008
        %v3010 = vpop.f32.mrb[0].mxu0
        %3011 = vmatprep.mubr.bf16.mxu0 0
        %3012 = vmatmul.mubr.bf16.gmra.mrb[0].mxu0 %v2943
        %v3013 = vpop.f32.mrb[0].mxu0
        %v3014 = vadd.f32 0.0, %v3013
        %v3015 = vpop.f32.mrb[0].mxu0
        %v3016 = vpop.f32.mrb[0].mxu0
        %v3017 = vadd.f32 0.0, %v3016
        %v3018 = vpop.f32.mrb[0].mxu0
        %3019 = vmatprep.mubr.bf16.mxu0 0
        %3020 = vmatmul.mubr.bf16.gmra.mrb[0].mxu0 %v2944
        %v3021 = vpop.f32.mrb[0].mxu0
        %v3022 = vadd.f32 0.0, %v3021
        %v3023 = vpop.f32.mrb[0].mxu0
        %v3024 = vpop.f32.mrb[0].mxu0
        %v3025 = vadd.f32 0.0, %v3024
        %v3026 = vpop.f32.mrb[0].mxu0
        %3027 = vmatprep.mubr.bf16.mxu0 0
        %3028 = vmatmul.mubr.bf16.gmra.mrb[0].mxu0 %v2945
        %v3029 = vpop.f32.mrb[0].mxu0
        %v3030 = vadd.f32 0.0, %v3029
        %v3031 = vpop.f32.mrb[0].mxu0
        %v3032 = vpop.f32.mrb[0].mxu0
        %v3033 = vadd.f32 0.0, %v3032
        %v3034 = vpop.f32.mrb[0].mxu0
        %3035 = vmatprep.mubr.bf16.mxu0 0
        %3036 = vmatmul.mubr.bf16.gmra.mrb[0].mxu0 %v2946
        %v3037 = vpop.f32.mrb[0].mxu0
        %v3038 = vadd.f32 0.0, %v3037
        %v3039 = vpop.f32.mrb[0].mxu0
        %v3040 = vpop.f32.mrb[0].mxu0
        %v3041 = vadd.f32 0.0, %v3040
        %v3042 = vpop.f32.mrb[0].mxu0
        %3043 = vdwg.mxu0
        %v3044 = vmul.f32 %v2982, %v2923
        %v3045 = vmul.f32 %v2985, %v2924
        %v3046 = vmul.f32 %v2990, %v2925
        %v3047 = vmul.f32 %v2993, %v2926
        %v3048 = vmul.f32 %v2998, %v2927
        %v3049 = vmul.f32 %v3001, %v2928
        %v3050 = vmul.f32 %v3006, %v2929
        %v3051 = vmul.f32 %v3009, %v2930
        %v3052 = vmul.f32 %v3014, %v2931
        %v3053 = vmul.f32 %v3017, %v2932
        %v3054 = vmul.f32 %v3022, %v2933
        %v3055 = vmul.f32 %v3025, %v2934
        %v3056 = vmul.f32 %v3030, %v2935
        %v3057 = vmul.f32 %v3033, %v2936
        %v3058 = vmul.f32 %v3038, %v2937
        %v3059 = vmul.f32 %v3041, %v2938
        %v3060 = vpack.c.bf16 %v3045, %v3044
        %v3061 = vpack.c.bf16 %v3047, %v3046
        %v3062 = vpack.c.bf16 %v3049, %v3048
        %v3063 = vpack.c.bf16 %v3051, %v3050
        %v3064 = vpack.c.bf16 %v3053, %v3052
        %v3065 = vpack.c.bf16 %v3055, %v3054
        %v3066 = vpack.c.bf16 %v3057, %v3056
        %v3067 = vpack.c.bf16 %v3059, %v3058
        %3068 = vst [vmem:[#allocation3 + $0x18] sm:$0xff] %v3060
        %3069 = vst [vmem:[#allocation3 + $0x38] sm:$0xff] %v3061
        %3070 = vst [vmem:[#allocation3 + $0x58] sm:$0xff] %v3062
        %3071 = vst [vmem:[#allocation3 + $0x78] sm:$0xff] %v3063
        %3072 = vst [vmem:[#allocation3 + $0x98] sm:$0xff] %v3064
        %3073 = vst [vmem:[#allocation3 + $0xb8] sm:$0xff] %v3065
        %3074 = vst [vmem:[#allocation3 + $0xd8] sm:$0xff] %v3066
        %3075 = vst [vmem:[#allocation3 + $0xf8] sm:$0xff] %v3067
        %v3076 = vld [vmem:[#allocation3] sm:$0xff]
        %v3077 = vld [vmem:[#allocation3 + $0x8] sm:$0xff]
        %v3078 = vld [vmem:[#allocation3 + $0x10] sm:$0xff]
        %v3079 = vld [vmem:[#allocation3 + $0x18] sm:$0xff]
        %v3080 = vld [vmem:[#allocation3 + $0x20] sm:$0xff]
        %v3081 = vld [vmem:[#allocation3 + $0x28] sm:$0xff]
        %v3082 = vld [vmem:[#allocation3 + $0x30] sm:$0xff]
        %v3083 = vld [vmem:[#allocation3 + $0x38] sm:$0xff]
        %v3084 = vld [vmem:[#allocation3 + $0x40] sm:$0xff]
        %v3085 = vld [vmem:[#allocation3 + $0x48] sm:$0xff]
        %v3086 = vld [vmem:[#allocation3 + $0x50] sm:$0xff]
        %v3087 = vld [vmem:[#allocation3 + $0x58] sm:$0xff]
        %v3088 = vld [vmem:[#allocation3 + $0x60] sm:$0xff]
        %v3089 = vld [vmem:[#allocation3 + $0x68] sm:$0xff]
        %v3090 = vld [vmem:[#allocation3 + $0x70] sm:$0xff]
        %v3091 = vld [vmem:[#allocation3 + $0x78] sm:$0xff]
        %v3092 = vld [vmem:[#allocation3 + $0x80] sm:$0xff]
        %v3093 = vld [vmem:[#allocation3 + $0x88] sm:$0xff]
        %v3094 = vld [vmem:[#allocation3 + $0x90] sm:$0xff]
        %v3095 = vld [vmem:[#allocation3 + $0x98] sm:$0xff]
        %v3096 = vld [vmem:[#allocation3 + $0xa0] sm:$0xff]
        %v3097 = vld [vmem:[#allocation3 + $0xa8] sm:$0xff]
        %v3098 = vld [vmem:[#allocation3 + $0xb0] sm:$0xff]
        %v3099 = vld [vmem:[#allocation3 + $0xb8] sm:$0xff]
        %v3100 = vld [vmem:[#allocation3 + $0xc0] sm:$0xff]
        %v3101 = vld [vmem:[#allocation3 + $0xc8] sm:$0xff]
        %v3102 = vld [vmem:[#allocation3 + $0xd0] sm:$0xff]
        %v3103 = vld [vmem:[#allocation3 + $0xd8] sm:$0xff]
        %v3104 = vld [vmem:[#allocation3 + $0xe0] sm:$0xff]
        %v3105 = vld [vmem:[#allocation3 + $0xe8] sm:$0xff]
        %v3106 = vld [vmem:[#allocation3 + $0xf0] sm:$0xff]
        %v3107 = vld [vmem:[#allocation3 + $0xf8] sm:$0xff]
        %v3108 = vld [vmem:[#allocation10] sm:$0xff]
        %v3109 = vld [vmem:[#allocation10 + $0x8] sm:$0xff]
        %v3110 = vld [vmem:[#allocation10 + $0x10] sm:$0xff]
        %v3111 = vld [vmem:[#allocation10 + $0x18] sm:$0xff]
        %v3112 = vld [vmem:[#allocation10 + $0x20] sm:$0xff]
        %v3113 = vld [vmem:[#allocation10 + $0x28] sm:$0xff]
        %v3114 = vld [vmem:[#allocation10 + $0x30] sm:$0xff]
        %v3115 = vld [vmem:[#allocation10 + $0x38] sm:$0xff]
        %v3116 = vld [vmem:[#allocation10 + $0x40] sm:$0xff]
        %v3117 = vld [vmem:[#allocation10 + $0x48] sm:$0xff]
        %v3118 = vld [vmem:[#allocation10 + $0x50] sm:$0xff]
        %v3119 = vld [vmem:[#allocation10 + $0x58] sm:$0xff]
        %v3120 = vld [vmem:[#allocation10 + $0x60] sm:$0xff]
        %v3121 = vld [vmem:[#allocation10 + $0x68] sm:$0xff]
        %v3122 = vld [vmem:[#allocation10 + $0x70] sm:$0xff]
        %v3123 = vld [vmem:[#allocation10 + $0x78] sm:$0xff]
        %v3124 = vld [vmem:[#allocation10 + $0x80] sm:$0xff]
        %v3125 = vld [vmem:[#allocation10 + $0x88] sm:$0xff]
        %v3126 = vld [vmem:[#allocation10 + $0x90] sm:$0xff]
        %v3127 = vld [vmem:[#allocation10 + $0x98] sm:$0xff]
        %v3128 = vld [vmem:[#allocation10 + $0xa0] sm:$0xff]
        %v3129 = vld [vmem:[#allocation10 + $0xa8] sm:$0xff]
        %v3130 = vld [vmem:[#allocation10 + $0xb0] sm:$0xff]
        %v3131 = vld [vmem:[#allocation10 + $0xb8] sm:$0xff]
        %v3132 = vld [vmem:[#allocation10 + $0xc0] sm:$0xff]
        %v3133 = vld [vmem:[#allocation10 + $0xc8] sm:$0xff]
        %v3134 = vld [vmem:[#allocation10 + $0xd0] sm:$0xff]
        %v3135 = vld [vmem:[#allocation10 + $0xd8] sm:$0xff]
        %v3136 = vld [vmem:[#allocation10 + $0xe0] sm:$0xff]
        %v3137 = vld [vmem:[#allocation10 + $0xe8] sm:$0xff]
        %v3138 = vld [vmem:[#allocation10 + $0xf0] sm:$0xff]
        %v3139 = vld [vmem:[#allocation10 + $0xf8] sm:$0xff]
        %v3140 = vld [vmem:[#allocation10 + $0x100] sm:$0xff]
        %v3141 = vld [vmem:[#allocation10 + $0x108] sm:$0xff]
        %v3142 = vld [vmem:[#allocation10 + $0x110] sm:$0xff]
        %v3143 = vld [vmem:[#allocation10 + $0x118] sm:$0xff]
        %v3144 = vld [vmem:[#allocation10 + $0x120] sm:$0xff]
        %v3145 = vld [vmem:[#allocation10 + $0x128] sm:$0xff]
        %v3146 = vld [vmem:[#allocation10 + $0x130] sm:$0xff]
        %v3147 = vld [vmem:[#allocation10 + $0x138] sm:$0xff]
        %v3148 = vld [vmem:[#allocation10 + $0x140] sm:$0xff]
        %v3149 = vld [vmem:[#allocation10 + $0x148] sm:$0xff]
        %v3150 = vld [vmem:[#allocation10 + $0x150] sm:$0xff]
        %v3151 = vld [vmem:[#allocation10 + $0x158] sm:$0xff]
        %v3152 = vld [vmem:[#allocation10 + $0x160] sm:$0xff]
        %v3153 = vld [vmem:[#allocation10 + $0x168] sm:$0xff]
        %v3154 = vld [vmem:[#allocation10 + $0x170] sm:$0xff]
        %v3155 = vld [vmem:[#allocation10 + $0x178] sm:$0xff]
        %v3156 = vld [vmem:[#allocation10 + $0x180] sm:$0xff]
        %v3157 = vld [vmem:[#allocation10 + $0x188] sm:$0xff]
        %v3158 = vld [vmem:[#allocation10 + $0x190] sm:$0xff]
        %v3159 = vld [vmem:[#allocation10 + $0x198] sm:$0xff]
        %v3160 = vld [vmem:[#allocation10 + $0x1a0] sm:$0xff]
        %v3161 = vld [vmem:[#allocation10 + $0x1a8] sm:$0xff]
        %v3162 = vld [vmem:[#allocation10 + $0x1b0] sm:$0xff]
        %v3163 = vld [vmem:[#allocation10 + $0x1b8] sm:$0xff]
        %v3164 = vld [vmem:[#allocation10 + $0x1c0] sm:$0xff]
        %v3165 = vld [vmem:[#allocation10 + $0x1c8] sm:$0xff]
        %v3166 = vld [vmem:[#allocation10 + $0x1d0] sm:$0xff]
        %v3167 = vld [vmem:[#allocation10 + $0x1d8] sm:$0xff]
        %v3168 = vld [vmem:[#allocation10 + $0x1e0] sm:$0xff]
        %v3169 = vld [vmem:[#allocation10 + $0x1e8] sm:$0xff]
        %v3170 = vld [vmem:[#allocation10 + $0x1f0] sm:$0xff]
        %v3171 = vld [vmem:[#allocation10 + $0x1f8] sm:$0xff]
        %v3172 = vpack.c.bf16 %v3109, %v3108
        %v3173 = vpack.c.bf16 %v3111, %v3110
        %v3174 = vpack.c.bf16 %v3113, %v3112
        %v3175 = vpack.c.bf16 %v3115, %v3114
        %v3176 = vpack.c.bf16 %v3117, %v3116
        %v3177 = vpack.c.bf16 %v3119, %v3118
        %v3178 = vpack.c.bf16 %v3121, %v3120
        %v3179 = vpack.c.bf16 %v3123, %v3122
        %v3180 = vpack.c.bf16 %v3125, %v3124
        %v3181 = vpack.c.bf16 %v3127, %v3126
        %v3182 = vpack.c.bf16 %v3129, %v3128
        %v3183 = vpack.c.bf16 %v3131, %v3130
        %v3184 = vpack.c.bf16 %v3133, %v3132
        %v3185 = vpack.c.bf16 %v3135, %v3134
        %v3186 = vpack.c.bf16 %v3137, %v3136
        %v3187 = vpack.c.bf16 %v3139, %v3138
        %v3188 = vpack.c.bf16 %v3141, %v3140
        %v3189 = vpack.c.bf16 %v3143, %v3142
        %v3190 = vpack.c.bf16 %v3145, %v3144
        %v3191 = vpack.c.bf16 %v3147, %v3146
        %v3192 = vpack.c.bf16 %v3149, %v3148
        %v3193 = vpack.c.bf16 %v3151, %v3150
        %v3194 = vpack.c.bf16 %v3153, %v3152
        %v3195 = vpack.c.bf16 %v3155, %v3154
        %v3196 = vpack.c.bf16 %v3157, %v3156
        %v3197 = vpack.c.bf16 %v3159, %v3158
        %v3198 = vpack.c.bf16 %v3161, %v3160
        %v3199 = vpack.c.bf16 %v3163, %v3162
        %v3200 = vpack.c.bf16 %v3165, %v3164
        %v3201 = vpack.c.bf16 %v3167, %v3166
        %v3202 = vpack.c.bf16 %v3169, %v3168
        %v3203 = vpack.c.bf16 %v3171, %v3170
        %v3204 = vld [vmem:[%s4] sm:$0x1]
        %v3206 = vlaneseq
        %v3207 = vshrl.u32 %v3206, 7
        %v3208 = vsub.s32 0, %v3207
        %v3209 = vrot.slane %v3204, %v3208
        %3211 = vmatprep.subr.bf16.mxu0 0
        %3212 = vmatpush1.bf16.msra.mxu0 %v3172
        %3213 = vmatprep.subr.bf16.mxu0 0
        %3214 = vmatpush1.bf16.msra.mxu0 %v3173
        %3215 = vmatprep.subr.bf16.mxu0 0
        %3216 = vmatpush1.bf16.msra.mxu0 %v3174
        %3217 = vmatprep.subr.bf16.mxu0 0
        %3218 = vmatpush1.bf16.msra.mxu0 %v3175
        %3219 = vmatprep.subr.bf16.mxu0 0
        %3220 = vmatpush1.bf16.msra.mxu0 %v3176
        %3221 = vmatprep.subr.bf16.mxu0 0
        %3222 = vmatpush1.bf16.msra.mxu0 %v3177
        %3223 = vmatprep.subr.bf16.mxu0 0
        %3224 = vmatpush1.bf16.msra.mxu0 %v3178
        %3225 = vmatprep.subr.bf16.mxu0 0
        %3226 = vmatpush1.bf16.msra.mxu0 %v3179
        %3227 = vmatprep.subr.bf16.mxu0 0
        %3228 = vmatpush1.bf16.msra.mxu0 %v3180
        %3229 = vmatprep.subr.bf16.mxu0 0
        %3230 = vmatpush1.bf16.msra.mxu0 %v3181
        %3231 = vmatprep.subr.bf16.mxu0 0
        %3232 = vmatpush1.bf16.msra.mxu0 %v3182
        %3233 = vmatprep.subr.bf16.mxu0 0
        %3234 = vmatpush1.bf16.msra.mxu0 %v3183
        %3235 = vmatprep.subr.bf16.mxu0 0
        %3236 = vmatpush1.bf16.msra.mxu0 %v3184
        %3237 = vmatprep.subr.bf16.mxu0 0
        %3238 = vmatpush1.bf16.msra.mxu0 %v3185
        %3239 = vmatprep.subr.bf16.mxu0 0
        %3240 = vmatpush1.bf16.msra.mxu0 %v3186
        %3241 = vmatprep.subr.bf16.mxu0 0
        %3242 = vmatpush1.bf16.msra.mxu0 %v3187
        %3243 = vmatprep.mubr.bf16.mxu0 %v3077
        %3244 = vmatmul.mubr.bf16.gmra.mrb[0].mxu0 %v3076
        %v3245 = vpop.f32.mrb[0].mxu0
        %v3246 = vadd.f32 %v3209, %v3245
        %v3247 = vpop.f32.mrb[0].mxu0
        %v3248 = vpop.f32.mrb[0].mxu0
        %v3249 = vadd.f32 %v3209, %v3248
        %v3250 = vpop.f32.mrb[0].mxu0
        %3251 = vmatprep.mubr.bf16.mxu0 %v3081
        %3252 = vmatmul.mubr.bf16.gmra.mrb[0].mxu0 %v3080
        %v3253 = vpop.f32.mrb[0].mxu0
        %v3254 = vadd.f32 %v3209, %v3253
        %v3255 = vpop.f32.mrb[0].mxu0
        %v3256 = vpop.f32.mrb[0].mxu0
        %v3257 = vadd.f32 %v3209, %v3256
        %v3258 = vpop.f32.mrb[0].mxu0
        %3259 = vmatprep.mubr.bf16.mxu0 %v3085
        %3260 = vmatmul.mubr.bf16.gmra.mrb[0].mxu0 %v3084
        %v3261 = vpop.f32.mrb[0].mxu0
        %v3262 = vadd.f32 %v3209, %v3261
        %v3263 = vpop.f32.mrb[0].mxu0
        %v3264 = vpop.f32.mrb[0].mxu0
        %v3265 = vadd.f32 %v3209, %v3264
        %v3266 = vpop.f32.mrb[0].mxu0
        %3267 = vmatprep.mubr.bf16.mxu0 %v3089
        %3268 = vmatmul.mubr.bf16.gmra.mrb[0].mxu0 %v3088
        %v3269 = vpop.f32.mrb[0].mxu0
        %v3270 = vadd.f32 %v3209, %v3269
        %v3271 = vpop.f32.mrb[0].mxu0
        %v3272 = vpop.f32.mrb[0].mxu0
        %v3273 = vadd.f32 %v3209, %v3272
        %v3274 = vpop.f32.mrb[0].mxu0
        %3275 = vmatprep.mubr.bf16.mxu0 %v3093
        %3276 = vmatmul.mubr.bf16.gmra.mrb[0].mxu0 %v3092
        %v3277 = vpop.f32.mrb[0].mxu0
        %v3278 = vadd.f32 %v3209, %v3277
        %v3279 = vpop.f32.mrb[0].mxu0
        %v3280 = vpop.f32.mrb[0].mxu0
        %v3281 = vadd.f32 %v3209, %v3280
        %v3282 = vpop.f32.mrb[0].mxu0
        %3283 = vmatprep.mubr.bf16.mxu0 %v3097
        %3284 = vmatmul.mubr.bf16.gmra.mrb[0].mxu0 %v3096
        %v3285 = vpop.f32.mrb[0].mxu0
        %v3286 = vadd.f32 %v3209, %v3285
        %v3287 = vpop.f32.mrb[0].mxu0
        %v3288 = vpop.f32.mrb[0].mxu0
        %v3289 = vadd.f32 %v3209, %v3288
        %v3290 = vpop.f32.mrb[0].mxu0
        %3291 = vmatprep.mubr.bf16.mxu0 %v3101
        %3292 = vmatmul.mubr.bf16.gmra.mrb[0].mxu0 %v3100
        %v3293 = vpop.f32.mrb[0].mxu0
        %v3294 = vadd.f32 %v3209, %v3293
        %v3295 = vpop.f32.mrb[0].mxu0
        %v3296 = vpop.f32.mrb[0].mxu0
        %v3297 = vadd.f32 %v3209, %v3296
        %v3298 = vpop.f32.mrb[0].mxu0
        %3299 = vmatprep.mubr.bf16.mxu0 %v3105
        %3300 = vmatmul.mubr.bf16.gmra.mrb[0].mxu0 %v3104
        %v3301 = vpop.f32.mrb[0].mxu0
        %v3302 = vadd.f32 %v3209, %v3301
        %v3303 = vpop.f32.mrb[0].mxu0
        %v3304 = vpop.f32.mrb[0].mxu0
        %v3305 = vadd.f32 %v3209, %v3304
        %v3306 = vpop.f32.mrb[0].mxu0
        %3307 = vdwg.mxu0
        %3308 = vmatprep.subr.bf16.mxu0 0
        %3309 = vmatpush1.bf16.msra.mxu0 %v3188
        %3310 = vmatprep.subr.bf16.mxu0 0
        %3311 = vmatpush1.bf16.msra.mxu0 %v3189
        %3312 = vmatprep.subr.bf16.mxu0 0
        %3313 = vmatpush1.bf16.msra.mxu0 %v3190
        %3314 = vmatprep.subr.bf16.mxu0 0
        %3315 = vmatpush1.bf16.msra.mxu0 %v3191
        %3316 = vmatprep.subr.bf16.mxu0 0
        %3317 = vmatpush1.bf16.msra.mxu0 %v3192
        %3318 = vmatprep.subr.bf16.mxu0 0
        %3319 = vmatpush1.bf16.msra.mxu0 %v3193
        %3320 = vmatprep.subr.bf16.mxu0 0
        %3321 = vmatpush1.bf16.msra.mxu0 %v3194
        %3322 = vmatprep.subr.bf16.mxu0 0
        %3323 = vmatpush1.bf16.msra.mxu0 %v3195
        %3324 = vmatprep.subr.bf16.mxu0 0
        %3325 = vmatpush1.bf16.msra.mxu0 %v3196
        %3326 = vmatprep.subr.bf16.mxu0 0
        %3327 = vmatpush1.bf16.msra.mxu0 %v3197
        %3328 = vmatprep.subr.bf16.mxu0 0
        %3329 = vmatpush1.bf16.msra.mxu0 %v3198
        %3330 = vmatprep.subr.bf16.mxu0 0
        %3331 = vmatpush1.bf16.msra.mxu0 %v3199
        %3332 = vmatprep.subr.bf16.mxu0 0
        %3333 = vmatpush1.bf16.msra.mxu0 %v3200
        %3334 = vmatprep.subr.bf16.mxu0 0
        %3335 = vmatpush1.bf16.msra.mxu0 %v3201
        %3336 = vmatprep.subr.bf16.mxu0 0
        %3337 = vmatpush1.bf16.msra.mxu0 %v3202
        %3338 = vmatprep.subr.bf16.mxu0 0
        %3339 = vmatpush1.bf16.msra.mxu0 %v3203
        %3340 = vmatprep.mubr.bf16.mxu0 %v3079
        %3341 = vmatmul.mubr.bf16.gmra.mrb[0].mxu0 %v3078
        %v3342 = vpop.f32.mrb[0].mxu0
        %v3343 = vadd.f32 %v3246, %v3342
        %v3344 = vpop.f32.mrb[0].mxu0
        %v3345 = vpop.f32.mrb[0].mxu0
        %v3346 = vadd.f32 %v3249, %v3345
        %v3347 = vpop.f32.mrb[0].mxu0
        %3348 = vmatprep.mubr.bf16.mxu0 %v3083
        %3349 = vmatmul.mubr.bf16.gmra.mrb[0].mxu0 %v3082
        %v3350 = vpop.f32.mrb[0].mxu0
        %v3351 = vadd.f32 %v3254, %v3350
        %v3352 = vpop.f32.mrb[0].mxu0
        %v3353 = vpop.f32.mrb[0].mxu0
        %v3354 = vadd.f32 %v3257, %v3353
        %v3355 = vpop.f32.mrb[0].mxu0
        %3356 = vmatprep.mubr.bf16.mxu0 %v3087
        %3357 = vmatmul.mubr.bf16.gmra.mrb[0].mxu0 %v3086
        %v3358 = vpop.f32.mrb[0].mxu0
        %v3359 = vadd.f32 %v3262, %v3358
        %v3360 = vpop.f32.mrb[0].mxu0
        %v3361 = vpop.f32.mrb[0].mxu0
        %v3362 = vadd.f32 %v3265, %v3361
        %v3363 = vpop.f32.mrb[0].mxu0
        %3364 = vmatprep.mubr.bf16.mxu0 %v3091
        %3365 = vmatmul.mubr.bf16.gmra.mrb[0].mxu0 %v3090
        %v3366 = vpop.f32.mrb[0].mxu0
        %v3367 = vadd.f32 %v3270, %v3366
        %v3368 = vpop.f32.mrb[0].mxu0
        %v3369 = vpop.f32.mrb[0].mxu0
        %v3370 = vadd.f32 %v3273, %v3369
        %v3371 = vpop.f32.mrb[0].mxu0
        %3372 = vmatprep.mubr.bf16.mxu0 %v3095
        %3373 = vmatmul.mubr.bf16.gmra.mrb[0].mxu0 %v3094
        %v3374 = vpop.f32.mrb[0].mxu0
        %v3375 = vadd.f32 %v3278, %v3374
        %v3376 = vpop.f32.mrb[0].mxu0
        %v3377 = vpop.f32.mrb[0].mxu0
        %v3378 = vadd.f32 %v3281, %v3377
        %v3379 = vpop.f32.mrb[0].mxu0
        %3380 = vmatprep.mubr.bf16.mxu0 %v3099
        %3381 = vmatmul.mubr.bf16.gmra.mrb[0].mxu0 %v3098
        %v3382 = vpop.f32.mrb[0].mxu0
        %v3383 = vadd.f32 %v3286, %v3382
        %v3384 = vpop.f32.mrb[0].mxu0
        %v3385 = vpop.f32.mrb[0].mxu0
        %v3386 = vadd.f32 %v3289, %v3385
        %v3387 = vpop.f32.mrb[0].mxu0
        %3388 = vmatprep.mubr.bf16.mxu0 %v3103
        %3389 = vmatmul.mubr.bf16.gmra.mrb[0].mxu0 %v3102
        %v3390 = vpop.f32.mrb[0].mxu0
        %v3391 = vadd.f32 %v3294, %v3390
        %v3392 = vpop.f32.mrb[0].mxu0
        %v3393 = vpop.f32.mrb[0].mxu0
        %v3394 = vadd.f32 %v3297, %v3393
        %v3395 = vpop.f32.mrb[0].mxu0
        %3396 = vmatprep.mubr.bf16.mxu0 %v3107
        %3397 = vmatmul.mubr.bf16.gmra.mrb[0].mxu0 %v3106
        %v3398 = vpop.f32.mrb[0].mxu0
        %v3399 = vadd.f32 %v3302, %v3398
        %v3400 = vpop.f32.mrb[0].mxu0
        %v3401 = vpop.f32.mrb[0].mxu0
        %v3402 = vadd.f32 %v3305, %v3401
        %v3403 = vpop.f32.mrb[0].mxu0
        %3404 = vdwg.mxu0
        %3405 = vst [vmem:[%s284] sm:$0xff] %v3343
        %3406 = vst [vmem:[%s284 + $0x8] sm:$0xff] %v3346
        %3407 = vst [vmem:[%s284 + $0x10] sm:$0xff] %v3351
        %3408 = vst [vmem:[%s284 + $0x18] sm:$0xff] %v3354
        %3409 = vst [vmem:[%s284 + $0x20] sm:$0xff] %v3359
        %3410 = vst [vmem:[%s284 + $0x28] sm:$0xff] %v3362
        %3411 = vst [vmem:[%s284 + $0x30] sm:$0xff] %v3367
        %3412 = vst [vmem:[%s284 + $0x38] sm:$0xff] %v3370
        %3413 = vst [vmem:[%s284 + $0x40] sm:$0xff] %v3375
        %3414 = vst [vmem:[%s284 + $0x48] sm:$0xff] %v3378
        %3415 = vst [vmem:[%s284 + $0x50] sm:$0xff] %v3383
        %3416 = vst [vmem:[%s284 + $0x58] sm:$0xff] %v3386
        %3417 = vst [vmem:[%s284 + $0x60] sm:$0xff] %v3391
        %3418 = vst [vmem:[%s284 + $0x68] sm:$0xff] %v3394
        %3419 = vst [vmem:[%s284 + $0x70] sm:$0xff] %v3399
        %3420 = vst [vmem:[%s284 + $0x78] sm:$0xff] %v3402
        %s3421 = sand.u32 %s142, 1
        %s3422 = scalar_lea.sflag [#allocation6], %s3421
        %s3423 = sand.u32 %s142, 1
        %s3424 = smul.addr %s3423, 128
        %s3425 = scalar_lea.vmem [#allocation12], %s3424
        // Predicated region
        $region57: #{tpu_custom_call.1} parent=39 // pred_check
          %p3426 = pneg %p152
        $region58: #{tpu_custom_call.1} parent=39 // pred_check_branch
          %3428 = sbr.rel (%p3426) target = $region60
        $region59: #{tpu_custom_call.1} parent=39 // pred_region
          %s3430 = ssub.s32 2048, 2048
          %3431 = vsyncadd %s3422, %s3430
          %s3432 = smul.addr %s24, 16
          %s3433 = smul.addr %s3432, 128
          %s3434 = scalar_lea.hbm %s5, %s3433
          %s3435 = sshll.u32 %s3425, 4
          %s3436 = int_to_ptr.vmem [resolvable:$true] %s3435
          %3441 = dma.vmem_to_hbm [thread:$0]  %s3436, 2048, %s3434, %s3422, 128, 128, 8
        $region60: #{tpu_custom_call.1} parent=39 // pred_fallthru
          _
      $region40: #{tpu_custom_call.1} parent=5 // pred_fallthru
        _
      %p3442 = scmp.le.s32.totalorder 2, %s19
      // Predicated region
      $region61: #{tpu_custom_call.1} parent=5 // pred_check
        %p3443 = pneg %p3442
      $region62: #{tpu_custom_call.1} parent=5 // pred_check_branch
        %3445 = sbr.rel (%p3443) target = $region64
      $region63: #{tpu_custom_call.1} parent=5 // pred_region
        %s3446 = ssub.s32 %s19, 2
        // Predicated region
        $region65: #{tpu_custom_call.1} parent=63 // pred_check
          %p3447 = pneg %p158
        $region66: #{tpu_custom_call.1} parent=63 // pred_check_branch
          %3449 = sbr.rel (%p3447) target = $region68
        $region67: #{tpu_custom_call.1} parent=63 // pred_region
          %s3450 = sand.u32 %s143, 1
          %s3451 = scalar_lea.sflag [#allocation6], %s3450
          %s3452 = sand.u32 %s143, 1
          %s3453 = smul.addr %s3452, 128
          %s3454 = scalar_lea.vmem [#allocation12], %s3453
          %3455 = dma.done %s3451, 2048
        $region68: #{tpu_custom_call.1} parent=63 // pred_fallthru
          _
      $region64: #{tpu_custom_call.1} parent=5 // pred_fallthru
        _
    $region6: #{tpu_custom_call.1} parent=1 // loop_footer
      %s23 = sadd.s32 1, %s19
    $region7: #{tpu_custom_call.1} parent=1 // loop_footer_branch
      %18 = sbr.rel target = $region3
    $region8: #{tpu_custom_call.1} parent=1 // loop_exit
      _
    %3456 = vsyncpa [#allocation5], 1
    %s3457 = scalar_lea.sflag [#allocation5], 1
    %3458 = vsyncpa %s3457, 1
    %3459 = vsyncpa [#allocation8], 1
    %3460 = vsyncpa [#allocation11], 1
    %3461 = vsyncpa [#allocation6], 1
    %s3462 = scalar_lea.sflag [#allocation6], 1
    %3463 = vsyncpa %s3462, 1

</llo_original>
